<compile_context>
chip_gen: v7x
topology: tpu7x:2x2x1
jax: 0.10.0
libtpu: 0.0.40
codegen_flags: <defaults>
</compile_context>

<pallas_src>
import jax
import jax.numpy as jnp
from jax.experimental import pallas as pl
from jax.experimental.pallas import tpu as pltpu


def _round_up(n, m):
    return ((n + m - 1) // m) * m


def _cdiv(a, b):
    return -(-a // b)


def _mlp_kernel(x_ref, w1_ref, b1_ref, w2_ref, b2_ref, o_ref):
    # x_ref:  (TB, IN)   [compute dtype]   w1_ref: (IN, HID)  [compute dtype]
    # b1_ref: (1, HID)   [f32]             w2_ref: (HID, NCp) [compute dtype]
    # b2_ref: (1, NCp)   [f32]             o_ref:  (TB, NCp)  [output dtype]
    # Layer 1: Linear + ReLU. MXU matmul with f32 accumulation regardless of compute dtype.
    h = jnp.dot(x_ref[...], w1_ref[...], preferred_element_type=jnp.float32)
    h = jnp.maximum(h + b1_ref[...], 0.0)
    # TODO(synk): Dropout(p=0.3) is identity in eval mode; training-mode stochastic mask
    # (pltpu.prng_random_bits + 1/(1-p) scale) is not emitted here.
    # Layer 2: Linear. Cast h back to the compute dtype so the second matmul also takes the
    # single-pass bf16 MXU path on the fast path (no-op on the exact-f32 path).
    h = h.astype(w2_ref.dtype)
    out = jnp.dot(h, w2_ref[...], preferred_element_type=jnp.float32) + b2_ref[...]
    o_ref[...] = out.astype(o_ref.dtype)


def mlp_classifier(x, w1_t, b1, w2_t, b2, *, max_tile_b=512, activation_dtype=jnp.bfloat16):
    """Fused MLP classifier forward (eval mode).

    x: (B, IN); w1_t: (IN, HID); b1: (HID,); w2_t: (HID, NC); b2: (NC,).
    activation_dtype: compute dtype for x / W1 / W2 (default bf16, f32 accumulation).
      Use jnp.float32 for exact parity with the PyTorch module's numerics.
    """
    B, IN = x.shape
    IN_w, HID = w1_t.shape
    HID_w2, NC = w2_t.shape
    assert IN_w == IN and HID_w2 == HID

    out_dtype = x.dtype
    cd = jnp.dtype(activation_dtype if activation_dtype is not None else x.dtype)
    x = x.astype(cd)
    w1_t = w1_t.astype(cd)
    w2_t = w2_t.astype(cd)

    # --- lane-pad the class dimension to a multiple of 128 (dense stores / MXU columns).
    NC_pad = _round_up(max(NC, 128), 128)
    if NC_pad != NC:
        w2_t = jnp.pad(w2_t, ((0, 0), (0, NC_pad - NC)))
        b2 = jnp.pad(b2, (0, NC_pad - NC))

    b1_2d = b1.reshape(1, HID).astype(jnp.float32)
    b2_2d = b2.reshape(1, NC_pad).astype(jnp.float32)

    # --- sublane alignment for the compute dtype (bf16 packs 2 rows/sublane -> 16; 8-bit -> 32).
    itemsize = cd.itemsize
    align = {4: 8, 2: 16, 1: 32}.get(itemsize, 8)
    o_item = jnp.dtype(out_dtype).itemsize

    # --- per-generation VMEM budget (v5e/v6e: 128 MiB, v7x: 64 MiB per TensorCore).
    try:
        vmem_cap = int(pltpu.get_tpu_info().vmem_capacity_bytes)
    except Exception:
        vmem_cap = 64 * 1024 * 1024  # conservative (v7x) fallback
    vmem_budget = max(32 * 1024 * 1024, vmem_cap - 16 * 1024 * 1024)

    def vmem_needed(tb):
        # double-buffered x / out tiles + (double-buffered) resident weights & f32 biases
        return (2 * tb * IN * itemsize
                + 2 * tb * NC_pad * o_item
                + 2 * (IN * HID * itemsize + HID * NC_pad * itemsize + (HID + NC_pad) * 4))

    # --- padding-aware batch tile: fewest steps with tiles <= max_tile_b, even step count
    #     when multi-step (balanced v7x megacore split), shrink if VMEM would not fit.
    max_tile_b = max(align, _round_up(min(max_tile_b, _round_up(B, align)), align))
    n_steps = _cdiv(B, max_tile_b)
    if n_steps > 1 and n_steps % 2 == 1:
        n_steps += 1
    tile_b = _round_up(_cdiv(B, n_steps), align)
    while vmem_needed(tile_b) > vmem_budget and tile_b > align:
        n_steps = _round_up(n_steps * 2, 2)
        tile_b = _round_up(_cdiv(B, n_steps), align)

    B_pad = _round_up(B, tile_b)
    if B_pad != B:
        x = jnp.pad(x, ((0, B_pad - B), (0, 0)))

    grid = (B_pad // tile_b,)
    vmem_limit = int(min(vmem_budget,
                         max(32 * 1024 * 1024, vmem_needed(tile_b) * 5 // 4)))

    out_padded = pl.pallas_call(
        _mlp_kernel,
        out_shape=jax.ShapeDtypeStruct((B_pad, NC_pad), out_dtype),
        grid_spec=pltpu.PrefetchScalarGridSpec(
            num_scalar_prefetch=0,
            grid=grid,
            in_specs=[
                pl.BlockSpec((tile_b, IN), lambda i: (i, 0)),   # x tile: streams over batch
                pl.BlockSpec((IN, HID), lambda i: (0, 0)),      # W1^T: VMEM-resident
                pl.BlockSpec((1, HID), lambda i: (0, 0)),       # b1
                pl.BlockSpec((HID, NC_pad), lambda i: (0, 0)),  # W2^T (lane-padded, resident)
                pl.BlockSpec((1, NC_pad), lambda i: (0, 0)),    # b2 (lane-padded)
            ],
            out_specs=pl.BlockSpec((tile_b, NC_pad), lambda i: (i, 0)),  # lane-dense output
        ),
        compiler_params=pltpu.CompilerParams(
            dimension_semantics=("parallel",),
            vmem_limit_bytes=vmem_limit,
        ),
    )(x, w1_t, b1_2d, w2_t, b2_2d)

    # Strip batch padding (padded rows hold ReLU(b1)@W2+b2 garbage) and class padding.
    return out_padded[:B, :NC]


def reference_mlp(x, w1_t, b1, w2_t, b2):
    h = jnp.maximum(x @ w1_t + b1, 0.0)
    return h @ w2_t + b2


if __name__ == "__main__":
    # Module defaults: in_features=2048, hidden_features=128, num_classes=10.
    # B=520 is deliberately non-tile-aligned: exercises the padding-aware tile choice
    # (2 tiles instead of 3, ~4% waste) and a multi-step, megacore-splittable grid.
    B, IN, HID, NC = 520, 2048, 128, 10

    key = jax.random.PRNGKey(0)
    kx, kw1, kb1, kw2, kb2 = jax.random.split(key, 5)

    x = jax.random.normal(kx, (B, IN), dtype=jnp.float32)

    # Deterministic synthetic parameter init (roughly matching nn.Linear's uniform scale).
    lim1 = 1.0 / (IN ** 0.5)
    lim2 = 1.0 / (HID ** 0.5)
    w1_t = jax.random.uniform(kw1, (IN, HID), minval=-lim1, maxval=lim1, dtype=jnp.float32)
    b1 = jax.random.uniform(kb1, (HID,), minval=-lim1, maxval=lim1, dtype=jnp.float32)
    w2_t = jax.random.uniform(kw2, (HID, NC), minval=-lim2, maxval=lim2, dtype=jnp.float32)
    b2 = jax.random.uniform(kb2, (NC,), minval=-lim2, maxval=lim2, dtype=jnp.float32)

    ref = reference_mlp(x, w1_t, b1, w2_t, b2)

    # Default fast path: bf16 activations/weights, f32 accumulation.
    out_bf16 = jax.block_until_ready(mlp_classifier(x, w1_t, b1, w2_t, b2))
    assert out_bf16.shape == (B, NC)
    assert jnp.allclose(out_bf16, ref, atol=2e-2, rtol=2e-2), "bf16 mismatch vs reference"

    # Exact-f32 path (matches the PyTorch module's numerics).
    out_f32 = jax.block_until_ready(
        mlp_classifier(x, w1_t, b1, w2_t, b2, activation_dtype=jnp.float32)
    )
    assert out_f32.shape == (B, NC)
    assert jnp.allclose(out_f32, ref, atol=1e-3, rtol=1e-3), "f32 mismatch vs reference"

    print("KERNEL_OK")
</pallas_src>

<mosaic_0001>
module attributes {stable_mosaic.version = 11 : i64} {
  func.func @_mlp_kernel(%arg0: i32, %arg1: memref<272x2048xbf16, #tpu.memory_space<vmem>>, %arg2: memref<2048x128xbf16, #tpu.memory_space<vmem>>, %arg3: memref<1x128xf32, #tpu.memory_space<vmem>>, %arg4: memref<128x128xbf16, #tpu.memory_space<vmem>>, %arg5: memref<1x128xf32, #tpu.memory_space<vmem>>, %arg6: memref<272x128xf32, #tpu.memory_space<vmem>>) attributes {dimension_semantics = [#tpu.dimension_semantics<parallel>], iteration_bounds = array<i64: 2>, scalar_prefetch = 0 : i64, scratch_operands = 0 : i64, tpu.core_type = #tpu.core_type<tc>, window_params = [{transform_indices = @transform_0, window_bounds = array<i64: 272, 2048>}, {pipeline_mode = #tpu.pipeline_mode<synchronous>, transform_indices = @transform_1, window_bounds = array<i64: 2048, 128>}, {pipeline_mode = #tpu.pipeline_mode<synchronous>, transform_indices = @transform_2, window_bounds = array<i64: 1, 128>}, {pipeline_mode = #tpu.pipeline_mode<synchronous>, transform_indices = @transform_3, window_bounds = array<i64: 128, 128>}, {pipeline_mode = #tpu.pipeline_mode<synchronous>, transform_indices = @transform_4, window_bounds = array<i64: 1, 128>}, {transform_indices = @transform_5, window_bounds = array<i64: 272, 128>}]} {
    %c0 = arith.constant 0 : index
    %c0_0 = arith.constant 0 : index
    %0 = vector.load %arg1[%c0, %c0_0] : memref<272x2048xbf16, #tpu.memory_space<vmem>>, vector<272x2048xbf16>
    %c0_1 = arith.constant 0 : index
    %c0_2 = arith.constant 0 : index
    %1 = vector.load %arg2[%c0_1, %c0_2] : memref<2048x128xbf16, #tpu.memory_space<vmem>>, vector<2048x128xbf16>
    %cst = arith.constant dense<0.000000e+00> : vector<272x128xf32>
    %2 = tpu.matmul %0, %1, %cst {dimension_numbers = #tpu.dot_dimension_numbers<[1], [0], [0], [1], [0, 0, 1, 1], [], []>} : vector<272x2048xbf16>, vector<2048x128xbf16>, vector<272x128xf32> -> vector<272x128xf32>
    %c0_3 = arith.constant 0 : index
    %c0_4 = arith.constant 0 : index
    %3 = vector.load %arg3[%c0_3, %c0_4] : memref<1x128xf32, #tpu.memory_space<vmem>>, vector<1x128xf32>
    %4 = vector.broadcast %3 : vector<1x128xf32> to vector<272x128xf32>
    %5 = arith.addf %2, %4 : vector<272x128xf32>
    %cst_5 = arith.constant 0.000000e+00 : f32
    %6 = vector.broadcast %cst_5 : f32 to vector<272x128xf32>
    %7 = arith.maximumf %5, %6 : vector<272x128xf32>
    %8 = arith.truncf %7 : vector<272x128xf32> to vector<272x128xbf16>
    %c0_6 = arith.constant 0 : index
    %c0_7 = arith.constant 0 : index
    %9 = vector.load %arg4[%c0_6, %c0_7] : memref<128x128xbf16, #tpu.memory_space<vmem>>, vector<128x128xbf16>
    %cst_8 = arith.constant dense<0.000000e+00> : vector<272x128xf32>
    %10 = tpu.matmul %8, %9, %cst_8 {dimension_numbers = #tpu.dot_dimension_numbers<[1], [0], [0], [1], [0, 0, 1, 1], [], []>} : vector<272x128xbf16>, vector<128x128xbf16>, vector<272x128xf32> -> vector<272x128xf32>
    %c0_9 = arith.constant 0 : index
    %c0_10 = arith.constant 0 : index
    %11 = vector.load %arg5[%c0_9, %c0_10] : memref<1x128xf32, #tpu.memory_space<vmem>>, vector<1x128xf32>
    %12 = vector.broadcast %11 : vector<1x128xf32> to vector<272x128xf32>
    %13 = arith.addf %10, %12 : vector<272x128xf32>
    %c0_11 = arith.constant 0 : index
    %c0_12 = arith.constant 0 : index
    %14 = vector.load %arg6[%c0_11, %c0_12] : memref<272x128xf32, #tpu.memory_space<vmem>>, vector<272x128xf32>
    tpu.vector_store %arg6[%c0_11, %c0_12], %13 {strides = array<i32>} : memref<272x128xf32, #tpu.memory_space<vmem>>, vector<272x128xf32>,
    return
  }
  func.func @transform_0(%arg0: i32) -> (i32, i32) {
    %c0_i32 = arith.constant 0 : i32
    %c0_i32_0 = arith.constant 0 : i32
    return %arg0, %c0_i32 : i32, i32
  }
  func.func @transform_1(%arg0: i32) -> (i32, i32) {
    %c0_i32 = arith.constant 0 : i32
    %c0_i32_0 = arith.constant 0 : i32
    %c0_i32_1 = arith.constant 0 : i32
    return %c0_i32, %c0_i32_0 : i32, i32
  }
  func.func @transform_2(%arg0: i32) -> (i32, i32) {
    %c0_i32 = arith.constant 0 : i32
    %c0_i32_0 = arith.constant 0 : i32
    %c0_i32_1 = arith.constant 0 : i32
    return %c0_i32, %c0_i32_0 : i32, i32
  }
  func.func @transform_3(%arg0: i32) -> (i32, i32) {
    %c0_i32 = arith.constant 0 : i32
    %c0_i32_0 = arith.constant 0 : i32
    %c0_i32_1 = arith.constant 0 : i32
    return %c0_i32, %c0_i32_0 : i32, i32
  }
  func.func @transform_4(%arg0: i32) -> (i32, i32) {
    %c0_i32 = arith.constant 0 : i32
    %c0_i32_0 = arith.constant 0 : i32
    %c0_i32_1 = arith.constant 0 : i32
    return %c0_i32, %c0_i32_0 : i32, i32
  }
  func.func @transform_5(%arg0: i32) -> (i32, i32) {
    %c0_i32 = arith.constant 0 : i32
    %c0_i32_0 = arith.constant 0 : i32
    return %arg0, %c0_i32 : i32, i32
  }
}

</mosaic_0001>

<llo_original>
// kernel: tpu_custom_call.1
$region0: #{tpu_custom_call.1}
  #allocation0 [shape = 'u32[]', space=smem, size = 0x4, offset = 0x4, fixed_abs, tag = 'smem constant byte address 0x4 - core index']
  #allocation1 [shape = 'u32[144,128]{1,0:T(1,128)}', space=vmem, size = 0x12000, scoped, tag = 'internal scratch']
  %s0 = inlined_call_operand.hbm [shape: bf16[544,2048], index: 0, kind: input, shape index: {}]
  %s1 = inlined_call_operand.hbm [shape: bf16[2048,128], index: 1, kind: input, shape index: {}]
  %s2 = inlined_call_operand.hbm [shape: f32[1,128], index: 2, kind: input, shape index: {}]
  %s3 = inlined_call_operand.hbm [shape: bf16[128,128], index: 3, kind: input, shape index: {}]
  %s4 = inlined_call_operand.hbm [shape: f32[1,128], index: 4, kind: input, shape index: {}]
  %s5 = inlined_call_operand.hbm [shape: f32[544,128], index: 5, kind: output, shape index: {}]
  %s6 = sld [smem:[#allocation0]]
  $region73: #{tpu_custom_call.1} parent=0
    _
  %s8 = ssub.s32 1, %s6
  %s9 = scalar_select 0, %s8, %s6
  $region1: #{tpu_custom_call.1} parent=0
    #allocation2 [shape = 'u8[2228224]{0}', space=vmem, size = 0x220000, scoped, tag = 'input window, operand 0']
    #allocation3 [shape = 's32[2]{0}', space=sflag, size = 0x8, scoped, tag = 'scoped memory for tpu_custom_call.1']
    #allocation4 [shape = 's32[2]{0}', space=sflag, size = 0x8, scoped, tag = 'scoped memory for tpu_custom_call.1']
    #allocation5 [shape = 'u8[524288]{0}', space=vmem, size = 0x80000, scoped, tag = 'input window, operand 1, single buffered']
    #allocation6 [shape = 's32[1]{0}', space=sflag, size = 0x4, scoped, tag = 'scoped memory for tpu_custom_call.1']
    #allocation7 [shape = 'u8[512]{0}', space=vmem, size = 0x400, scoped, tag = 'input window, operand 2, single buffered']
    #allocation8 [shape = 'u8[32768]{0}', space=vmem, size = 0x8000, scoped, tag = 'input window, operand 3, single buffered']
    #allocation9 [shape = 's32[1]{0}', space=sflag, size = 0x4, scoped, tag = 'scoped memory for tpu_custom_call.1']
    #allocation10 [shape = 'u8[512]{0}', space=vmem, size = 0x400, scoped, tag = 'input window, operand 4, single buffered']
    #allocation11 [shape = 'u8[278528]{0}', space=vmem, size = 0x44000, scoped, tag = 'output window, operand 0']
    %10 = vsyncpa [#allocation3], 0
    %s11 = scalar_lea.sflag [#allocation3], 1
    %12 = vsyncpa %s11, 0
    %13 = vsyncpa [#allocation6], 0
    %14 = vsyncpa [#allocation9], 0
    %15 = vsyncpa [#allocation4], 0
    %s16 = scalar_lea.sflag [#allocation4], 1
    %17 = vsyncpa %s16, 0
    loop: start=0, step=1, limit=4
    $region2: #{tpu_custom_call.1} parent=1 // loop_pre_header
      _
    $region3: #{tpu_custom_call.1} parent=1 // loop_header
      %s19 = sphi 0, %s23
      %p20 = scmp.ge.s32.totalorder %s19, 4
      %s29 = sphi 0, %s31
      %s32 = sphi 0, %s29
      %s33 = sphi 0, %s32
      %s49 = sphi 0, %s33
      %s53 = sphi 0, %s53
      %s55 = sphi 0, %s53
      %s56 = sphi 0, %s55
      %s70 = sphi 0, %s56
      %s74 = sphi 0, %s74
      %s76 = sphi 0, %s74
      %s77 = sphi 0, %s76
      %s91 = sphi 0, %s77
      %s95 = sphi 0, %s95
      %s97 = sphi 0, %s95
      %s98 = sphi 0, %s97
      %s112 = sphi 0, %s98
      %s116 = sphi 0, %s116
      %s118 = sphi 0, %s116
      %s119 = sphi 0, %s118
      %s133 = sphi 0, %s119
      %s139 = sphi 0, %s141
      %s142 = sphi 0, %s139
      %s143 = sphi 0, %s142
      %s159 = sphi 0, %s143
    $region4: #{tpu_custom_call.1} parent=1 // loop_header_branch
      %22 = sbr.rel (%p20) target = $region8
    $region5: #{tpu_custom_call.1} parent=1 // loop_body
      %s24 = ssub.s32 %s19, 1
      %s25 = ssub.s32 %s19, 2
      %s26 = sadd.s32 %s19, 1
      %s27 = ssub.s32 %s19, %s26
      %p28 = scmp.eq.s32.totalorder %s27, 0
      %s30 = sadd.s32 %s29, 1
      %s31 = scalar_select %p28, %s29, %s30
      %p34 = pneg %p28
      %p35 = scmp.eq.s32.totalorder %s19, 1
      %p36 = por %p34, %p35
      %p37 = scmp.ne.s32.totalorder %s29, %s32
      %p38 = scmp.eq.s32.totalorder %s19, 0
      %p39 = por %p37, %p38
      %p40 = scmp.ne.s32.totalorder %s29, %s32
      %p41 = scmp.eq.s32.totalorder %s24, 1
      %p42 = por %p40, %p41
      %p43 = scmp.ne.s32.totalorder %s32, %s33
      %p44 = scmp.eq.s32.totalorder %s24, 0
      %p45 = por %p43, %p44
      %p46 = scmp.ne.s32.totalorder %s32, %s33
      %p47 = scmp.eq.s32.totalorder %s25, 1
      %p48 = por %p46, %p47
      %p50 = scmp.ne.s32.totalorder %s33, %s49
      %p51 = scmp.eq.s32.totalorder %s25, 0
      %p52 = por %p50, %p51
      %s54 = sadd.s32 %s53, 1
      %p57 = scmp.eq.s32.totalorder %s19, 1
      %p58 = scmp.ne.s32.totalorder %s53, %s55
      %p59 = scmp.eq.s32.totalorder %s19, 0
      %p60 = por %p58, %p59
      %p61 = scmp.ne.s32.totalorder %s53, %s55
      %p62 = scmp.eq.s32.totalorder %s24, 1
      %p63 = por %p61, %p62
      %p64 = scmp.ne.s32.totalorder %s55, %s56
      %p65 = scmp.eq.s32.totalorder %s24, 0
      %p66 = por %p64, %p65
      %p67 = scmp.ne.s32.totalorder %s55, %s56
      %p68 = scmp.eq.s32.totalorder %s25, 1
      %p69 = por %p67, %p68
      %p71 = scmp.ne.s32.totalorder %s56, %s70
      %p72 = scmp.eq.s32.totalorder %s25, 0
      %p73 = por %p71, %p72
      %s75 = sadd.s32 %s74, 1
      %p78 = scmp.eq.s32.totalorder %s19, 1
      %p79 = scmp.ne.s32.totalorder %s74, %s76
      %p80 = scmp.eq.s32.totalorder %s19, 0
      %p81 = por %p79, %p80
      %p82 = scmp.ne.s32.totalorder %s74, %s76
      %p83 = scmp.eq.s32.totalorder %s24, 1
      %p84 = por %p82, %p83
      %p85 = scmp.ne.s32.totalorder %s76, %s77
      %p86 = scmp.eq.s32.totalorder %s24, 0
      %p87 = por %p85, %p86
      %p88 = scmp.ne.s32.totalorder %s76, %s77
      %p89 = scmp.eq.s32.totalorder %s25, 1
      %p90 = por %p88, %p89
      %p92 = scmp.ne.s32.totalorder %s77, %s91
      %p93 = scmp.eq.s32.totalorder %s25, 0
      %p94 = por %p92, %p93
      %s96 = sadd.s32 %s95, 1
      %p99 = scmp.eq.s32.totalorder %s19, 1
      %p100 = scmp.ne.s32.totalorder %s95, %s97
      %p101 = scmp.eq.s32.totalorder %s19, 0
      %p102 = por %p100, %p101
      %p103 = scmp.ne.s32.totalorder %s95, %s97
      %p104 = scmp.eq.s32.totalorder %s24, 1
      %p105 = por %p103, %p104
      %p106 = scmp.ne.s32.totalorder %s97, %s98
      %p107 = scmp.eq.s32.totalorder %s24, 0
      %p108 = por %p106, %p107
      %p109 = scmp.ne.s32.totalorder %s97, %s98
      %p110 = scmp.eq.s32.totalorder %s25, 1
      %p111 = por %p109, %p110
      %p113 = scmp.ne.s32.totalorder %s98, %s112
      %p114 = scmp.eq.s32.totalorder %s25, 0
      %p115 = por %p113, %p114
      %s117 = sadd.s32 %s116, 1
      %p120 = scmp.eq.s32.totalorder %s19, 1
      %p121 = scmp.ne.s32.totalorder %s116, %s118
      %p122 = scmp.eq.s32.totalorder %s19, 0
      %p123 = por %p121, %p122
      %p124 = scmp.ne.s32.totalorder %s116, %s118
      %p125 = scmp.eq.s32.totalorder %s24, 1
      %p126 = por %p124, %p125
      %p127 = scmp.ne.s32.totalorder %s118, %s119
      %p128 = scmp.eq.s32.totalorder %s24, 0
      %p129 = por %p127, %p128
      %p130 = scmp.ne.s32.totalorder %s118, %s119
      %p131 = scmp.eq.s32.totalorder %s25, 1
      %p132 = por %p130, %p131
      %p134 = scmp.ne.s32.totalorder %s119, %s133
      %p135 = scmp.eq.s32.totalorder %s25, 0
      %p136 = por %p134, %p135
      %s137 = ssub.s32 %s19, %s26
      %p138 = scmp.eq.s32.totalorder %s137, 0
      %s140 = sadd.s32 %s139, 1
      %s141 = scalar_select %p138, %s139, %s140
      %p144 = pneg %p138
      %p145 = scmp.eq.s32.totalorder %s19, 1
      %p146 = por %p144, %p145
      %p147 = scmp.ne.s32.totalorder %s139, %s142
      %p148 = scmp.eq.s32.totalorder %s19, 0
      %p149 = por %p147, %p148
      %p150 = scmp.ne.s32.totalorder %s139, %s142
      %p151 = scmp.eq.s32.totalorder %s24, 1
      %p152 = por %p150, %p151
      %p153 = scmp.ne.s32.totalorder %s142, %s143
      %p154 = scmp.eq.s32.totalorder %s24, 0
      %p155 = por %p153, %p154
      %p156 = scmp.ne.s32.totalorder %s142, %s143
      %p157 = scmp.eq.s32.totalorder %s25, 1
      %p158 = por %p156, %p157
      %p160 = scmp.ne.s32.totalorder %s143, %s159
      %p161 = scmp.eq.s32.totalorder %s25, 0
      %p162 = por %p160, %p161
      %p163 = scmp.le.s32.totalorder 1, %s19
      %p164 = scmp.lt.s32.totalorder %s19, 3
      %p165 = pnand %p163, %p164
      %p166 = pneg %p165
      // Predicated region
      $region9: #{tpu_custom_call.1} parent=5 // pred_check
        _
      $region10: #{tpu_custom_call.1} parent=5 // pred_check_branch
        %168 = sbr.rel (%p165) target = $region12
      $region11: #{tpu_custom_call.1} parent=5 // pred_region
        %s169 = ssub.s32 %s19, 1
        // Predicated region
        $region13: #{tpu_custom_call.1} parent=11 // pred_check
          %p170 = pneg %p66
        $region14: #{tpu_custom_call.1} parent=11 // pred_check_branch
          %172 = sbr.rel (%p170) target = $region16
        $region15: #{tpu_custom_call.1} parent=11 // pred_region
          %s174 = ssub.s32 16384, 16384
          %175 = vsyncadd [#allocation6], %s174
          %s176 = sshll.u32 [#allocation5], 4
          %s177 = int_to_ptr.vmem [resolvable:$true] %s176
          %182 = dma.hbm_to_vmem [thread:$0]  %s1, 16384, %s177, [#allocation6], 64, 64, 4
        $region16: #{tpu_custom_call.1} parent=11 // pred_fallthru
          _
        // Predicated region
        $region17: #{tpu_custom_call.1} parent=11 // pred_check
          %p183 = pneg %p87
        $region18: #{tpu_custom_call.1} parent=11 // pred_check_branch
          %185 = sbr.rel (%p183) target = $region20
        $region19: #{tpu_custom_call.1} parent=11 // pred_region
          %s187 = ssub.s32 16, 16
          %188 = vsyncadd [#allocation6], %s187
          %s190 = sshll.u32 [#allocation7], 4
          %s191 = int_to_ptr.vmem [resolvable:$true] %s190
          %193 = dma.hbm_to_vmem [thread:$0]  %s2, 16, %s191, [#allocation6]
        $region20: #{tpu_custom_call.1} parent=11 // pred_fallthru
          _
        // Predicated region
        $region21: #{tpu_custom_call.1} parent=11 // pred_check
          %p194 = pneg %p108
        $region22: #{tpu_custom_call.1} parent=11 // pred_check_branch
          %196 = sbr.rel (%p194) target = $region24
        $region23: #{tpu_custom_call.1} parent=11 // pred_region
          %s198 = ssub.s32 1024, 1024
          %199 = vsyncadd [#allocation9], %s198
          %s200 = sshll.u32 [#allocation8], 4
          %s201 = int_to_ptr.vmem [resolvable:$true] %s200
          %206 = dma.hbm_to_vmem [thread:$0]  %s3, 1024, %s201, [#allocation9], 64, 64, 4
        $region24: #{tpu_custom_call.1} parent=11 // pred_fallthru
          _
        // Predicated region
        $region25: #{tpu_custom_call.1} parent=11 // pred_check
          %p207 = pneg %p129
        $region26: #{tpu_custom_call.1} parent=11 // pred_check_branch
          %209 = sbr.rel (%p207) target = $region28
        $region27: #{tpu_custom_call.1} parent=11 // pred_region
          %s211 = ssub.s32 16, 16
          %212 = vsyncadd [#allocation9], %s211
          %s214 = sshll.u32 [#allocation10], 4
          %s215 = int_to_ptr.vmem [resolvable:$true] %s214
          %217 = dma.hbm_to_vmem [thread:$0]  %s4, 16, %s215, [#allocation9]
        $region28: #{tpu_custom_call.1} parent=11 // pred_fallthru
          _
      $region12: #{tpu_custom_call.1} parent=5 // pred_fallthru
        _
      %p218 = scmp.lt.s32.totalorder %s19, 2
      // Predicated region
      $region29: #{tpu_custom_call.1} parent=5 // pred_check
        %p219 = pneg %p218
      $region30: #{tpu_custom_call.1} parent=5 // pred_check_branch
        %221 = sbr.rel (%p219) target = $region32
      $region31: #{tpu_custom_call.1} parent=5 // pred_region
        // Predicated region
        $region33: #{tpu_custom_call.1} parent=31 // pred_check
          %p222 = pneg %p39
        $region34: #{tpu_custom_call.1} parent=31 // pred_check_branch
          %224 = sbr.rel (%p222) target = $region36
        $region35: #{tpu_custom_call.1} parent=31 // pred_region
          %s225 = sand.u32 %s29, 1
          %s226 = scalar_lea.sflag [#allocation3], %s225
          %s227 = sand.u32 %s29, 1
          %s228 = smul.addr %s227, 2176
          %s229 = scalar_lea.vmem [#allocation2], %s228
          %s230 = smul.u32 34, %s19
          %s232 = ssub.s32 34816, 34816
          %233 = vsyncadd %s226, %s232
          %s234 = smul.addr %s230, 16
          %s235 = smul.addr %s234, 64
          %s236 = scalar_lea.hbm %s0, %s235
          %s237 = sshll.u32 %s229, 4
          %s238 = int_to_ptr.vmem [resolvable:$true] %s237
          %243 = dma.hbm_to_vmem [thread:$0]  %s236, 34816, %s238, %s226, 1024, 1024, 64
        $region36: #{tpu_custom_call.1} parent=31 // pred_fallthru
          _
      $region32: #{tpu_custom_call.1} parent=5 // pred_fallthru
        _
      %p244 = scmp.le.s32.totalorder 1, %s19
      %p245 = scmp.lt.s32.totalorder %s19, 3
      %p246 = pnand %p244, %p245
      %p247 = pneg %p246
      // Predicated region
      $region37: #{tpu_custom_call.1} parent=5 // pred_check
        _
      $region38: #{tpu_custom_call.1} parent=5 // pred_check_branch
        %249 = sbr.rel (%p246) target = $region40
      $region39: #{tpu_custom_call.1} parent=5 // pred_region
        %s250 = ssub.s32 %s19, 1
        %s251 = sand.u32 %s32, 1
        %s252 = scalar_lea.sflag [#allocation3], %s251
        %s253 = sand.u32 %s32, 1
        %s254 = smul.addr %s253, 2176
        %s255 = scalar_lea.vmem [#allocation2], %s254
        // Predicated region
        $region41: #{tpu_custom_call.1} parent=39 // pred_check
          %p256 = pneg %p45
        $region42: #{tpu_custom_call.1} parent=39 // pred_check_branch
          %258 = sbr.rel (%p256) target = $region44
        $region43: #{tpu_custom_call.1} parent=39 // pred_region
          %259 = dma.done %s252, 34816
        $region44: #{tpu_custom_call.1} parent=39 // pred_fallthru
          _
        // Predicated region
        $region45: #{tpu_custom_call.1} parent=39 // pred_check
          %p260 = pneg %p66
        $region46: #{tpu_custom_call.1} parent=39 // pred_check_branch
          %262 = sbr.rel (%p260) target = $region48
        $region47: #{tpu_custom_call.1} parent=39 // pred_region
          %263 = dma.done [#allocation6], 16384
        $region48: #{tpu_custom_call.1} parent=39 // pred_fallthru
          _
        // Predicated region
        $region49: #{tpu_custom_call.1} parent=39 // pred_check
          %p264 = pneg %p87
        $region50: #{tpu_custom_call.1} parent=39 // pred_check_branch
          %266 = sbr.rel (%p264) target = $region52
        $region51: #{tpu_custom_call.1} parent=39 // pred_region
          %267 = dma.done [#allocation6], 16
        $region52: #{tpu_custom_call.1} parent=39 // pred_fallthru
          _
        // Predicated region
        $region53: #{tpu_custom_call.1} parent=39 // pred_check
          %p268 = pneg %p108
        $region54: #{tpu_custom_call.1} parent=39 // pred_check_branch
          %270 = sbr.rel (%p268) target = $region56
        $region55: #{tpu_custom_call.1} parent=39 // pred_region
          %271 = dma.done [#allocation9], 1024
        $region56: #{tpu_custom_call.1} parent=39 // pred_fallthru
          _
        // Predicated region
        $region57: #{tpu_custom_call.1} parent=39 // pred_check
          %p272 = pneg %p129
        $region58: #{tpu_custom_call.1} parent=39 // pred_check_branch
          %274 = sbr.rel (%p272) target = $region60
        $region59: #{tpu_custom_call.1} parent=39 // pred_region
          %275 = dma.done [#allocation9], 16
        $region60: #{tpu_custom_call.1} parent=39 // pred_fallthru
          _
        %s276 = sand.u32 %s32, 1
        %s277 = scalar_lea.sflag [#allocation3], %s276
        %s278 = sand.u32 %s32, 1
        %s279 = smul.addr %s278, 2176
        %s280 = scalar_lea.vmem [#allocation2], %s279
        %p281 = pneg %p45
        %p282 = pneg %p42
        %p283 = pneg %p66
        %p284 = pneg %p63
        %p285 = pneg %p87
        %p286 = pneg %p84
        %p287 = pneg %p108
        %p288 = pneg %p105
        %p289 = pneg %p129
        %p290 = pneg %p126
        %p291 = pneg %p155
        %p292 = pneg %p152
        %s293 = sand.u32 %s142, 1
        %s294 = scalar_lea.sflag [#allocation4], %s293
        %s295 = sand.u32 %s142, 1
        %s296 = smul.addr %s295, 272
        %s297 = scalar_lea.vmem [#allocation11], %s296
        %s298 = smul.u32 34, %s24
        %s299 = smul.u32 34, %s24
        %v301 = vld [vmem:[%s255] sm:$0xff]
        %v302 = vld [vmem:[%s255 + $0x8] sm:$0xff]
        %v303 = vld [vmem:[%s255 + $0x10] sm:$0xff]
        %v304 = vld [vmem:[%s255 + $0x18] sm:$0xff]
        %v305 = vld [vmem:[%s255 + $0x20] sm:$0xff]
        %v306 = vld [vmem:[%s255 + $0x28] sm:$0xff]
        %v307 = vld [vmem:[%s255 + $0x30] sm:$0xff]
        %v308 = vld [vmem:[%s255 + $0x38] sm:$0xff]
        %v309 = vld [vmem:[%s255 + $0x40] sm:$0xff]
        %v310 = vld [vmem:[%s255 + $0x48] sm:$0xff]
        %v311 = vld [vmem:[%s255 + $0x50] sm:$0xff]
        %v312 = vld [vmem:[%s255 + $0x58] sm:$0xff]
        %v313 = vld [vmem:[%s255 + $0x60] sm:$0xff]
        %v314 = vld [vmem:[%s255 + $0x68] sm:$0xff]
        %v315 = vld [vmem:[%s255 + $0x70] sm:$0xff]
        %v316 = vld [vmem:[%s255 + $0x78] sm:$0xff]
        %v317 = vld [vmem:[%s255 + $0x80] sm:$0xff]
        %v318 = vld [vmem:[%s255 + $0x88] sm:$0xff]
        %v319 = vld [vmem:[%s255 + $0x90] sm:$0xff]
        %v320 = vld [vmem:[%s255 + $0x98] sm:$0xff]
        %v321 = vld [vmem:[%s255 + $0xa0] sm:$0xff]
        %v322 = vld [vmem:[%s255 + $0xa8] sm:$0xff]
        %v323 = vld [vmem:[%s255 + $0xb0] sm:$0xff]
        %v324 = vld [vmem:[%s255 + $0xb8] sm:$0xff]
        %v325 = vld [vmem:[%s255 + $0xc0] sm:$0xff]
        %v326 = vld [vmem:[%s255 + $0xc8] sm:$0xff]
        %v327 = vld [vmem:[%s255 + $0xd0] sm:$0xff]
        %v328 = vld [vmem:[%s255 + $0xd8] sm:$0xff]
        %v329 = vld [vmem:[%s255 + $0xe0] sm:$0xff]
        %v330 = vld [vmem:[%s255 + $0xe8] sm:$0xff]
        %v331 = vld [vmem:[%s255 + $0xf0] sm:$0xff]
        %v332 = vld [vmem:[%s255 + $0xf8] sm:$0xff]
        %v333 = vld [vmem:[%s255 + $0x100] sm:$0xff]
        %v334 = vld [vmem:[%s255 + $0x108] sm:$0xff]
        %v335 = vld [vmem:[%s255 + $0x110] sm:$0xff]
        %v336 = vld [vmem:[%s255 + $0x118] sm:$0xff]
        %v337 = vld [vmem:[%s255 + $0x120] sm:$0xff]
        %v338 = vld [vmem:[%s255 + $0x128] sm:$0xff]
        %v339 = vld [vmem:[%s255 + $0x130] sm:$0xff]
        %v340 = vld [vmem:[%s255 + $0x138] sm:$0xff]
        %v341 = vld [vmem:[%s255 + $0x140] sm:$0xff]
        %v342 = vld [vmem:[%s255 + $0x148] sm:$0xff]
        %v343 = vld [vmem:[%s255 + $0x150] sm:$0xff]
        %v344 = vld [vmem:[%s255 + $0x158] sm:$0xff]
        %v345 = vld [vmem:[%s255 + $0x160] sm:$0xff]
        %v346 = vld [vmem:[%s255 + $0x168] sm:$0xff]
        %v347 = vld [vmem:[%s255 + $0x170] sm:$0xff]
        %v348 = vld [vmem:[%s255 + $0x178] sm:$0xff]
        %v349 = vld [vmem:[%s255 + $0x180] sm:$0xff]
        %v350 = vld [vmem:[%s255 + $0x188] sm:$0xff]
        %v351 = vld [vmem:[%s255 + $0x190] sm:$0xff]
        %v352 = vld [vmem:[%s255 + $0x198] sm:$0xff]
        %v353 = vld [vmem:[%s255 + $0x1a0] sm:$0xff]
        %v354 = vld [vmem:[%s255 + $0x1a8] sm:$0xff]
        %v355 = vld [vmem:[%s255 + $0x1b0] sm:$0xff]
        %v356 = vld [vmem:[%s255 + $0x1b8] sm:$0xff]
        %v357 = vld [vmem:[%s255 + $0x1c0] sm:$0xff]
        %v358 = vld [vmem:[%s255 + $0x1c8] sm:$0xff]
        %v359 = vld [vmem:[%s255 + $0x1d0] sm:$0xff]
        %v360 = vld [vmem:[%s255 + $0x1d8] sm:$0xff]
        %v361 = vld [vmem:[%s255 + $0x1e0] sm:$0xff]
        %v362 = vld [vmem:[%s255 + $0x1e8] sm:$0xff]
        %v363 = vld [vmem:[%s255 + $0x1f0] sm:$0xff]
        %v364 = vld [vmem:[%s255 + $0x1f8] sm:$0xff]
        %v365 = vld [vmem:[%s255 + $0x200] sm:$0xff]
        %v366 = vld [vmem:[%s255 + $0x208] sm:$0xff]
        %v367 = vld [vmem:[%s255 + $0x210] sm:$0xff]
        %v368 = vld [vmem:[%s255 + $0x218] sm:$0xff]
        %v369 = vld [vmem:[%s255 + $0x220] sm:$0xff]
        %v370 = vld [vmem:[%s255 + $0x228] sm:$0xff]
        %v371 = vld [vmem:[%s255 + $0x230] sm:$0xff]
        %v372 = vld [vmem:[%s255 + $0x238] sm:$0xff]
        %v373 = vld [vmem:[%s255 + $0x240] sm:$0xff]
        %v374 = vld [vmem:[%s255 + $0x248] sm:$0xff]
        %v375 = vld [vmem:[%s255 + $0x250] sm:$0xff]
        %v376 = vld [vmem:[%s255 + $0x258] sm:$0xff]
        %v377 = vld [vmem:[%s255 + $0x260] sm:$0xff]
        %v378 = vld [vmem:[%s255 + $0x268] sm:$0xff]
        %v379 = vld [vmem:[%s255 + $0x270] sm:$0xff]
        %v380 = vld [vmem:[%s255 + $0x278] sm:$0xff]
        %v381 = vld [vmem:[%s255 + $0x280] sm:$0xff]
        %v382 = vld [vmem:[%s255 + $0x288] sm:$0xff]
        %v383 = vld [vmem:[%s255 + $0x290] sm:$0xff]
        %v384 = vld [vmem:[%s255 + $0x298] sm:$0xff]
        %v385 = vld [vmem:[%s255 + $0x2a0] sm:$0xff]
        %v386 = vld [vmem:[%s255 + $0x2a8] sm:$0xff]
        %v387 = vld [vmem:[%s255 + $0x2b0] sm:$0xff]
        %v388 = vld [vmem:[%s255 + $0x2b8] sm:$0xff]
        %v389 = vld [vmem:[%s255 + $0x2c0] sm:$0xff]
        %v390 = vld [vmem:[%s255 + $0x2c8] sm:$0xff]
        %v391 = vld [vmem:[%s255 + $0x2d0] sm:$0xff]
        %v392 = vld [vmem:[%s255 + $0x2d8] sm:$0xff]
        %v393 = vld [vmem:[%s255 + $0x2e0] sm:$0xff]
        %v394 = vld [vmem:[%s255 + $0x2e8] sm:$0xff]
        %v395 = vld [vmem:[%s255 + $0x2f0] sm:$0xff]
        %v396 = vld [vmem:[%s255 + $0x2f8] sm:$0xff]
        %v397 = vld [vmem:[%s255 + $0x300] sm:$0xff]
        %v398 = vld [vmem:[%s255 + $0x308] sm:$0xff]
        %v399 = vld [vmem:[%s255 + $0x310] sm:$0xff]
        %v400 = vld [vmem:[%s255 + $0x318] sm:$0xff]
        %v401 = vld [vmem:[%s255 + $0x320] sm:$0xff]
        %v402 = vld [vmem:[%s255 + $0x328] sm:$0xff]
        %v403 = vld [vmem:[%s255 + $0x330] sm:$0xff]
        %v404 = vld [vmem:[%s255 + $0x338] sm:$0xff]
        %v405 = vld [vmem:[%s255 + $0x340] sm:$0xff]
        %v406 = vld [vmem:[%s255 + $0x348] sm:$0xff]
        %v407 = vld [vmem:[%s255 + $0x350] sm:$0xff]
        %v408 = vld [vmem:[%s255 + $0x358] sm:$0xff]
        %v409 = vld [vmem:[%s255 + $0x360] sm:$0xff]
        %v410 = vld [vmem:[%s255 + $0x368] sm:$0xff]
        %v411 = vld [vmem:[%s255 + $0x370] sm:$0xff]
        %v412 = vld [vmem:[%s255 + $0x378] sm:$0xff]
        %v413 = vld [vmem:[%s255 + $0x380] sm:$0xff]
        %v414 = vld [vmem:[%s255 + $0x388] sm:$0xff]
        %v415 = vld [vmem:[%s255 + $0x390] sm:$0xff]
        %v416 = vld [vmem:[%s255 + $0x398] sm:$0xff]
        %v417 = vld [vmem:[%s255 + $0x3a0] sm:$0xff]
        %v418 = vld [vmem:[%s255 + $0x3a8] sm:$0xff]
        %v419 = vld [vmem:[%s255 + $0x3b0] sm:$0xff]
        %v420 = vld [vmem:[%s255 + $0x3b8] sm:$0xff]
        %v421 = vld [vmem:[%s255 + $0x3c0] sm:$0xff]
        %v422 = vld [vmem:[%s255 + $0x3c8] sm:$0xff]
        %v423 = vld [vmem:[%s255 + $0x3d0] sm:$0xff]
        %v424 = vld [vmem:[%s255 + $0x3d8] sm:$0xff]
        %v425 = vld [vmem:[%s255 + $0x3e0] sm:$0xff]
        %v426 = vld [vmem:[%s255 + $0x3e8] sm:$0xff]
        %v427 = vld [vmem:[%s255 + $0x3f0] sm:$0xff]
        %v428 = vld [vmem:[%s255 + $0x3f8] sm:$0xff]
        %v429 = vld [vmem:[%s255 + $0x400] sm:$0xff]
        %v430 = vld [vmem:[%s255 + $0x408] sm:$0xff]
        %v431 = vld [vmem:[%s255 + $0x410] sm:$0xff]
        %v432 = vld [vmem:[%s255 + $0x418] sm:$0xff]
        %v433 = vld [vmem:[%s255 + $0x420] sm:$0xff]
        %v434 = vld [vmem:[%s255 + $0x428] sm:$0xff]
        %v435 = vld [vmem:[%s255 + $0x430] sm:$0xff]
        %v436 = vld [vmem:[%s255 + $0x438] sm:$0xff]
        %v437 = vld [vmem:[%s255 + $0x440] sm:$0xff]
        %v438 = vld [vmem:[%s255 + $0x448] sm:$0xff]
        %v439 = vld [vmem:[%s255 + $0x450] sm:$0xff]
        %v440 = vld [vmem:[%s255 + $0x458] sm:$0xff]
        %v441 = vld [vmem:[%s255 + $0x460] sm:$0xff]
        %v442 = vld [vmem:[%s255 + $0x468] sm:$0xff]
        %v443 = vld [vmem:[%s255 + $0x470] sm:$0xff]
        %v444 = vld [vmem:[%s255 + $0x478] sm:$0xff]
        %v445 = vld [vmem:[%s255 + $0x480] sm:$0xff]
        %v446 = vld [vmem:[%s255 + $0x488] sm:$0xff]
        %v447 = vld [vmem:[%s255 + $0x490] sm:$0xff]
        %v448 = vld [vmem:[%s255 + $0x498] sm:$0xff]
        %v449 = vld [vmem:[%s255 + $0x4a0] sm:$0xff]
        %v450 = vld [vmem:[%s255 + $0x4a8] sm:$0xff]
        %v451 = vld [vmem:[%s255 + $0x4b0] sm:$0xff]
        %v452 = vld [vmem:[%s255 + $0x4b8] sm:$0xff]
        %v453 = vld [vmem:[%s255 + $0x4c0] sm:$0xff]
        %v454 = vld [vmem:[%s255 + $0x4c8] sm:$0xff]
        %v455 = vld [vmem:[%s255 + $0x4d0] sm:$0xff]
        %v456 = vld [vmem:[%s255 + $0x4d8] sm:$0xff]
        %v457 = vld [vmem:[%s255 + $0x4e0] sm:$0xff]
        %v458 = vld [vmem:[%s255 + $0x4e8] sm:$0xff]
        %v459 = vld [vmem:[%s255 + $0x4f0] sm:$0xff]
        %v460 = vld [vmem:[%s255 + $0x4f8] sm:$0xff]
        %v461 = vld [vmem:[%s255 + $0x500] sm:$0xff]
        %v462 = vld [vmem:[%s255 + $0x508] sm:$0xff]
        %v463 = vld [vmem:[%s255 + $0x510] sm:$0xff]
        %v464 = vld [vmem:[%s255 + $0x518] sm:$0xff]
        %v465 = vld [vmem:[%s255 + $0x520] sm:$0xff]
        %v466 = vld [vmem:[%s255 + $0x528] sm:$0xff]
        %v467 = vld [vmem:[%s255 + $0x530] sm:$0xff]
        %v468 = vld [vmem:[%s255 + $0x538] sm:$0xff]
        %v469 = vld [vmem:[%s255 + $0x540] sm:$0xff]
        %v470 = vld [vmem:[%s255 + $0x548] sm:$0xff]
        %v471 = vld [vmem:[%s255 + $0x550] sm:$0xff]
        %v472 = vld [vmem:[%s255 + $0x558] sm:$0xff]
        %v473 = vld [vmem:[%s255 + $0x560] sm:$0xff]
        %v474 = vld [vmem:[%s255 + $0x568] sm:$0xff]
        %v475 = vld [vmem:[%s255 + $0x570] sm:$0xff]
        %v476 = vld [vmem:[%s255 + $0x578] sm:$0xff]
        %v477 = vld [vmem:[%s255 + $0x580] sm:$0xff]
        %v478 = vld [vmem:[%s255 + $0x588] sm:$0xff]
        %v479 = vld [vmem:[%s255 + $0x590] sm:$0xff]
        %v480 = vld [vmem:[%s255 + $0x598] sm:$0xff]
        %v481 = vld [vmem:[%s255 + $0x5a0] sm:$0xff]
        %v482 = vld [vmem:[%s255 + $0x5a8] sm:$0xff]
        %v483 = vld [vmem:[%s255 + $0x5b0] sm:$0xff]
        %v484 = vld [vmem:[%s255 + $0x5b8] sm:$0xff]
        %v485 = vld [vmem:[%s255 + $0x5c0] sm:$0xff]
        %v486 = vld [vmem:[%s255 + $0x5c8] sm:$0xff]
        %v487 = vld [vmem:[%s255 + $0x5d0] sm:$0xff]
        %v488 = vld [vmem:[%s255 + $0x5d8] sm:$0xff]
        %v489 = vld [vmem:[%s255 + $0x5e0] sm:$0xff]
        %v490 = vld [vmem:[%s255 + $0x5e8] sm:$0xff]
        %v491 = vld [vmem:[%s255 + $0x5f0] sm:$0xff]
        %v492 = vld [vmem:[%s255 + $0x5f8] sm:$0xff]
        %v493 = vld [vmem:[%s255 + $0x600] sm:$0xff]
        %v494 = vld [vmem:[%s255 + $0x608] sm:$0xff]
        %v495 = vld [vmem:[%s255 + $0x610] sm:$0xff]
        %v496 = vld [vmem:[%s255 + $0x618] sm:$0xff]
        %v497 = vld [vmem:[%s255 + $0x620] sm:$0xff]
        %v498 = vld [vmem:[%s255 + $0x628] sm:$0xff]
        %v499 = vld [vmem:[%s255 + $0x630] sm:$0xff]
        %v500 = vld [vmem:[%s255 + $0x638] sm:$0xff]
        %v501 = vld [vmem:[%s255 + $0x640] sm:$0xff]
        %v502 = vld [vmem:[%s255 + $0x648] sm:$0xff]
        %v503 = vld [vmem:[%s255 + $0x650] sm:$0xff]
        %v504 = vld [vmem:[%s255 + $0x658] sm:$0xff]
        %v505 = vld [vmem:[%s255 + $0x660] sm:$0xff]
        %v506 = vld [vmem:[%s255 + $0x668] sm:$0xff]
        %v507 = vld [vmem:[%s255 + $0x670] sm:$0xff]
        %v508 = vld [vmem:[%s255 + $0x678] sm:$0xff]
        %v509 = vld [vmem:[%s255 + $0x680] sm:$0xff]
        %v510 = vld [vmem:[%s255 + $0x688] sm:$0xff]
        %v511 = vld [vmem:[%s255 + $0x690] sm:$0xff]
        %v512 = vld [vmem:[%s255 + $0x698] sm:$0xff]
        %v513 = vld [vmem:[%s255 + $0x6a0] sm:$0xff]
        %v514 = vld [vmem:[%s255 + $0x6a8] sm:$0xff]
        %v515 = vld [vmem:[%s255 + $0x6b0] sm:$0xff]
        %v516 = vld [vmem:[%s255 + $0x6b8] sm:$0xff]
        %v517 = vld [vmem:[%s255 + $0x6c0] sm:$0xff]
        %v518 = vld [vmem:[%s255 + $0x6c8] sm:$0xff]
        %v519 = vld [vmem:[%s255 + $0x6d0] sm:$0xff]
        %v520 = vld [vmem:[%s255 + $0x6d8] sm:$0xff]
        %v521 = vld [vmem:[%s255 + $0x6e0] sm:$0xff]
        %v522 = vld [vmem:[%s255 + $0x6e8] sm:$0xff]
        %v523 = vld [vmem:[%s255 + $0x6f0] sm:$0xff]
        %v524 = vld [vmem:[%s255 + $0x6f8] sm:$0xff]
        %v525 = vld [vmem:[%s255 + $0x700] sm:$0xff]
        %v526 = vld [vmem:[%s255 + $0x708] sm:$0xff]
        %v527 = vld [vmem:[%s255 + $0x710] sm:$0xff]
        %v528 = vld [vmem:[%s255 + $0x718] sm:$0xff]
        %v529 = vld [vmem:[%s255 + $0x720] sm:$0xff]
        %v530 = vld [vmem:[%s255 + $0x728] sm:$0xff]
        %v531 = vld [vmem:[%s255 + $0x730] sm:$0xff]
        %v532 = vld [vmem:[%s255 + $0x738] sm:$0xff]
        %v533 = vld [vmem:[%s255 + $0x740] sm:$0xff]
        %v534 = vld [vmem:[%s255 + $0x748] sm:$0xff]
        %v535 = vld [vmem:[%s255 + $0x750] sm:$0xff]
        %v536 = vld [vmem:[%s255 + $0x758] sm:$0xff]
        %v537 = vld [vmem:[%s255 + $0x760] sm:$0xff]
        %v538 = vld [vmem:[%s255 + $0x768] sm:$0xff]
        %v539 = vld [vmem:[%s255 + $0x770] sm:$0xff]
        %v540 = vld [vmem:[%s255 + $0x778] sm:$0xff]
        %v541 = vld [vmem:[%s255 + $0x780] sm:$0xff]
        %v542 = vld [vmem:[%s255 + $0x788] sm:$0xff]
        %v543 = vld [vmem:[%s255 + $0x790] sm:$0xff]
        %v544 = vld [vmem:[%s255 + $0x798] sm:$0xff]
        %v545 = vld [vmem:[%s255 + $0x7a0] sm:$0xff]
        %v546 = vld [vmem:[%s255 + $0x7a8] sm:$0xff]
        %v547 = vld [vmem:[%s255 + $0x7b0] sm:$0xff]
        %v548 = vld [vmem:[%s255 + $0x7b8] sm:$0xff]
        %v549 = vld [vmem:[%s255 + $0x7c0] sm:$0xff]
        %v550 = vld [vmem:[%s255 + $0x7c8] sm:$0xff]
        %v551 = vld [vmem:[%s255 + $0x7d0] sm:$0xff]
        %v552 = vld [vmem:[%s255 + $0x7d8] sm:$0xff]
        %v553 = vld [vmem:[%s255 + $0x7e0] sm:$0xff]
        %v554 = vld [vmem:[%s255 + $0x7e8] sm:$0xff]
        %v555 = vld [vmem:[%s255 + $0x7f0] sm:$0xff]
        %v556 = vld [vmem:[%s255 + $0x7f8] sm:$0xff]
        %v557 = vld [vmem:[%s255 + $0x800] sm:$0xff]
        %v558 = vld [vmem:[%s255 + $0x808] sm:$0xff]
        %v559 = vld [vmem:[%s255 + $0x810] sm:$0xff]
        %v560 = vld [vmem:[%s255 + $0x818] sm:$0xff]
        %v561 = vld [vmem:[%s255 + $0x820] sm:$0xff]
        %v562 = vld [vmem:[%s255 + $0x828] sm:$0xff]
        %v563 = vld [vmem:[%s255 + $0x830] sm:$0xff]
        %v564 = vld [vmem:[%s255 + $0x838] sm:$0xff]
        %v565 = vld [vmem:[%s255 + $0x840] sm:$0xff]
        %v566 = vld [vmem:[%s255 + $0x848] sm:$0xff]
        %v567 = vld [vmem:[%s255 + $0x850] sm:$0xff]
        %v568 = vld [vmem:[%s255 + $0x858] sm:$0xff]
        %v569 = vld [vmem:[%s255 + $0x860] sm:$0xff]
        %v570 = vld [vmem:[%s255 + $0x868] sm:$0xff]
        %v571 = vld [vmem:[%s255 + $0x870] sm:$0xff]
        %v572 = vld [vmem:[%s255 + $0x878] sm:$0xff]
        %v573 = vld [vmem:[#allocation5] sm:$0xf]
        %v574 = vld [vmem:[#allocation5 + $0x4] sm:$0xf]
        %v575 = vld [vmem:[#allocation5 + $0x8] sm:$0xf]
        %v576 = vld [vmem:[#allocation5 + $0xc] sm:$0xf]
        %v577 = vld [vmem:[#allocation5 + $0x10] sm:$0xf]
        %v578 = vld [vmem:[#allocation5 + $0x14] sm:$0xf]
        %v579 = vld [vmem:[#allocation5 + $0x18] sm:$0xf]
        %v580 = vld [vmem:[#allocation5 + $0x1c] sm:$0xf]
        %v581 = vld [vmem:[#allocation5 + $0x20] sm:$0xf]
        %v582 = vld [vmem:[#allocation5 + $0x24] sm:$0xf]
        %v583 = vld [vmem:[#allocation5 + $0x28] sm:$0xf]
        %v584 = vld [vmem:[#allocation5 + $0x2c] sm:$0xf]
        %v585 = vld [vmem:[#allocation5 + $0x30] sm:$0xf]
        %v586 = vld [vmem:[#allocation5 + $0x34] sm:$0xf]
        %v587 = vld [vmem:[#allocation5 + $0x38] sm:$0xf]
        %v588 = vld [vmem:[#allocation5 + $0x3c] sm:$0xf]
        %v589 = vld [vmem:[#allocation5 + $0x40] sm:$0xf]
        %v590 = vld [vmem:[#allocation5 + $0x44] sm:$0xf]
        %v591 = vld [vmem:[#allocation5 + $0x48] sm:$0xf]
        %v592 = vld [vmem:[#allocation5 + $0x4c] sm:$0xf]
        %v593 = vld [vmem:[#allocation5 + $0x50] sm:$0xf]
        %v594 = vld [vmem:[#allocation5 + $0x54] sm:$0xf]
        %v595 = vld [vmem:[#allocation5 + $0x58] sm:$0xf]
        %v596 = vld [vmem:[#allocation5 + $0x5c] sm:$0xf]
        %v597 = vld [vmem:[#allocation5 + $0x60] sm:$0xf]
        %v598 = vld [vmem:[#allocation5 + $0x64] sm:$0xf]
        %v599 = vld [vmem:[#allocation5 + $0x68] sm:$0xf]
        %v600 = vld [vmem:[#allocation5 + $0x6c] sm:$0xf]
        %v601 = vld [vmem:[#allocation5 + $0x70] sm:$0xf]
        %v602 = vld [vmem:[#allocation5 + $0x74] sm:$0xf]
        %v603 = vld [vmem:[#allocation5 + $0x78] sm:$0xf]
        %v604 = vld [vmem:[#allocation5 + $0x7c] sm:$0xf]
        %v605 = vld [vmem:[#allocation5 + $0x80] sm:$0xf]
        %v606 = vld [vmem:[#allocation5 + $0x84] sm:$0xf]
        %v607 = vld [vmem:[#allocation5 + $0x88] sm:$0xf]
        %v608 = vld [vmem:[#allocation5 + $0x8c] sm:$0xf]
        %v609 = vld [vmem:[#allocation5 + $0x90] sm:$0xf]
        %v610 = vld [vmem:[#allocation5 + $0x94] sm:$0xf]
        %v611 = vld [vmem:[#allocation5 + $0x98] sm:$0xf]
        %v612 = vld [vmem:[#allocation5 + $0x9c] sm:$0xf]
        %v613 = vld [vmem:[#allocation5 + $0xa0] sm:$0xf]
        %v614 = vld [vmem:[#allocation5 + $0xa4] sm:$0xf]
        %v615 = vld [vmem:[#allocation5 + $0xa8] sm:$0xf]
        %v616 = vld [vmem:[#allocation5 + $0xac] sm:$0xf]
        %v617 = vld [vmem:[#allocation5 + $0xb0] sm:$0xf]
        %v618 = vld [vmem:[#allocation5 + $0xb4] sm:$0xf]
        %v619 = vld [vmem:[#allocation5 + $0xb8] sm:$0xf]
        %v620 = vld [vmem:[#allocation5 + $0xbc] sm:$0xf]
        %v621 = vld [vmem:[#allocation5 + $0xc0] sm:$0xf]
        %v622 = vld [vmem:[#allocation5 + $0xc4] sm:$0xf]
        %v623 = vld [vmem:[#allocation5 + $0xc8] sm:$0xf]
        %v624 = vld [vmem:[#allocation5 + $0xcc] sm:$0xf]
        %v625 = vld [vmem:[#allocation5 + $0xd0] sm:$0xf]
        %v626 = vld [vmem:[#allocation5 + $0xd4] sm:$0xf]
        %v627 = vld [vmem:[#allocation5 + $0xd8] sm:$0xf]
        %v628 = vld [vmem:[#allocation5 + $0xdc] sm:$0xf]
        %v629 = vld [vmem:[#allocation5 + $0xe0] sm:$0xf]
        %v630 = vld [vmem:[#allocation5 + $0xe4] sm:$0xf]
        %v631 = vld [vmem:[#allocation5 + $0xe8] sm:$0xf]
        %v632 = vld [vmem:[#allocation5 + $0xec] sm:$0xf]
        %v633 = vld [vmem:[#allocation5 + $0xf0] sm:$0xf]
        %v634 = vld [vmem:[#allocation5 + $0xf4] sm:$0xf]
        %v635 = vld [vmem:[#allocation5 + $0xf8] sm:$0xf]
        %v636 = vld [vmem:[#allocation5 + $0xfc] sm:$0xf]
        %v637 = vld [vmem:[#allocation5 + $0x100] sm:$0xf]
        %v638 = vld [vmem:[#allocation5 + $0x104] sm:$0xf]
        %v639 = vld [vmem:[#allocation5 + $0x108] sm:$0xf]
        %v640 = vld [vmem:[#allocation5 + $0x10c] sm:$0xf]
        %v641 = vld [vmem:[#allocation5 + $0x110] sm:$0xf]
        %v642 = vld [vmem:[#allocation5 + $0x114] sm:$0xf]
        %v643 = vld [vmem:[#allocation5 + $0x118] sm:$0xf]
        %v644 = vld [vmem:[#allocation5 + $0x11c] sm:$0xf]
        %v645 = vld [vmem:[#allocation5 + $0x120] sm:$0xf]
        %v646 = vld [vmem:[#allocation5 + $0x124] sm:$0xf]
        %v647 = vld [vmem:[#allocation5 + $0x128] sm:$0xf]
        %v648 = vld [vmem:[#allocation5 + $0x12c] sm:$0xf]
        %v649 = vld [vmem:[#allocation5 + $0x130] sm:$0xf]
        %v650 = vld [vmem:[#allocation5 + $0x134] sm:$0xf]
        %v651 = vld [vmem:[#allocation5 + $0x138] sm:$0xf]
        %v652 = vld [vmem:[#allocation5 + $0x13c] sm:$0xf]
        %v653 = vld [vmem:[#allocation5 + $0x140] sm:$0xf]
        %v654 = vld [vmem:[#allocation5 + $0x144] sm:$0xf]
        %v655 = vld [vmem:[#allocation5 + $0x148] sm:$0xf]
        %v656 = vld [vmem:[#allocation5 + $0x14c] sm:$0xf]
        %v657 = vld [vmem:[#allocation5 + $0x150] sm:$0xf]
        %v658 = vld [vmem:[#allocation5 + $0x154] sm:$0xf]
        %v659 = vld [vmem:[#allocation5 + $0x158] sm:$0xf]
        %v660 = vld [vmem:[#allocation5 + $0x15c] sm:$0xf]
        %v661 = vld [vmem:[#allocation5 + $0x160] sm:$0xf]
        %v662 = vld [vmem:[#allocation5 + $0x164] sm:$0xf]
        %v663 = vld [vmem:[#allocation5 + $0x168] sm:$0xf]
        %v664 = vld [vmem:[#allocation5 + $0x16c] sm:$0xf]
        %v665 = vld [vmem:[#allocation5 + $0x170] sm:$0xf]
        %v666 = vld [vmem:[#allocation5 + $0x174] sm:$0xf]
        %v667 = vld [vmem:[#allocation5 + $0x178] sm:$0xf]
        %v668 = vld [vmem:[#allocation5 + $0x17c] sm:$0xf]
        %v669 = vld [vmem:[#allocation5 + $0x180] sm:$0xf]
        %v670 = vld [vmem:[#allocation5 + $0x184] sm:$0xf]
        %v671 = vld [vmem:[#allocation5 + $0x188] sm:$0xf]
        %v672 = vld [vmem:[#allocation5 + $0x18c] sm:$0xf]
        %v673 = vld [vmem:[#allocation5 + $0x190] sm:$0xf]
        %v674 = vld [vmem:[#allocation5 + $0x194] sm:$0xf]
        %v675 = vld [vmem:[#allocation5 + $0x198] sm:$0xf]
        %v676 = vld [vmem:[#allocation5 + $0x19c] sm:$0xf]
        %v677 = vld [vmem:[#allocation5 + $0x1a0] sm:$0xf]
        %v678 = vld [vmem:[#allocation5 + $0x1a4] sm:$0xf]
        %v679 = vld [vmem:[#allocation5 + $0x1a8] sm:$0xf]
        %v680 = vld [vmem:[#allocation5 + $0x1ac] sm:$0xf]
        %v681 = vld [vmem:[#allocation5 + $0x1b0] sm:$0xf]
        %v682 = vld [vmem:[#allocation5 + $0x1b4] sm:$0xf]
        %v683 = vld [vmem:[#allocation5 + $0x1b8] sm:$0xf]
        %v684 = vld [vmem:[#allocation5 + $0x1bc] sm:$0xf]
        %v685 = vld [vmem:[#allocation5 + $0x1c0] sm:$0xf]
        %v686 = vld [vmem:[#allocation5 + $0x1c4] sm:$0xf]
        %v687 = vld [vmem:[#allocation5 + $0x1c8] sm:$0xf]
        %v688 = vld [vmem:[#allocation5 + $0x1cc] sm:$0xf]
        %v689 = vld [vmem:[#allocation5 + $0x1d0] sm:$0xf]
        %v690 = vld [vmem:[#allocation5 + $0x1d4] sm:$0xf]
        %v691 = vld [vmem:[#allocation5 + $0x1d8] sm:$0xf]
        %v692 = vld [vmem:[#allocation5 + $0x1dc] sm:$0xf]
        %v693 = vld [vmem:[#allocation5 + $0x1e0] sm:$0xf]
        %v694 = vld [vmem:[#allocation5 + $0x1e4] sm:$0xf]
        %v695 = vld [vmem:[#allocation5 + $0x1e8] sm:$0xf]
        %v696 = vld [vmem:[#allocation5 + $0x1ec] sm:$0xf]
        %v697 = vld [vmem:[#allocation5 + $0x1f0] sm:$0xf]
        %v698 = vld [vmem:[#allocation5 + $0x1f4] sm:$0xf]
        %v699 = vld [vmem:[#allocation5 + $0x1f8] sm:$0xf]
        %v700 = vld [vmem:[#allocation5 + $0x1fc] sm:$0xf]
        %v701 = vld [vmem:[#allocation5 + $0x200] sm:$0xf]
        %v702 = vld [vmem:[#allocation5 + $0x204] sm:$0xf]
        %v703 = vld [vmem:[#allocation5 + $0x208] sm:$0xf]
        %v704 = vld [vmem:[#allocation5 + $0x20c] sm:$0xf]
        %v705 = vld [vmem:[#allocation5 + $0x210] sm:$0xf]
        %v706 = vld [vmem:[#allocation5 + $0x214] sm:$0xf]
        %v707 = vld [vmem:[#allocation5 + $0x218] sm:$0xf]
        %v708 = vld [vmem:[#allocation5 + $0x21c] sm:$0xf]
        %v709 = vld [vmem:[#allocation5 + $0x220] sm:$0xf]
        %v710 = vld [vmem:[#allocation5 + $0x224] sm:$0xf]
        %v711 = vld [vmem:[#allocation5 + $0x228] sm:$0xf]
        %v712 = vld [vmem:[#allocation5 + $0x22c] sm:$0xf]
        %v713 = vld [vmem:[#allocation5 + $0x230] sm:$0xf]
        %v714 = vld [vmem:[#allocation5 + $0x234] sm:$0xf]
        %v715 = vld [vmem:[#allocation5 + $0x238] sm:$0xf]
        %v716 = vld [vmem:[#allocation5 + $0x23c] sm:$0xf]
        %v717 = vld [vmem:[#allocation5 + $0x240] sm:$0xf]
        %v718 = vld [vmem:[#allocation5 + $0x244] sm:$0xf]
        %v719 = vld [vmem:[#allocation5 + $0x248] sm:$0xf]
        %v720 = vld [vmem:[#allocation5 + $0x24c] sm:$0xf]
        %v721 = vld [vmem:[#allocation5 + $0x250] sm:$0xf]
        %v722 = vld [vmem:[#allocation5 + $0x254] sm:$0xf]
        %v723 = vld [vmem:[#allocation5 + $0x258] sm:$0xf]
        %v724 = vld [vmem:[#allocation5 + $0x25c] sm:$0xf]
        %v725 = vld [vmem:[#allocation5 + $0x260] sm:$0xf]
        %v726 = vld [vmem:[#allocation5 + $0x264] sm:$0xf]
        %v727 = vld [vmem:[#allocation5 + $0x268] sm:$0xf]
        %v728 = vld [vmem:[#allocation5 + $0x26c] sm:$0xf]
        %v729 = vld [vmem:[#allocation5 + $0x270] sm:$0xf]
        %v730 = vld [vmem:[#allocation5 + $0x274] sm:$0xf]
        %v731 = vld [vmem:[#allocation5 + $0x278] sm:$0xf]
        %v732 = vld [vmem:[#allocation5 + $0x27c] sm:$0xf]
        %v733 = vld [vmem:[#allocation5 + $0x280] sm:$0xf]
        %v734 = vld [vmem:[#allocation5 + $0x284] sm:$0xf]
        %v735 = vld [vmem:[#allocation5 + $0x288] sm:$0xf]
        %v736 = vld [vmem:[#allocation5 + $0x28c] sm:$0xf]
        %v737 = vld [vmem:[#allocation5 + $0x290] sm:$0xf]
        %v738 = vld [vmem:[#allocation5 + $0x294] sm:$0xf]
        %v739 = vld [vmem:[#allocation5 + $0x298] sm:$0xf]
        %v740 = vld [vmem:[#allocation5 + $0x29c] sm:$0xf]
        %v741 = vld [vmem:[#allocation5 + $0x2a0] sm:$0xf]
        %v742 = vld [vmem:[#allocation5 + $0x2a4] sm:$0xf]
        %v743 = vld [vmem:[#allocation5 + $0x2a8] sm:$0xf]
        %v744 = vld [vmem:[#allocation5 + $0x2ac] sm:$0xf]
        %v745 = vld [vmem:[#allocation5 + $0x2b0] sm:$0xf]
        %v746 = vld [vmem:[#allocation5 + $0x2b4] sm:$0xf]
        %v747 = vld [vmem:[#allocation5 + $0x2b8] sm:$0xf]
        %v748 = vld [vmem:[#allocation5 + $0x2bc] sm:$0xf]
        %v749 = vld [vmem:[#allocation5 + $0x2c0] sm:$0xf]
        %v750 = vld [vmem:[#allocation5 + $0x2c4] sm:$0xf]
        %v751 = vld [vmem:[#allocation5 + $0x2c8] sm:$0xf]
        %v752 = vld [vmem:[#allocation5 + $0x2cc] sm:$0xf]
        %v753 = vld [vmem:[#allocation5 + $0x2d0] sm:$0xf]
        %v754 = vld [vmem:[#allocation5 + $0x2d4] sm:$0xf]
        %v755 = vld [vmem:[#allocation5 + $0x2d8] sm:$0xf]
        %v756 = vld [vmem:[#allocation5 + $0x2dc] sm:$0xf]
        %v757 = vld [vmem:[#allocation5 + $0x2e0] sm:$0xf]
        %v758 = vld [vmem:[#allocation5 + $0x2e4] sm:$0xf]
        %v759 = vld [vmem:[#allocation5 + $0x2e8] sm:$0xf]
        %v760 = vld [vmem:[#allocation5 + $0x2ec] sm:$0xf]
        %v761 = vld [vmem:[#allocation5 + $0x2f0] sm:$0xf]
        %v762 = vld [vmem:[#allocation5 + $0x2f4] sm:$0xf]
        %v763 = vld [vmem:[#allocation5 + $0x2f8] sm:$0xf]
        %v764 = vld [vmem:[#allocation5 + $0x2fc] sm:$0xf]
        %v765 = vld [vmem:[#allocation5 + $0x300] sm:$0xf]
        %v766 = vld [vmem:[#allocation5 + $0x304] sm:$0xf]
        %v767 = vld [vmem:[#allocation5 + $0x308] sm:$0xf]
        %v768 = vld [vmem:[#allocation5 + $0x30c] sm:$0xf]
        %v769 = vld [vmem:[#allocation5 + $0x310] sm:$0xf]
        %v770 = vld [vmem:[#allocation5 + $0x314] sm:$0xf]
        %v771 = vld [vmem:[#allocation5 + $0x318] sm:$0xf]
        %v772 = vld [vmem:[#allocation5 + $0x31c] sm:$0xf]
        %v773 = vld [vmem:[#allocation5 + $0x320] sm:$0xf]
        %v774 = vld [vmem:[#allocation5 + $0x324] sm:$0xf]
        %v775 = vld [vmem:[#allocation5 + $0x328] sm:$0xf]
        %v776 = vld [vmem:[#allocation5 + $0x32c] sm:$0xf]
        %v777 = vld [vmem:[#allocation5 + $0x330] sm:$0xf]
        %v778 = vld [vmem:[#allocation5 + $0x334] sm:$0xf]
        %v779 = vld [vmem:[#allocation5 + $0x338] sm:$0xf]
        %v780 = vld [vmem:[#allocation5 + $0x33c] sm:$0xf]
        %v781 = vld [vmem:[#allocation5 + $0x340] sm:$0xf]
        %v782 = vld [vmem:[#allocation5 + $0x344] sm:$0xf]
        %v783 = vld [vmem:[#allocation5 + $0x348] sm:$0xf]
        %v784 = vld [vmem:[#allocation5 + $0x34c] sm:$0xf]
        %v785 = vld [vmem:[#allocation5 + $0x350] sm:$0xf]
        %v786 = vld [vmem:[#allocation5 + $0x354] sm:$0xf]
        %v787 = vld [vmem:[#allocation5 + $0x358] sm:$0xf]
        %v788 = vld [vmem:[#allocation5 + $0x35c] sm:$0xf]
        %v789 = vld [vmem:[#allocation5 + $0x360] sm:$0xf]
        %v790 = vld [vmem:[#allocation5 + $0x364] sm:$0xf]
        %v791 = vld [vmem:[#allocation5 + $0x368] sm:$0xf]
        %v792 = vld [vmem:[#allocation5 + $0x36c] sm:$0xf]
        %v793 = vld [vmem:[#allocation5 + $0x370] sm:$0xf]
        %v794 = vld [vmem:[#allocation5 + $0x374] sm:$0xf]
        %v795 = vld [vmem:[#allocation5 + $0x378] sm:$0xf]
        %v796 = vld [vmem:[#allocation5 + $0x37c] sm:$0xf]
        %v797 = vld [vmem:[#allocation5 + $0x380] sm:$0xf]
        %v798 = vld [vmem:[#allocation5 + $0x384] sm:$0xf]
        %v799 = vld [vmem:[#allocation5 + $0x388] sm:$0xf]
        %v800 = vld [vmem:[#allocation5 + $0x38c] sm:$0xf]
        %v801 = vld [vmem:[#allocation5 + $0x390] sm:$0xf]
        %v802 = vld [vmem:[#allocation5 + $0x394] sm:$0xf]
        %v803 = vld [vmem:[#allocation5 + $0x398] sm:$0xf]
        %v804 = vld [vmem:[#allocation5 + $0x39c] sm:$0xf]
        %v805 = vld [vmem:[#allocation5 + $0x3a0] sm:$0xf]
        %v806 = vld [vmem:[#allocation5 + $0x3a4] sm:$0xf]
        %v807 = vld [vmem:[#allocation5 + $0x3a8] sm:$0xf]
        %v808 = vld [vmem:[#allocation5 + $0x3ac] sm:$0xf]
        %v809 = vld [vmem:[#allocation5 + $0x3b0] sm:$0xf]
        %v810 = vld [vmem:[#allocation5 + $0x3b4] sm:$0xf]
        %v811 = vld [vmem:[#allocation5 + $0x3b8] sm:$0xf]
        %v812 = vld [vmem:[#allocation5 + $0x3bc] sm:$0xf]
        %v813 = vld [vmem:[#allocation5 + $0x3c0] sm:$0xf]
        %v814 = vld [vmem:[#allocation5 + $0x3c4] sm:$0xf]
        %v815 = vld [vmem:[#allocation5 + $0x3c8] sm:$0xf]
        %v816 = vld [vmem:[#allocation5 + $0x3cc] sm:$0xf]
        %v817 = vld [vmem:[#allocation5 + $0x3d0] sm:$0xf]
        %v818 = vld [vmem:[#allocation5 + $0x3d4] sm:$0xf]
        %v819 = vld [vmem:[#allocation5 + $0x3d8] sm:$0xf]
        %v820 = vld [vmem:[#allocation5 + $0x3dc] sm:$0xf]
        %v821 = vld [vmem:[#allocation5 + $0x3e0] sm:$0xf]
        %v822 = vld [vmem:[#allocation5 + $0x3e4] sm:$0xf]
        %v823 = vld [vmem:[#allocation5 + $0x3e8] sm:$0xf]
        %v824 = vld [vmem:[#allocation5 + $0x3ec] sm:$0xf]
        %v825 = vld [vmem:[#allocation5 + $0x3f0] sm:$0xf]
        %v826 = vld [vmem:[#allocation5 + $0x3f4] sm:$0xf]
        %v827 = vld [vmem:[#allocation5 + $0x3f8] sm:$0xf]
        %v828 = vld [vmem:[#allocation5 + $0x3fc] sm:$0xf]
        %v829 = vld [vmem:[#allocation7] sm:$0x1]
        %v831 = vlaneseq
        %v832 = vshrl.u32 %v831, 7
        %v833 = vsub.s32 0, %v832
        %v834 = vrot.slane %v829, %v833
        %v1108 = vunpack.c.l.b16 %v301
        %v1109 = vunpack.c.h.b16 %v301
        %v1110 = vunpack.c.l.b16 %v302
        %v1111 = vunpack.c.h.b16 %v302
        %v1112 = vunpack.c.l.b16 %v303
        %v1113 = vunpack.c.h.b16 %v303
        %v1114 = vunpack.c.l.b16 %v304
        %v1115 = vunpack.c.h.b16 %v304
        %v1116 = vunpack.c.l.b16 %v305
        %v1117 = vunpack.c.h.b16 %v305
        %v1118 = vunpack.c.l.b16 %v306
        %v1119 = vunpack.c.h.b16 %v306
        %v1120 = vunpack.c.l.b16 %v307
        %v1121 = vunpack.c.h.b16 %v307
        %v1122 = vunpack.c.l.b16 %v308
        %v1123 = vunpack.c.h.b16 %v308
        %v1124 = vunpack.c.l.b16 %v309
        %v1125 = vunpack.c.h.b16 %v309
        %v1126 = vunpack.c.l.b16 %v310
        %v1127 = vunpack.c.h.b16 %v310
        %v1128 = vunpack.c.l.b16 %v311
        %v1129 = vunpack.c.h.b16 %v311
        %v1130 = vunpack.c.l.b16 %v312
        %v1131 = vunpack.c.h.b16 %v312
        %v1132 = vunpack.c.l.b16 %v313
        %v1133 = vunpack.c.h.b16 %v313
        %v1134 = vunpack.c.l.b16 %v314
        %v1135 = vunpack.c.h.b16 %v314
        %v1136 = vunpack.c.l.b16 %v315
        %v1137 = vunpack.c.h.b16 %v315
        %v1138 = vunpack.c.l.b16 %v316
        %v1139 = vunpack.c.h.b16 %v316
        %v1140 = vunpack.c.l.b16 %v317
        %v1141 = vunpack.c.h.b16 %v317
        %v1142 = vunpack.c.l.b16 %v318
        %v1143 = vunpack.c.h.b16 %v318
        %v1144 = vunpack.c.l.b16 %v319
        %v1145 = vunpack.c.h.b16 %v319
        %v1146 = vunpack.c.l.b16 %v320
        %v1147 = vunpack.c.h.b16 %v320
        %v1148 = vunpack.c.l.b16 %v321
        %v1149 = vunpack.c.h.b16 %v321
        %v1150 = vunpack.c.l.b16 %v322
        %v1151 = vunpack.c.h.b16 %v322
        %v1152 = vunpack.c.l.b16 %v323
        %v1153 = vunpack.c.h.b16 %v323
        %v1154 = vunpack.c.l.b16 %v324
        %v1155 = vunpack.c.h.b16 %v324
        %v1156 = vunpack.c.l.b16 %v325
        %v1157 = vunpack.c.h.b16 %v325
        %v1158 = vunpack.c.l.b16 %v326
        %v1159 = vunpack.c.h.b16 %v326
        %v1160 = vunpack.c.l.b16 %v327
        %v1161 = vunpack.c.h.b16 %v327
        %v1162 = vunpack.c.l.b16 %v328
        %v1163 = vunpack.c.h.b16 %v328
        %v1164 = vunpack.c.l.b16 %v329
        %v1165 = vunpack.c.h.b16 %v329
        %v1166 = vunpack.c.l.b16 %v330
        %v1167 = vunpack.c.h.b16 %v330
        %v1168 = vunpack.c.l.b16 %v331
        %v1169 = vunpack.c.h.b16 %v331
        %v1170 = vunpack.c.l.b16 %v332
        %v1171 = vunpack.c.h.b16 %v332
        %v1172 = vunpack.c.l.b16 %v333
        %v1173 = vunpack.c.h.b16 %v333
        %v1174 = vunpack.c.l.b16 %v334
        %v1175 = vunpack.c.h.b16 %v334
        %v1176 = vunpack.c.l.b16 %v335
        %v1177 = vunpack.c.h.b16 %v335
        %v1178 = vunpack.c.l.b16 %v336
        %v1179 = vunpack.c.h.b16 %v336
        %v1180 = vunpack.c.l.b16 %v337
        %v1181 = vunpack.c.h.b16 %v337
        %v1182 = vunpack.c.l.b16 %v338
        %v1183 = vunpack.c.h.b16 %v338
        %v1184 = vunpack.c.l.b16 %v339
        %v1185 = vunpack.c.h.b16 %v339
        %v1186 = vunpack.c.l.b16 %v340
        %v1187 = vunpack.c.h.b16 %v340
        %v1188 = vunpack.c.l.b16 %v341
        %v1189 = vunpack.c.h.b16 %v341
        %v1190 = vunpack.c.l.b16 %v342
        %v1191 = vunpack.c.h.b16 %v342
        %v1192 = vunpack.c.l.b16 %v343
        %v1193 = vunpack.c.h.b16 %v343
        %v1194 = vunpack.c.l.b16 %v344
        %v1195 = vunpack.c.h.b16 %v344
        %v1196 = vunpack.c.l.b16 %v345
        %v1197 = vunpack.c.h.b16 %v345
        %v1198 = vunpack.c.l.b16 %v346
        %v1199 = vunpack.c.h.b16 %v346
        %v1200 = vunpack.c.l.b16 %v347
        %v1201 = vunpack.c.h.b16 %v347
        %v1202 = vunpack.c.l.b16 %v348
        %v1203 = vunpack.c.h.b16 %v348
        %v1204 = vunpack.c.l.b16 %v349
        %v1205 = vunpack.c.h.b16 %v349
        %v1206 = vunpack.c.l.b16 %v350
        %v1207 = vunpack.c.h.b16 %v350
        %v1208 = vunpack.c.l.b16 %v351
        %v1209 = vunpack.c.h.b16 %v351
        %v1210 = vunpack.c.l.b16 %v352
        %v1211 = vunpack.c.h.b16 %v352
        %v1212 = vunpack.c.l.b16 %v353
        %v1213 = vunpack.c.h.b16 %v353
        %v1214 = vunpack.c.l.b16 %v354
        %v1215 = vunpack.c.h.b16 %v354
        %v1216 = vunpack.c.l.b16 %v355
        %v1217 = vunpack.c.h.b16 %v355
        %v1218 = vunpack.c.l.b16 %v356
        %v1219 = vunpack.c.h.b16 %v356
        %v1220 = vunpack.c.l.b16 %v357
        %v1221 = vunpack.c.h.b16 %v357
        %v1222 = vunpack.c.l.b16 %v358
        %v1223 = vunpack.c.h.b16 %v358
        %v1224 = vunpack.c.l.b16 %v359
        %v1225 = vunpack.c.h.b16 %v359
        %v1226 = vunpack.c.l.b16 %v360
        %v1227 = vunpack.c.h.b16 %v360
        %v1228 = vunpack.c.l.b16 %v361
        %v1229 = vunpack.c.h.b16 %v361
        %v1230 = vunpack.c.l.b16 %v362
        %v1231 = vunpack.c.h.b16 %v362
        %v1232 = vunpack.c.l.b16 %v363
        %v1233 = vunpack.c.h.b16 %v363
        %v1234 = vunpack.c.l.b16 %v364
        %v1235 = vunpack.c.h.b16 %v364
        %v1236 = vunpack.c.l.b16 %v365
        %v1237 = vunpack.c.h.b16 %v365
        %v1238 = vunpack.c.l.b16 %v366
        %v1239 = vunpack.c.h.b16 %v366
        %v1240 = vunpack.c.l.b16 %v367
        %v1241 = vunpack.c.h.b16 %v367
        %v1242 = vunpack.c.l.b16 %v368
        %v1243 = vunpack.c.h.b16 %v368
        %v1244 = vunpack.c.l.b16 %v369
        %v1245 = vunpack.c.h.b16 %v369
        %v1246 = vunpack.c.l.b16 %v370
        %v1247 = vunpack.c.h.b16 %v370
        %v1248 = vunpack.c.l.b16 %v371
        %v1249 = vunpack.c.h.b16 %v371
        %v1250 = vunpack.c.l.b16 %v372
        %v1251 = vunpack.c.h.b16 %v372
        %v1252 = vunpack.c.l.b16 %v373
        %v1253 = vunpack.c.h.b16 %v373
        %v1254 = vunpack.c.l.b16 %v374
        %v1255 = vunpack.c.h.b16 %v374
        %v1256 = vunpack.c.l.b16 %v375
        %v1257 = vunpack.c.h.b16 %v375
        %v1258 = vunpack.c.l.b16 %v376
        %v1259 = vunpack.c.h.b16 %v376
        %v1260 = vunpack.c.l.b16 %v377
        %v1261 = vunpack.c.h.b16 %v377
        %v1262 = vunpack.c.l.b16 %v378
        %v1263 = vunpack.c.h.b16 %v378
        %v1264 = vunpack.c.l.b16 %v379
        %v1265 = vunpack.c.h.b16 %v379
        %v1266 = vunpack.c.l.b16 %v380
        %v1267 = vunpack.c.h.b16 %v380
        %v1268 = vunpack.c.l.b16 %v381
        %v1269 = vunpack.c.h.b16 %v381
        %v1270 = vunpack.c.l.b16 %v382
        %v1271 = vunpack.c.h.b16 %v382
        %v1272 = vunpack.c.l.b16 %v383
        %v1273 = vunpack.c.h.b16 %v383
        %v1274 = vunpack.c.l.b16 %v384
        %v1275 = vunpack.c.h.b16 %v384
        %v1276 = vunpack.c.l.b16 %v385
        %v1277 = vunpack.c.h.b16 %v385
        %v1278 = vunpack.c.l.b16 %v386
        %v1279 = vunpack.c.h.b16 %v386
        %v1280 = vunpack.c.l.b16 %v387
        %v1281 = vunpack.c.h.b16 %v387
        %v1282 = vunpack.c.l.b16 %v388
        %v1283 = vunpack.c.h.b16 %v388
        %v1284 = vunpack.c.l.b16 %v389
        %v1285 = vunpack.c.h.b16 %v389
        %v1286 = vunpack.c.l.b16 %v390
        %v1287 = vunpack.c.h.b16 %v390
        %v1288 = vunpack.c.l.b16 %v391
        %v1289 = vunpack.c.h.b16 %v391
        %v1290 = vunpack.c.l.b16 %v392
        %v1291 = vunpack.c.h.b16 %v392
        %v1292 = vunpack.c.l.b16 %v393
        %v1293 = vunpack.c.h.b16 %v393
        %v1294 = vunpack.c.l.b16 %v394
        %v1295 = vunpack.c.h.b16 %v394
        %v1296 = vunpack.c.l.b16 %v395
        %v1297 = vunpack.c.h.b16 %v395
        %v1298 = vunpack.c.l.b16 %v396
        %v1299 = vunpack.c.h.b16 %v396
        %v1300 = vunpack.c.l.b16 %v397
        %v1301 = vunpack.c.h.b16 %v397
        %v1302 = vunpack.c.l.b16 %v398
        %v1303 = vunpack.c.h.b16 %v398
        %v1304 = vunpack.c.l.b16 %v399
        %v1305 = vunpack.c.h.b16 %v399
        %v1306 = vunpack.c.l.b16 %v400
        %v1307 = vunpack.c.h.b16 %v400
        %v1308 = vunpack.c.l.b16 %v401
        %v1309 = vunpack.c.h.b16 %v401
        %v1310 = vunpack.c.l.b16 %v402
        %v1311 = vunpack.c.h.b16 %v402
        %v1312 = vunpack.c.l.b16 %v403
        %v1313 = vunpack.c.h.b16 %v403
        %v1314 = vunpack.c.l.b16 %v404
        %v1315 = vunpack.c.h.b16 %v404
        %v1316 = vunpack.c.l.b16 %v405
        %v1317 = vunpack.c.h.b16 %v405
        %v1318 = vunpack.c.l.b16 %v406
        %v1319 = vunpack.c.h.b16 %v406
        %v1320 = vunpack.c.l.b16 %v407
        %v1321 = vunpack.c.h.b16 %v407
        %v1322 = vunpack.c.l.b16 %v408
        %v1323 = vunpack.c.h.b16 %v408
        %v1324 = vunpack.c.l.b16 %v409
        %v1325 = vunpack.c.h.b16 %v409
        %v1326 = vunpack.c.l.b16 %v410
        %v1327 = vunpack.c.h.b16 %v410
        %v1328 = vunpack.c.l.b16 %v411
        %v1329 = vunpack.c.h.b16 %v411
        %v1330 = vunpack.c.l.b16 %v412
        %v1331 = vunpack.c.h.b16 %v412
        %v1332 = vunpack.c.l.b16 %v413
        %v1333 = vunpack.c.h.b16 %v413
        %v1334 = vunpack.c.l.b16 %v414
        %v1335 = vunpack.c.h.b16 %v414
        %v1336 = vunpack.c.l.b16 %v415
        %v1337 = vunpack.c.h.b16 %v415
        %v1338 = vunpack.c.l.b16 %v416
        %v1339 = vunpack.c.h.b16 %v416
        %v1340 = vunpack.c.l.b16 %v417
        %v1341 = vunpack.c.h.b16 %v417
        %v1342 = vunpack.c.l.b16 %v418
        %v1343 = vunpack.c.h.b16 %v418
        %v1344 = vunpack.c.l.b16 %v419
        %v1345 = vunpack.c.h.b16 %v419
        %v1346 = vunpack.c.l.b16 %v420
        %v1347 = vunpack.c.h.b16 %v420
        %v1348 = vunpack.c.l.b16 %v421
        %v1349 = vunpack.c.h.b16 %v421
        %v1350 = vunpack.c.l.b16 %v422
        %v1351 = vunpack.c.h.b16 %v422
        %v1352 = vunpack.c.l.b16 %v423
        %v1353 = vunpack.c.h.b16 %v423
        %v1354 = vunpack.c.l.b16 %v424
        %v1355 = vunpack.c.h.b16 %v424
        %v1356 = vunpack.c.l.b16 %v425
        %v1357 = vunpack.c.h.b16 %v425
        %v1358 = vunpack.c.l.b16 %v426
        %v1359 = vunpack.c.h.b16 %v426
        %v1360 = vunpack.c.l.b16 %v427
        %v1361 = vunpack.c.h.b16 %v427
        %v1362 = vunpack.c.l.b16 %v428
        %v1363 = vunpack.c.h.b16 %v428
        %v1364 = vunpack.c.l.b16 %v429
        %v1365 = vunpack.c.h.b16 %v429
        %v1366 = vunpack.c.l.b16 %v430
        %v1367 = vunpack.c.h.b16 %v430
        %v1368 = vunpack.c.l.b16 %v431
        %v1369 = vunpack.c.h.b16 %v431
        %v1370 = vunpack.c.l.b16 %v432
        %v1371 = vunpack.c.h.b16 %v432
        %v1372 = vunpack.c.l.b16 %v433
        %v1373 = vunpack.c.h.b16 %v433
        %v1374 = vunpack.c.l.b16 %v434
        %v1375 = vunpack.c.h.b16 %v434
        %v1376 = vunpack.c.l.b16 %v435
        %v1377 = vunpack.c.h.b16 %v435
        %v1378 = vunpack.c.l.b16 %v436
        %v1379 = vunpack.c.h.b16 %v436
        %v1380 = vunpack.c.l.b16 %v437
        %v1381 = vunpack.c.h.b16 %v437
        %v1382 = vunpack.c.l.b16 %v438
        %v1383 = vunpack.c.h.b16 %v438
        %v1384 = vunpack.c.l.b16 %v439
        %v1385 = vunpack.c.h.b16 %v439
        %v1386 = vunpack.c.l.b16 %v440
        %v1387 = vunpack.c.h.b16 %v440
        %v1388 = vunpack.c.l.b16 %v441
        %v1389 = vunpack.c.h.b16 %v441
        %v1390 = vunpack.c.l.b16 %v442
        %v1391 = vunpack.c.h.b16 %v442
        %v1392 = vunpack.c.l.b16 %v443
        %v1393 = vunpack.c.h.b16 %v443
        %v1394 = vunpack.c.l.b16 %v444
        %v1395 = vunpack.c.h.b16 %v444
        %v1396 = vunpack.c.l.b16 %v445
        %v1397 = vunpack.c.h.b16 %v445
        %v1398 = vunpack.c.l.b16 %v446
        %v1399 = vunpack.c.h.b16 %v446
        %v1400 = vunpack.c.l.b16 %v447
        %v1401 = vunpack.c.h.b16 %v447
        %v1402 = vunpack.c.l.b16 %v448
        %v1403 = vunpack.c.h.b16 %v448
        %v1404 = vunpack.c.l.b16 %v449
        %v1405 = vunpack.c.h.b16 %v449
        %v1406 = vunpack.c.l.b16 %v450
        %v1407 = vunpack.c.h.b16 %v450
        %v1408 = vunpack.c.l.b16 %v451
        %v1409 = vunpack.c.h.b16 %v451
        %v1410 = vunpack.c.l.b16 %v452
        %v1411 = vunpack.c.h.b16 %v452
        %v1412 = vunpack.c.l.b16 %v453
        %v1413 = vunpack.c.h.b16 %v453
        %v1414 = vunpack.c.l.b16 %v454
        %v1415 = vunpack.c.h.b16 %v454
        %v1416 = vunpack.c.l.b16 %v455
        %v1417 = vunpack.c.h.b16 %v455
        %v1418 = vunpack.c.l.b16 %v456
        %v1419 = vunpack.c.h.b16 %v456
        %v1420 = vunpack.c.l.b16 %v457
        %v1421 = vunpack.c.h.b16 %v457
        %v1422 = vunpack.c.l.b16 %v458
        %v1423 = vunpack.c.h.b16 %v458
        %v1424 = vunpack.c.l.b16 %v459
        %v1425 = vunpack.c.h.b16 %v459
        %v1426 = vunpack.c.l.b16 %v460
        %v1427 = vunpack.c.h.b16 %v460
        %v1428 = vunpack.c.l.b16 %v461
        %v1429 = vunpack.c.h.b16 %v461
        %v1430 = vunpack.c.l.b16 %v462
        %v1431 = vunpack.c.h.b16 %v462
        %v1432 = vunpack.c.l.b16 %v463
        %v1433 = vunpack.c.h.b16 %v463
        %v1434 = vunpack.c.l.b16 %v464
        %v1435 = vunpack.c.h.b16 %v464
        %v1436 = vunpack.c.l.b16 %v465
        %v1437 = vunpack.c.h.b16 %v465
        %v1438 = vunpack.c.l.b16 %v466
        %v1439 = vunpack.c.h.b16 %v466
        %v1440 = vunpack.c.l.b16 %v467
        %v1441 = vunpack.c.h.b16 %v467
        %v1442 = vunpack.c.l.b16 %v468
        %v1443 = vunpack.c.h.b16 %v468
        %v1444 = vunpack.c.l.b16 %v469
        %v1445 = vunpack.c.h.b16 %v469
        %v1446 = vunpack.c.l.b16 %v470
        %v1447 = vunpack.c.h.b16 %v470
        %v1448 = vunpack.c.l.b16 %v471
        %v1449 = vunpack.c.h.b16 %v471
        %v1450 = vunpack.c.l.b16 %v472
        %v1451 = vunpack.c.h.b16 %v472
        %v1452 = vunpack.c.l.b16 %v473
        %v1453 = vunpack.c.h.b16 %v473
        %v1454 = vunpack.c.l.b16 %v474
        %v1455 = vunpack.c.h.b16 %v474
        %v1456 = vunpack.c.l.b16 %v475
        %v1457 = vunpack.c.h.b16 %v475
        %v1458 = vunpack.c.l.b16 %v476
        %v1459 = vunpack.c.h.b16 %v476
        %v1460 = vunpack.c.l.b16 %v477
        %v1461 = vunpack.c.h.b16 %v477
        %v1462 = vunpack.c.l.b16 %v478
        %v1463 = vunpack.c.h.b16 %v478
        %v1464 = vunpack.c.l.b16 %v479
        %v1465 = vunpack.c.h.b16 %v479
        %v1466 = vunpack.c.l.b16 %v480
        %v1467 = vunpack.c.h.b16 %v480
        %v1468 = vunpack.c.l.b16 %v481
        %v1469 = vunpack.c.h.b16 %v481
        %v1470 = vunpack.c.l.b16 %v482
        %v1471 = vunpack.c.h.b16 %v482
        %v1472 = vunpack.c.l.b16 %v483
        %v1473 = vunpack.c.h.b16 %v483
        %v1474 = vunpack.c.l.b16 %v484
        %v1475 = vunpack.c.h.b16 %v484
        %v1476 = vunpack.c.l.b16 %v485
        %v1477 = vunpack.c.h.b16 %v485
        %v1478 = vunpack.c.l.b16 %v486
        %v1479 = vunpack.c.h.b16 %v486
        %v1480 = vunpack.c.l.b16 %v487
        %v1481 = vunpack.c.h.b16 %v487
        %v1482 = vunpack.c.l.b16 %v488
        %v1483 = vunpack.c.h.b16 %v488
        %v1484 = vunpack.c.l.b16 %v489
        %v1485 = vunpack.c.h.b16 %v489
        %v1486 = vunpack.c.l.b16 %v490
        %v1487 = vunpack.c.h.b16 %v490
        %v1488 = vunpack.c.l.b16 %v491
        %v1489 = vunpack.c.h.b16 %v491
        %v1490 = vunpack.c.l.b16 %v492
        %v1491 = vunpack.c.h.b16 %v492
        %v1492 = vunpack.c.l.b16 %v493
        %v1493 = vunpack.c.h.b16 %v493
        %v1494 = vunpack.c.l.b16 %v494
        %v1495 = vunpack.c.h.b16 %v494
        %v1496 = vunpack.c.l.b16 %v495
        %v1497 = vunpack.c.h.b16 %v495
        %v1498 = vunpack.c.l.b16 %v496
        %v1499 = vunpack.c.h.b16 %v496
        %v1500 = vunpack.c.l.b16 %v497
        %v1501 = vunpack.c.h.b16 %v497
        %v1502 = vunpack.c.l.b16 %v498
        %v1503 = vunpack.c.h.b16 %v498
        %v1504 = vunpack.c.l.b16 %v499
        %v1505 = vunpack.c.h.b16 %v499
        %v1506 = vunpack.c.l.b16 %v500
        %v1507 = vunpack.c.h.b16 %v500
        %v1508 = vunpack.c.l.b16 %v501
        %v1509 = vunpack.c.h.b16 %v501
        %v1510 = vunpack.c.l.b16 %v502
        %v1511 = vunpack.c.h.b16 %v502
        %v1512 = vunpack.c.l.b16 %v503
        %v1513 = vunpack.c.h.b16 %v503
        %v1514 = vunpack.c.l.b16 %v504
        %v1515 = vunpack.c.h.b16 %v504
        %v1516 = vunpack.c.l.b16 %v505
        %v1517 = vunpack.c.h.b16 %v505
        %v1518 = vunpack.c.l.b16 %v506
        %v1519 = vunpack.c.h.b16 %v506
        %v1520 = vunpack.c.l.b16 %v507
        %v1521 = vunpack.c.h.b16 %v507
        %v1522 = vunpack.c.l.b16 %v508
        %v1523 = vunpack.c.h.b16 %v508
        %v1524 = vunpack.c.l.b16 %v509
        %v1525 = vunpack.c.h.b16 %v509
        %v1526 = vunpack.c.l.b16 %v510
        %v1527 = vunpack.c.h.b16 %v510
        %v1528 = vunpack.c.l.b16 %v511
        %v1529 = vunpack.c.h.b16 %v511
        %v1530 = vunpack.c.l.b16 %v512
        %v1531 = vunpack.c.h.b16 %v512
        %v1532 = vunpack.c.l.b16 %v513
        %v1533 = vunpack.c.h.b16 %v513
        %v1534 = vunpack.c.l.b16 %v514
        %v1535 = vunpack.c.h.b16 %v514
        %v1536 = vunpack.c.l.b16 %v515
        %v1537 = vunpack.c.h.b16 %v515
        %v1538 = vunpack.c.l.b16 %v516
        %v1539 = vunpack.c.h.b16 %v516
        %v1540 = vunpack.c.l.b16 %v517
        %v1541 = vunpack.c.h.b16 %v517
        %v1542 = vunpack.c.l.b16 %v518
        %v1543 = vunpack.c.h.b16 %v518
        %v1544 = vunpack.c.l.b16 %v519
        %v1545 = vunpack.c.h.b16 %v519
        %v1546 = vunpack.c.l.b16 %v520
        %v1547 = vunpack.c.h.b16 %v520
        %v1548 = vunpack.c.l.b16 %v521
        %v1549 = vunpack.c.h.b16 %v521
        %v1550 = vunpack.c.l.b16 %v522
        %v1551 = vunpack.c.h.b16 %v522
        %v1552 = vunpack.c.l.b16 %v523
        %v1553 = vunpack.c.h.b16 %v523
        %v1554 = vunpack.c.l.b16 %v524
        %v1555 = vunpack.c.h.b16 %v524
        %v1556 = vunpack.c.l.b16 %v525
        %v1557 = vunpack.c.h.b16 %v525
        %v1558 = vunpack.c.l.b16 %v526
        %v1559 = vunpack.c.h.b16 %v526
        %v1560 = vunpack.c.l.b16 %v527
        %v1561 = vunpack.c.h.b16 %v527
        %v1562 = vunpack.c.l.b16 %v528
        %v1563 = vunpack.c.h.b16 %v528
        %v1564 = vunpack.c.l.b16 %v529
        %v1565 = vunpack.c.h.b16 %v529
        %v1566 = vunpack.c.l.b16 %v530
        %v1567 = vunpack.c.h.b16 %v530
        %v1568 = vunpack.c.l.b16 %v531
        %v1569 = vunpack.c.h.b16 %v531
        %v1570 = vunpack.c.l.b16 %v532
        %v1571 = vunpack.c.h.b16 %v532
        %v1572 = vunpack.c.l.b16 %v533
        %v1573 = vunpack.c.h.b16 %v533
        %v1574 = vunpack.c.l.b16 %v534
        %v1575 = vunpack.c.h.b16 %v534
        %v1576 = vunpack.c.l.b16 %v535
        %v1577 = vunpack.c.h.b16 %v535
        %v1578 = vunpack.c.l.b16 %v536
        %v1579 = vunpack.c.h.b16 %v536
        %v1580 = vunpack.c.l.b16 %v537
        %v1581 = vunpack.c.h.b16 %v537
        %v1582 = vunpack.c.l.b16 %v538
        %v1583 = vunpack.c.h.b16 %v538
        %v1584 = vunpack.c.l.b16 %v539
        %v1585 = vunpack.c.h.b16 %v539
        %v1586 = vunpack.c.l.b16 %v540
        %v1587 = vunpack.c.h.b16 %v540
        %v1588 = vunpack.c.l.b16 %v541
        %v1589 = vunpack.c.h.b16 %v541
        %v1590 = vunpack.c.l.b16 %v542
        %v1591 = vunpack.c.h.b16 %v542
        %v1592 = vunpack.c.l.b16 %v543
        %v1593 = vunpack.c.h.b16 %v543
        %v1594 = vunpack.c.l.b16 %v544
        %v1595 = vunpack.c.h.b16 %v544
        %v1596 = vunpack.c.l.b16 %v545
        %v1597 = vunpack.c.h.b16 %v545
        %v1598 = vunpack.c.l.b16 %v546
        %v1599 = vunpack.c.h.b16 %v546
        %v1600 = vunpack.c.l.b16 %v547
        %v1601 = vunpack.c.h.b16 %v547
        %v1602 = vunpack.c.l.b16 %v548
        %v1603 = vunpack.c.h.b16 %v548
        %v1604 = vunpack.c.l.b16 %v549
        %v1605 = vunpack.c.h.b16 %v549
        %v1606 = vunpack.c.l.b16 %v550
        %v1607 = vunpack.c.h.b16 %v550
        %v1608 = vunpack.c.l.b16 %v551
        %v1609 = vunpack.c.h.b16 %v551
        %v1610 = vunpack.c.l.b16 %v552
        %v1611 = vunpack.c.h.b16 %v552
        %v1612 = vunpack.c.l.b16 %v553
        %v1613 = vunpack.c.h.b16 %v553
        %v1614 = vunpack.c.l.b16 %v554
        %v1615 = vunpack.c.h.b16 %v554
        %v1616 = vunpack.c.l.b16 %v555
        %v1617 = vunpack.c.h.b16 %v555
        %v1618 = vunpack.c.l.b16 %v556
        %v1619 = vunpack.c.h.b16 %v556
        %v1620 = vunpack.c.l.b16 %v557
        %v1621 = vunpack.c.h.b16 %v557
        %v1622 = vunpack.c.l.b16 %v558
        %v1623 = vunpack.c.h.b16 %v558
        %v1624 = vunpack.c.l.b16 %v559
        %v1625 = vunpack.c.h.b16 %v559
        %v1626 = vunpack.c.l.b16 %v560
        %v1627 = vunpack.c.h.b16 %v560
        %v1628 = vunpack.c.l.b16 %v561
        %v1629 = vunpack.c.h.b16 %v561
        %v1630 = vunpack.c.l.b16 %v562
        %v1631 = vunpack.c.h.b16 %v562
        %v1632 = vunpack.c.l.b16 %v563
        %v1633 = vunpack.c.h.b16 %v563
        %v1634 = vunpack.c.l.b16 %v564
        %v1635 = vunpack.c.h.b16 %v564
        %v1636 = vunpack.c.l.b16 %v565
        %v1637 = vunpack.c.h.b16 %v565
        %v1638 = vunpack.c.l.b16 %v566
        %v1639 = vunpack.c.h.b16 %v566
        %v1640 = vunpack.c.l.b16 %v567
        %v1641 = vunpack.c.h.b16 %v567
        %v1642 = vunpack.c.l.b16 %v568
        %v1643 = vunpack.c.h.b16 %v568
        %v1644 = vunpack.c.l.b16 %v569
        %v1645 = vunpack.c.h.b16 %v569
        %v1646 = vunpack.c.l.b16 %v570
        %v1647 = vunpack.c.h.b16 %v570
        %v1648 = vunpack.c.l.b16 %v571
        %v1649 = vunpack.c.h.b16 %v571
        %v1650 = vunpack.c.l.b16 %v572
        %v1651 = vunpack.c.h.b16 %v572
        %v1652 = vpack.c.b16 %v1124, %v1108
        %v1653 = vpack.c.b16 %v1125, %v1109
        %v1654 = vpack.c.b16 %v1126, %v1110
        %v1655 = vpack.c.b16 %v1127, %v1111
        %v1656 = vpack.c.b16 %v1128, %v1112
        %v1657 = vpack.c.b16 %v1129, %v1113
        %v1658 = vpack.c.b16 %v1130, %v1114
        %v1659 = vpack.c.b16 %v1131, %v1115
        %v1660 = vpack.c.b16 %v1132, %v1116
        %v1661 = vpack.c.b16 %v1133, %v1117
        %v1662 = vpack.c.b16 %v1134, %v1118
        %v1663 = vpack.c.b16 %v1135, %v1119
        %v1664 = vpack.c.b16 %v1136, %v1120
        %v1665 = vpack.c.b16 %v1137, %v1121
        %v1666 = vpack.c.b16 %v1138, %v1122
        %v1667 = vpack.c.b16 %v1139, %v1123
        %v1668 = vpack.c.b16 %v1156, %v1140
        %v1669 = vpack.c.b16 %v1157, %v1141
        %v1670 = vpack.c.b16 %v1158, %v1142
        %v1671 = vpack.c.b16 %v1159, %v1143
        %v1672 = vpack.c.b16 %v1160, %v1144
        %v1673 = vpack.c.b16 %v1161, %v1145
        %v1674 = vpack.c.b16 %v1162, %v1146
        %v1675 = vpack.c.b16 %v1163, %v1147
        %v1676 = vpack.c.b16 %v1164, %v1148
        %v1677 = vpack.c.b16 %v1165, %v1149
        %v1678 = vpack.c.b16 %v1166, %v1150
        %v1679 = vpack.c.b16 %v1167, %v1151
        %v1680 = vpack.c.b16 %v1168, %v1152
        %v1681 = vpack.c.b16 %v1169, %v1153
        %v1682 = vpack.c.b16 %v1170, %v1154
        %v1683 = vpack.c.b16 %v1171, %v1155
        %v1684 = vpack.c.b16 %v1188, %v1172
        %v1685 = vpack.c.b16 %v1189, %v1173
        %v1686 = vpack.c.b16 %v1190, %v1174
        %v1687 = vpack.c.b16 %v1191, %v1175
        %v1688 = vpack.c.b16 %v1192, %v1176
        %v1689 = vpack.c.b16 %v1193, %v1177
        %v1690 = vpack.c.b16 %v1194, %v1178
        %v1691 = vpack.c.b16 %v1195, %v1179
        %v1692 = vpack.c.b16 %v1196, %v1180
        %v1693 = vpack.c.b16 %v1197, %v1181
        %v1694 = vpack.c.b16 %v1198, %v1182
        %v1695 = vpack.c.b16 %v1199, %v1183
        %v1696 = vpack.c.b16 %v1200, %v1184
        %v1697 = vpack.c.b16 %v1201, %v1185
        %v1698 = vpack.c.b16 %v1202, %v1186
        %v1699 = vpack.c.b16 %v1203, %v1187
        %v1700 = vpack.c.b16 %v1220, %v1204
        %v1701 = vpack.c.b16 %v1221, %v1205
        %v1702 = vpack.c.b16 %v1222, %v1206
        %v1703 = vpack.c.b16 %v1223, %v1207
        %v1704 = vpack.c.b16 %v1224, %v1208
        %v1705 = vpack.c.b16 %v1225, %v1209
        %v1706 = vpack.c.b16 %v1226, %v1210
        %v1707 = vpack.c.b16 %v1227, %v1211
        %v1708 = vpack.c.b16 %v1228, %v1212
        %v1709 = vpack.c.b16 %v1229, %v1213
        %v1710 = vpack.c.b16 %v1230, %v1214
        %v1711 = vpack.c.b16 %v1231, %v1215
        %v1712 = vpack.c.b16 %v1232, %v1216
        %v1713 = vpack.c.b16 %v1233, %v1217
        %v1714 = vpack.c.b16 %v1234, %v1218
        %v1715 = vpack.c.b16 %v1235, %v1219
        %v1716 = vpack.c.b16 %v1252, %v1236
        %v1717 = vpack.c.b16 %v1253, %v1237
        %v1718 = vpack.c.b16 %v1254, %v1238
        %v1719 = vpack.c.b16 %v1255, %v1239
        %v1720 = vpack.c.b16 %v1256, %v1240
        %v1721 = vpack.c.b16 %v1257, %v1241
        %v1722 = vpack.c.b16 %v1258, %v1242
        %v1723 = vpack.c.b16 %v1259, %v1243
        %v1724 = vpack.c.b16 %v1260, %v1244
        %v1725 = vpack.c.b16 %v1261, %v1245
        %v1726 = vpack.c.b16 %v1262, %v1246
        %v1727 = vpack.c.b16 %v1263, %v1247
        %v1728 = vpack.c.b16 %v1264, %v1248
        %v1729 = vpack.c.b16 %v1265, %v1249
        %v1730 = vpack.c.b16 %v1266, %v1250
        %v1731 = vpack.c.b16 %v1267, %v1251
        %v1732 = vpack.c.b16 %v1284, %v1268
        %v1733 = vpack.c.b16 %v1285, %v1269
        %v1734 = vpack.c.b16 %v1286, %v1270
        %v1735 = vpack.c.b16 %v1287, %v1271
        %v1736 = vpack.c.b16 %v1288, %v1272
        %v1737 = vpack.c.b16 %v1289, %v1273
        %v1738 = vpack.c.b16 %v1290, %v1274
        %v1739 = vpack.c.b16 %v1291, %v1275
        %v1740 = vpack.c.b16 %v1292, %v1276
        %v1741 = vpack.c.b16 %v1293, %v1277
        %v1742 = vpack.c.b16 %v1294, %v1278
        %v1743 = vpack.c.b16 %v1295, %v1279
        %v1744 = vpack.c.b16 %v1296, %v1280
        %v1745 = vpack.c.b16 %v1297, %v1281
        %v1746 = vpack.c.b16 %v1298, %v1282
        %v1747 = vpack.c.b16 %v1299, %v1283
        %v1748 = vpack.c.b16 %v1316, %v1300
        %v1749 = vpack.c.b16 %v1317, %v1301
        %v1750 = vpack.c.b16 %v1318, %v1302
        %v1751 = vpack.c.b16 %v1319, %v1303
        %v1752 = vpack.c.b16 %v1320, %v1304
        %v1753 = vpack.c.b16 %v1321, %v1305
        %v1754 = vpack.c.b16 %v1322, %v1306
        %v1755 = vpack.c.b16 %v1323, %v1307
        %v1756 = vpack.c.b16 %v1324, %v1308
        %v1757 = vpack.c.b16 %v1325, %v1309
        %v1758 = vpack.c.b16 %v1326, %v1310
        %v1759 = vpack.c.b16 %v1327, %v1311
        %v1760 = vpack.c.b16 %v1328, %v1312
        %v1761 = vpack.c.b16 %v1329, %v1313
        %v1762 = vpack.c.b16 %v1330, %v1314
        %v1763 = vpack.c.b16 %v1331, %v1315
        %v1764 = vpack.c.b16 %v1348, %v1332
        %v1765 = vpack.c.b16 %v1349, %v1333
        %v1766 = vpack.c.b16 %v1350, %v1334
        %v1767 = vpack.c.b16 %v1351, %v1335
        %v1768 = vpack.c.b16 %v1352, %v1336
        %v1769 = vpack.c.b16 %v1353, %v1337
        %v1770 = vpack.c.b16 %v1354, %v1338
        %v1771 = vpack.c.b16 %v1355, %v1339
        %v1772 = vpack.c.b16 %v1356, %v1340
        %v1773 = vpack.c.b16 %v1357, %v1341
        %v1774 = vpack.c.b16 %v1358, %v1342
        %v1775 = vpack.c.b16 %v1359, %v1343
        %v1776 = vpack.c.b16 %v1360, %v1344
        %v1777 = vpack.c.b16 %v1361, %v1345
        %v1778 = vpack.c.b16 %v1362, %v1346
        %v1779 = vpack.c.b16 %v1363, %v1347
        %v1780 = vpack.c.b16 %v1380, %v1364
        %v1781 = vpack.c.b16 %v1381, %v1365
        %v1782 = vpack.c.b16 %v1382, %v1366
        %v1783 = vpack.c.b16 %v1383, %v1367
        %v1784 = vpack.c.b16 %v1384, %v1368
        %v1785 = vpack.c.b16 %v1385, %v1369
        %v1786 = vpack.c.b16 %v1386, %v1370
        %v1787 = vpack.c.b16 %v1387, %v1371
        %v1788 = vpack.c.b16 %v1388, %v1372
        %v1789 = vpack.c.b16 %v1389, %v1373
        %v1790 = vpack.c.b16 %v1390, %v1374
        %v1791 = vpack.c.b16 %v1391, %v1375
        %v1792 = vpack.c.b16 %v1392, %v1376
        %v1793 = vpack.c.b16 %v1393, %v1377
        %v1794 = vpack.c.b16 %v1394, %v1378
        %v1795 = vpack.c.b16 %v1395, %v1379
        %v1796 = vpack.c.b16 %v1412, %v1396
        %v1797 = vpack.c.b16 %v1413, %v1397
        %v1798 = vpack.c.b16 %v1414, %v1398
        %v1799 = vpack.c.b16 %v1415, %v1399
        %v1800 = vpack.c.b16 %v1416, %v1400
        %v1801 = vpack.c.b16 %v1417, %v1401
        %v1802 = vpack.c.b16 %v1418, %v1402
        %v1803 = vpack.c.b16 %v1419, %v1403
        %v1804 = vpack.c.b16 %v1420, %v1404
        %v1805 = vpack.c.b16 %v1421, %v1405
        %v1806 = vpack.c.b16 %v1422, %v1406
        %v1807 = vpack.c.b16 %v1423, %v1407
        %v1808 = vpack.c.b16 %v1424, %v1408
        %v1809 = vpack.c.b16 %v1425, %v1409
        %v1810 = vpack.c.b16 %v1426, %v1410
        %v1811 = vpack.c.b16 %v1427, %v1411
        %v1812 = vpack.c.b16 %v1444, %v1428
        %v1813 = vpack.c.b16 %v1445, %v1429
        %v1814 = vpack.c.b16 %v1446, %v1430
        %v1815 = vpack.c.b16 %v1447, %v1431
        %v1816 = vpack.c.b16 %v1448, %v1432
        %v1817 = vpack.c.b16 %v1449, %v1433
        %v1818 = vpack.c.b16 %v1450, %v1434
        %v1819 = vpack.c.b16 %v1451, %v1435
        %v1820 = vpack.c.b16 %v1452, %v1436
        %v1821 = vpack.c.b16 %v1453, %v1437
        %v1822 = vpack.c.b16 %v1454, %v1438
        %v1823 = vpack.c.b16 %v1455, %v1439
        %v1824 = vpack.c.b16 %v1456, %v1440
        %v1825 = vpack.c.b16 %v1457, %v1441
        %v1826 = vpack.c.b16 %v1458, %v1442
        %v1827 = vpack.c.b16 %v1459, %v1443
        %v1828 = vpack.c.b16 %v1476, %v1460
        %v1829 = vpack.c.b16 %v1477, %v1461
        %v1830 = vpack.c.b16 %v1478, %v1462
        %v1831 = vpack.c.b16 %v1479, %v1463
        %v1832 = vpack.c.b16 %v1480, %v1464
        %v1833 = vpack.c.b16 %v1481, %v1465
        %v1834 = vpack.c.b16 %v1482, %v1466
        %v1835 = vpack.c.b16 %v1483, %v1467
        %v1836 = vpack.c.b16 %v1484, %v1468
        %v1837 = vpack.c.b16 %v1485, %v1469
        %v1838 = vpack.c.b16 %v1486, %v1470
        %v1839 = vpack.c.b16 %v1487, %v1471
        %v1840 = vpack.c.b16 %v1488, %v1472
        %v1841 = vpack.c.b16 %v1489, %v1473
        %v1842 = vpack.c.b16 %v1490, %v1474
        %v1843 = vpack.c.b16 %v1491, %v1475
        %v1844 = vpack.c.b16 %v1508, %v1492
        %v1845 = vpack.c.b16 %v1509, %v1493
        %v1846 = vpack.c.b16 %v1510, %v1494
        %v1847 = vpack.c.b16 %v1511, %v1495
        %v1848 = vpack.c.b16 %v1512, %v1496
        %v1849 = vpack.c.b16 %v1513, %v1497
        %v1850 = vpack.c.b16 %v1514, %v1498
        %v1851 = vpack.c.b16 %v1515, %v1499
        %v1852 = vpack.c.b16 %v1516, %v1500
        %v1853 = vpack.c.b16 %v1517, %v1501
        %v1854 = vpack.c.b16 %v1518, %v1502
        %v1855 = vpack.c.b16 %v1519, %v1503
        %v1856 = vpack.c.b16 %v1520, %v1504
        %v1857 = vpack.c.b16 %v1521, %v1505
        %v1858 = vpack.c.b16 %v1522, %v1506
        %v1859 = vpack.c.b16 %v1523, %v1507
        %v1860 = vpack.c.b16 %v1540, %v1524
        %v1861 = vpack.c.b16 %v1541, %v1525
        %v1862 = vpack.c.b16 %v1542, %v1526
        %v1863 = vpack.c.b16 %v1543, %v1527
        %v1864 = vpack.c.b16 %v1544, %v1528
        %v1865 = vpack.c.b16 %v1545, %v1529
        %v1866 = vpack.c.b16 %v1546, %v1530
        %v1867 = vpack.c.b16 %v1547, %v1531
        %v1868 = vpack.c.b16 %v1548, %v1532
        %v1869 = vpack.c.b16 %v1549, %v1533
        %v1870 = vpack.c.b16 %v1550, %v1534
        %v1871 = vpack.c.b16 %v1551, %v1535
        %v1872 = vpack.c.b16 %v1552, %v1536
        %v1873 = vpack.c.b16 %v1553, %v1537
        %v1874 = vpack.c.b16 %v1554, %v1538
        %v1875 = vpack.c.b16 %v1555, %v1539
        %v1876 = vpack.c.b16 %v1572, %v1556
        %v1877 = vpack.c.b16 %v1573, %v1557
        %v1878 = vpack.c.b16 %v1574, %v1558
        %v1879 = vpack.c.b16 %v1575, %v1559
        %v1880 = vpack.c.b16 %v1576, %v1560
        %v1881 = vpack.c.b16 %v1577, %v1561
        %v1882 = vpack.c.b16 %v1578, %v1562
        %v1883 = vpack.c.b16 %v1579, %v1563
        %v1884 = vpack.c.b16 %v1580, %v1564
        %v1885 = vpack.c.b16 %v1581, %v1565
        %v1886 = vpack.c.b16 %v1582, %v1566
        %v1887 = vpack.c.b16 %v1583, %v1567
        %v1888 = vpack.c.b16 %v1584, %v1568
        %v1889 = vpack.c.b16 %v1585, %v1569
        %v1890 = vpack.c.b16 %v1586, %v1570
        %v1891 = vpack.c.b16 %v1587, %v1571
        %v1892 = vpack.c.b16 %v1604, %v1588
        %v1893 = vpack.c.b16 %v1605, %v1589
        %v1894 = vpack.c.b16 %v1606, %v1590
        %v1895 = vpack.c.b16 %v1607, %v1591
        %v1896 = vpack.c.b16 %v1608, %v1592
        %v1897 = vpack.c.b16 %v1609, %v1593
        %v1898 = vpack.c.b16 %v1610, %v1594
        %v1899 = vpack.c.b16 %v1611, %v1595
        %v1900 = vpack.c.b16 %v1612, %v1596
        %v1901 = vpack.c.b16 %v1613, %v1597
        %v1902 = vpack.c.b16 %v1614, %v1598
        %v1903 = vpack.c.b16 %v1615, %v1599
        %v1904 = vpack.c.b16 %v1616, %v1600
        %v1905 = vpack.c.b16 %v1617, %v1601
        %v1906 = vpack.c.b16 %v1618, %v1602
        %v1907 = vpack.c.b16 %v1619, %v1603
        %v1908 = vpack.c.b16 %v1636, %v1620
        %v1909 = vpack.c.b16 %v1637, %v1621
        %v1910 = vpack.c.b16 %v1638, %v1622
        %v1911 = vpack.c.b16 %v1639, %v1623
        %v1912 = vpack.c.b16 %v1640, %v1624
        %v1913 = vpack.c.b16 %v1641, %v1625
        %v1914 = vpack.c.b16 %v1642, %v1626
        %v1915 = vpack.c.b16 %v1643, %v1627
        %v1916 = vpack.c.b16 %v1644, %v1628
        %v1917 = vpack.c.b16 %v1645, %v1629
        %v1918 = vpack.c.b16 %v1646, %v1630
        %v1919 = vpack.c.b16 %v1647, %v1631
        %v1920 = vpack.c.b16 %v1648, %v1632
        %v1921 = vpack.c.b16 %v1649, %v1633
        %v1922 = vpack.c.b16 %v1650, %v1634
        %v1923 = vpack.c.b16 %v1651, %v1635
        %v2452 = vunpack.c.l.b16 %v573
        %v2453 = vunpack.c.l.b16 %v574
        %v2454 = vunpack.c.l.b16 %v575
        %v2455 = vunpack.c.l.b16 %v576
        %v2456 = vunpack.c.l.b16 %v577
        %v2457 = vunpack.c.l.b16 %v578
        %v2458 = vunpack.c.l.b16 %v579
        %v2459 = vunpack.c.l.b16 %v580
        %v2460 = vunpack.c.l.b16 %v581
        %v2461 = vunpack.c.l.b16 %v582
        %v2462 = vunpack.c.l.b16 %v583
        %v2463 = vunpack.c.l.b16 %v584
        %v2464 = vunpack.c.l.b16 %v585
        %v2465 = vunpack.c.l.b16 %v586
        %v2466 = vunpack.c.l.b16 %v587
        %v2467 = vunpack.c.l.b16 %v588
        %v2468 = vunpack.c.l.b16 %v589
        %v2469 = vunpack.c.l.b16 %v590
        %v2470 = vunpack.c.l.b16 %v591
        %v2471 = vunpack.c.l.b16 %v592
        %v2472 = vunpack.c.l.b16 %v593
        %v2473 = vunpack.c.l.b16 %v594
        %v2474 = vunpack.c.l.b16 %v595
        %v2475 = vunpack.c.l.b16 %v596
        %v2476 = vunpack.c.l.b16 %v597
        %v2477 = vunpack.c.l.b16 %v598
        %v2478 = vunpack.c.l.b16 %v599
        %v2479 = vunpack.c.l.b16 %v600
        %v2480 = vunpack.c.l.b16 %v601
        %v2481 = vunpack.c.l.b16 %v602
        %v2482 = vunpack.c.l.b16 %v603
        %v2483 = vunpack.c.l.b16 %v604
        %v2484 = vunpack.c.l.b16 %v605
        %v2485 = vunpack.c.l.b16 %v606
        %v2486 = vunpack.c.l.b16 %v607
        %v2487 = vunpack.c.l.b16 %v608
        %v2488 = vunpack.c.l.b16 %v609
        %v2489 = vunpack.c.l.b16 %v610
        %v2490 = vunpack.c.l.b16 %v611
        %v2491 = vunpack.c.l.b16 %v612
        %v2492 = vunpack.c.l.b16 %v613
        %v2493 = vunpack.c.l.b16 %v614
        %v2494 = vunpack.c.l.b16 %v615
        %v2495 = vunpack.c.l.b16 %v616
        %v2496 = vunpack.c.l.b16 %v617
        %v2497 = vunpack.c.l.b16 %v618
        %v2498 = vunpack.c.l.b16 %v619
        %v2499 = vunpack.c.l.b16 %v620
        %v2500 = vunpack.c.l.b16 %v621
        %v2501 = vunpack.c.l.b16 %v622
        %v2502 = vunpack.c.l.b16 %v623
        %v2503 = vunpack.c.l.b16 %v624
        %v2504 = vunpack.c.l.b16 %v625
        %v2505 = vunpack.c.l.b16 %v626
        %v2506 = vunpack.c.l.b16 %v627
        %v2507 = vunpack.c.l.b16 %v628
        %v2508 = vunpack.c.l.b16 %v629
        %v2509 = vunpack.c.l.b16 %v630
        %v2510 = vunpack.c.l.b16 %v631
        %v2511 = vunpack.c.l.b16 %v632
        %v2512 = vunpack.c.l.b16 %v633
        %v2513 = vunpack.c.l.b16 %v634
        %v2514 = vunpack.c.l.b16 %v635
        %v2515 = vunpack.c.l.b16 %v636
        %v2516 = vunpack.c.l.b16 %v637
        %v2517 = vunpack.c.l.b16 %v638
        %v2518 = vunpack.c.l.b16 %v639
        %v2519 = vunpack.c.l.b16 %v640
        %v2520 = vunpack.c.l.b16 %v641
        %v2521 = vunpack.c.l.b16 %v642
        %v2522 = vunpack.c.l.b16 %v643
        %v2523 = vunpack.c.l.b16 %v644
        %v2524 = vunpack.c.l.b16 %v645
        %v2525 = vunpack.c.l.b16 %v646
        %v2526 = vunpack.c.l.b16 %v647
        %v2527 = vunpack.c.l.b16 %v648
        %v2528 = vunpack.c.l.b16 %v649
        %v2529 = vunpack.c.l.b16 %v650
        %v2530 = vunpack.c.l.b16 %v651
        %v2531 = vunpack.c.l.b16 %v652
        %v2532 = vunpack.c.l.b16 %v653
        %v2533 = vunpack.c.l.b16 %v654
        %v2534 = vunpack.c.l.b16 %v655
        %v2535 = vunpack.c.l.b16 %v656
        %v2536 = vunpack.c.l.b16 %v657
        %v2537 = vunpack.c.l.b16 %v658
        %v2538 = vunpack.c.l.b16 %v659
        %v2539 = vunpack.c.l.b16 %v660
        %v2540 = vunpack.c.l.b16 %v661
        %v2541 = vunpack.c.l.b16 %v662
        %v2542 = vunpack.c.l.b16 %v663
        %v2543 = vunpack.c.l.b16 %v664
        %v2544 = vunpack.c.l.b16 %v665
        %v2545 = vunpack.c.l.b16 %v666
        %v2546 = vunpack.c.l.b16 %v667
        %v2547 = vunpack.c.l.b16 %v668
        %v2548 = vunpack.c.l.b16 %v669
        %v2549 = vunpack.c.l.b16 %v670
        %v2550 = vunpack.c.l.b16 %v671
        %v2551 = vunpack.c.l.b16 %v672
        %v2552 = vunpack.c.l.b16 %v673
        %v2553 = vunpack.c.l.b16 %v674
        %v2554 = vunpack.c.l.b16 %v675
        %v2555 = vunpack.c.l.b16 %v676
        %v2556 = vunpack.c.l.b16 %v677
        %v2557 = vunpack.c.l.b16 %v678
        %v2558 = vunpack.c.l.b16 %v679
        %v2559 = vunpack.c.l.b16 %v680
        %v2560 = vunpack.c.l.b16 %v681
        %v2561 = vunpack.c.l.b16 %v682
        %v2562 = vunpack.c.l.b16 %v683
        %v2563 = vunpack.c.l.b16 %v684
        %v2564 = vunpack.c.l.b16 %v685
        %v2565 = vunpack.c.l.b16 %v686
        %v2566 = vunpack.c.l.b16 %v687
        %v2567 = vunpack.c.l.b16 %v688
        %v2568 = vunpack.c.l.b16 %v689
        %v2569 = vunpack.c.l.b16 %v690
        %v2570 = vunpack.c.l.b16 %v691
        %v2571 = vunpack.c.l.b16 %v692
        %v2572 = vunpack.c.l.b16 %v693
        %v2573 = vunpack.c.l.b16 %v694
        %v2574 = vunpack.c.l.b16 %v695
        %v2575 = vunpack.c.l.b16 %v696
        %v2576 = vunpack.c.l.b16 %v697
        %v2577 = vunpack.c.l.b16 %v698
        %v2578 = vunpack.c.l.b16 %v699
        %v2579 = vunpack.c.l.b16 %v700
        %v2580 = vunpack.c.l.b16 %v701
        %v2581 = vunpack.c.l.b16 %v702
        %v2582 = vunpack.c.l.b16 %v703
        %v2583 = vunpack.c.l.b16 %v704
        %v2584 = vunpack.c.l.b16 %v705
        %v2585 = vunpack.c.l.b16 %v706
        %v2586 = vunpack.c.l.b16 %v707
        %v2587 = vunpack.c.l.b16 %v708
        %v2588 = vunpack.c.l.b16 %v709
        %v2589 = vunpack.c.l.b16 %v710
        %v2590 = vunpack.c.l.b16 %v711
        %v2591 = vunpack.c.l.b16 %v712
        %v2592 = vunpack.c.l.b16 %v713
        %v2593 = vunpack.c.l.b16 %v714
        %v2594 = vunpack.c.l.b16 %v715
        %v2595 = vunpack.c.l.b16 %v716
        %v2596 = vunpack.c.l.b16 %v717
        %v2597 = vunpack.c.l.b16 %v718
        %v2598 = vunpack.c.l.b16 %v719
        %v2599 = vunpack.c.l.b16 %v720
        %v2600 = vunpack.c.l.b16 %v721
        %v2601 = vunpack.c.l.b16 %v722
        %v2602 = vunpack.c.l.b16 %v723
        %v2603 = vunpack.c.l.b16 %v724
        %v2604 = vunpack.c.l.b16 %v725
        %v2605 = vunpack.c.l.b16 %v726
        %v2606 = vunpack.c.l.b16 %v727
        %v2607 = vunpack.c.l.b16 %v728
        %v2608 = vunpack.c.l.b16 %v729
        %v2609 = vunpack.c.l.b16 %v730
        %v2610 = vunpack.c.l.b16 %v731
        %v2611 = vunpack.c.l.b16 %v732
        %v2612 = vunpack.c.l.b16 %v733
        %v2613 = vunpack.c.l.b16 %v734
        %v2614 = vunpack.c.l.b16 %v735
        %v2615 = vunpack.c.l.b16 %v736
        %v2616 = vunpack.c.l.b16 %v737
        %v2617 = vunpack.c.l.b16 %v738
        %v2618 = vunpack.c.l.b16 %v739
        %v2619 = vunpack.c.l.b16 %v740
        %v2620 = vunpack.c.l.b16 %v741
        %v2621 = vunpack.c.l.b16 %v742
        %v2622 = vunpack.c.l.b16 %v743
        %v2623 = vunpack.c.l.b16 %v744
        %v2624 = vunpack.c.l.b16 %v745
        %v2625 = vunpack.c.l.b16 %v746
        %v2626 = vunpack.c.l.b16 %v747
        %v2627 = vunpack.c.l.b16 %v748
        %v2628 = vunpack.c.l.b16 %v749
        %v2629 = vunpack.c.l.b16 %v750
        %v2630 = vunpack.c.l.b16 %v751
        %v2631 = vunpack.c.l.b16 %v752
        %v2632 = vunpack.c.l.b16 %v753
        %v2633 = vunpack.c.l.b16 %v754
        %v2634 = vunpack.c.l.b16 %v755
        %v2635 = vunpack.c.l.b16 %v756
        %v2636 = vunpack.c.l.b16 %v757
        %v2637 = vunpack.c.l.b16 %v758
        %v2638 = vunpack.c.l.b16 %v759
        %v2639 = vunpack.c.l.b16 %v760
        %v2640 = vunpack.c.l.b16 %v761
        %v2641 = vunpack.c.l.b16 %v762
        %v2642 = vunpack.c.l.b16 %v763
        %v2643 = vunpack.c.l.b16 %v764
        %v2644 = vunpack.c.l.b16 %v765
        %v2645 = vunpack.c.l.b16 %v766
        %v2646 = vunpack.c.l.b16 %v767
        %v2647 = vunpack.c.l.b16 %v768
        %v2648 = vunpack.c.l.b16 %v769
        %v2649 = vunpack.c.l.b16 %v770
        %v2650 = vunpack.c.l.b16 %v771
        %v2651 = vunpack.c.l.b16 %v772
        %v2652 = vunpack.c.l.b16 %v773
        %v2653 = vunpack.c.l.b16 %v774
        %v2654 = vunpack.c.l.b16 %v775
        %v2655 = vunpack.c.l.b16 %v776
        %v2656 = vunpack.c.l.b16 %v777
        %v2657 = vunpack.c.l.b16 %v778
        %v2658 = vunpack.c.l.b16 %v779
        %v2659 = vunpack.c.l.b16 %v780
        %v2660 = vunpack.c.l.b16 %v781
        %v2661 = vunpack.c.l.b16 %v782
        %v2662 = vunpack.c.l.b16 %v783
        %v2663 = vunpack.c.l.b16 %v784
        %v2664 = vunpack.c.l.b16 %v785
        %v2665 = vunpack.c.l.b16 %v786
        %v2666 = vunpack.c.l.b16 %v787
        %v2667 = vunpack.c.l.b16 %v788
        %v2668 = vunpack.c.l.b16 %v789
        %v2669 = vunpack.c.l.b16 %v790
        %v2670 = vunpack.c.l.b16 %v791
        %v2671 = vunpack.c.l.b16 %v792
        %v2672 = vunpack.c.l.b16 %v793
        %v2673 = vunpack.c.l.b16 %v794
        %v2674 = vunpack.c.l.b16 %v795
        %v2675 = vunpack.c.l.b16 %v796
        %v2676 = vunpack.c.l.b16 %v797
        %v2677 = vunpack.c.l.b16 %v798
        %v2678 = vunpack.c.l.b16 %v799
        %v2679 = vunpack.c.l.b16 %v800
        %v2680 = vunpack.c.l.b16 %v801
        %v2681 = vunpack.c.l.b16 %v802
        %v2682 = vunpack.c.l.b16 %v803
        %v2683 = vunpack.c.l.b16 %v804
        %v2684 = vunpack.c.l.b16 %v805
        %v2685 = vunpack.c.l.b16 %v806
        %v2686 = vunpack.c.l.b16 %v807
        %v2687 = vunpack.c.l.b16 %v808
        %v2688 = vunpack.c.l.b16 %v809
        %v2689 = vunpack.c.l.b16 %v810
        %v2690 = vunpack.c.l.b16 %v811
        %v2691 = vunpack.c.l.b16 %v812
        %v2692 = vunpack.c.l.b16 %v813
        %v2693 = vunpack.c.l.b16 %v814
        %v2694 = vunpack.c.l.b16 %v815
        %v2695 = vunpack.c.l.b16 %v816
        %v2696 = vunpack.c.l.b16 %v817
        %v2697 = vunpack.c.l.b16 %v818
        %v2698 = vunpack.c.l.b16 %v819
        %v2699 = vunpack.c.l.b16 %v820
        %v2700 = vunpack.c.l.b16 %v821
        %v2701 = vunpack.c.l.b16 %v822
        %v2702 = vunpack.c.l.b16 %v823
        %v2703 = vunpack.c.l.b16 %v824
        %v2704 = vunpack.c.l.b16 %v825
        %v2705 = vunpack.c.l.b16 %v826
        %v2706 = vunpack.c.l.b16 %v827
        %v2707 = vunpack.c.l.b16 %v828
        %v2708 = vpack.c.b16 %v2453, %v2452
        %v2709 = vpack.c.b16 %v2455, %v2454
        %v2710 = vpack.c.b16 %v2457, %v2456
        %v2711 = vpack.c.b16 %v2459, %v2458
        %v2712 = vpack.c.b16 %v2461, %v2460
        %v2713 = vpack.c.b16 %v2463, %v2462
        %v2714 = vpack.c.b16 %v2465, %v2464
        %v2715 = vpack.c.b16 %v2467, %v2466
        %v2716 = vpack.c.b16 %v2469, %v2468
        %v2717 = vpack.c.b16 %v2471, %v2470
        %v2718 = vpack.c.b16 %v2473, %v2472
        %v2719 = vpack.c.b16 %v2475, %v2474
        %v2720 = vpack.c.b16 %v2477, %v2476
        %v2721 = vpack.c.b16 %v2479, %v2478
        %v2722 = vpack.c.b16 %v2481, %v2480
        %v2723 = vpack.c.b16 %v2483, %v2482
        %v2724 = vpack.c.b16 %v2485, %v2484
        %v2725 = vpack.c.b16 %v2487, %v2486
        %v2726 = vpack.c.b16 %v2489, %v2488
        %v2727 = vpack.c.b16 %v2491, %v2490
        %v2728 = vpack.c.b16 %v2493, %v2492
        %v2729 = vpack.c.b16 %v2495, %v2494
        %v2730 = vpack.c.b16 %v2497, %v2496
        %v2731 = vpack.c.b16 %v2499, %v2498
        %v2732 = vpack.c.b16 %v2501, %v2500
        %v2733 = vpack.c.b16 %v2503, %v2502
        %v2734 = vpack.c.b16 %v2505, %v2504
        %v2735 = vpack.c.b16 %v2507, %v2506
        %v2736 = vpack.c.b16 %v2509, %v2508
        %v2737 = vpack.c.b16 %v2511, %v2510
        %v2738 = vpack.c.b16 %v2513, %v2512
        %v2739 = vpack.c.b16 %v2515, %v2514
        %v2740 = vpack.c.b16 %v2517, %v2516
        %v2741 = vpack.c.b16 %v2519, %v2518
        %v2742 = vpack.c.b16 %v2521, %v2520
        %v2743 = vpack.c.b16 %v2523, %v2522
        %v2744 = vpack.c.b16 %v2525, %v2524
        %v2745 = vpack.c.b16 %v2527, %v2526
        %v2746 = vpack.c.b16 %v2529, %v2528
        %v2747 = vpack.c.b16 %v2531, %v2530
        %v2748 = vpack.c.b16 %v2533, %v2532
        %v2749 = vpack.c.b16 %v2535, %v2534
        %v2750 = vpack.c.b16 %v2537, %v2536
        %v2751 = vpack.c.b16 %v2539, %v2538
        %v2752 = vpack.c.b16 %v2541, %v2540
        %v2753 = vpack.c.b16 %v2543, %v2542
        %v2754 = vpack.c.b16 %v2545, %v2544
        %v2755 = vpack.c.b16 %v2547, %v2546
        %v2756 = vpack.c.b16 %v2549, %v2548
        %v2757 = vpack.c.b16 %v2551, %v2550
        %v2758 = vpack.c.b16 %v2553, %v2552
        %v2759 = vpack.c.b16 %v2555, %v2554
        %v2760 = vpack.c.b16 %v2557, %v2556
        %v2761 = vpack.c.b16 %v2559, %v2558
        %v2762 = vpack.c.b16 %v2561, %v2560
        %v2763 = vpack.c.b16 %v2563, %v2562
        %v2764 = vpack.c.b16 %v2565, %v2564
        %v2765 = vpack.c.b16 %v2567, %v2566
        %v2766 = vpack.c.b16 %v2569, %v2568
        %v2767 = vpack.c.b16 %v2571, %v2570
        %v2768 = vpack.c.b16 %v2573, %v2572
        %v2769 = vpack.c.b16 %v2575, %v2574
        %v2770 = vpack.c.b16 %v2577, %v2576
        %v2771 = vpack.c.b16 %v2579, %v2578
        %v2772 = vpack.c.b16 %v2581, %v2580
        %v2773 = vpack.c.b16 %v2583, %v2582
        %v2774 = vpack.c.b16 %v2585, %v2584
        %v2775 = vpack.c.b16 %v2587, %v2586
        %v2776 = vpack.c.b16 %v2589, %v2588
        %v2777 = vpack.c.b16 %v2591, %v2590
        %v2778 = vpack.c.b16 %v2593, %v2592
        %v2779 = vpack.c.b16 %v2595, %v2594
        %v2780 = vpack.c.b16 %v2597, %v2596
        %v2781 = vpack.c.b16 %v2599, %v2598
        %v2782 = vpack.c.b16 %v2601, %v2600
        %v2783 = vpack.c.b16 %v2603, %v2602
        %v2784 = vpack.c.b16 %v2605, %v2604
        %v2785 = vpack.c.b16 %v2607, %v2606
        %v2786 = vpack.c.b16 %v2609, %v2608
        %v2787 = vpack.c.b16 %v2611, %v2610
        %v2788 = vpack.c.b16 %v2613, %v2612
        %v2789 = vpack.c.b16 %v2615, %v2614
        %v2790 = vpack.c.b16 %v2617, %v2616
        %v2791 = vpack.c.b16 %v2619, %v2618
        %v2792 = vpack.c.b16 %v2621, %v2620
        %v2793 = vpack.c.b16 %v2623, %v2622
        %v2794 = vpack.c.b16 %v2625, %v2624
        %v2795 = vpack.c.b16 %v2627, %v2626
        %v2796 = vpack.c.b16 %v2629, %v2628
        %v2797 = vpack.c.b16 %v2631, %v2630
        %v2798 = vpack.c.b16 %v2633, %v2632
        %v2799 = vpack.c.b16 %v2635, %v2634
        %v2800 = vpack.c.b16 %v2637, %v2636
        %v2801 = vpack.c.b16 %v2639, %v2638
        %v2802 = vpack.c.b16 %v2641, %v2640
        %v2803 = vpack.c.b16 %v2643, %v2642
        %v2804 = vpack.c.b16 %v2645, %v2644
        %v2805 = vpack.c.b16 %v2647, %v2646
        %v2806 = vpack.c.b16 %v2649, %v2648
        %v2807 = vpack.c.b16 %v2651, %v2650
        %v2808 = vpack.c.b16 %v2653, %v2652
        %v2809 = vpack.c.b16 %v2655, %v2654
        %v2810 = vpack.c.b16 %v2657, %v2656
        %v2811 = vpack.c.b16 %v2659, %v2658
        %v2812 = vpack.c.b16 %v2661, %v2660
        %v2813 = vpack.c.b16 %v2663, %v2662
        %v2814 = vpack.c.b16 %v2665, %v2664
        %v2815 = vpack.c.b16 %v2667, %v2666
        %v2816 = vpack.c.b16 %v2669, %v2668
        %v2817 = vpack.c.b16 %v2671, %v2670
        %v2818 = vpack.c.b16 %v2673, %v2672
        %v2819 = vpack.c.b16 %v2675, %v2674
        %v2820 = vpack.c.b16 %v2677, %v2676
        %v2821 = vpack.c.b16 %v2679, %v2678
        %v2822 = vpack.c.b16 %v2681, %v2680
        %v2823 = vpack.c.b16 %v2683, %v2682
        %v2824 = vpack.c.b16 %v2685, %v2684
        %v2825 = vpack.c.b16 %v2687, %v2686
        %v2826 = vpack.c.b16 %v2689, %v2688
        %v2827 = vpack.c.b16 %v2691, %v2690
        %v2828 = vpack.c.b16 %v2693, %v2692
        %v2829 = vpack.c.b16 %v2695, %v2694
        %v2830 = vpack.c.b16 %v2697, %v2696
        %v2831 = vpack.c.b16 %v2699, %v2698
        %v2832 = vpack.c.b16 %v2701, %v2700
        %v2833 = vpack.c.b16 %v2703, %v2702
        %v2834 = vpack.c.b16 %v2705, %v2704
        %v2835 = vpack.c.b16 %v2707, %v2706
        %2964 = vmatprep.subr.bf16.mxu0 0
        %2965 = vmatpush1.bf16.msra.mxu0 %v2708
        %2966 = vmatprep.subr.bf16.mxu0 0
        %2967 = vmatpush1.bf16.msra.mxu0 %v2709
        %2968 = vmatprep.subr.bf16.mxu0 0
        %2969 = vmatpush1.bf16.msra.mxu0 %v2710
        %2970 = vmatprep.subr.bf16.mxu0 0
        %2971 = vmatpush1.bf16.msra.mxu0 %v2711
        %2972 = vmatprep.subr.bf16.mxu0 0
        %2973 = vmatpush1.bf16.msra.mxu0 %v2712
        %2974 = vmatprep.subr.bf16.mxu0 0
        %2975 = vmatpush1.bf16.msra.mxu0 %v2713
        %2976 = vmatprep.subr.bf16.mxu0 0
        %2977 = vmatpush1.bf16.msra.mxu0 %v2714
        %2978 = vmatprep.subr.bf16.mxu0 0
        %2979 = vmatpush1.bf16.msra.mxu0 %v2715
        %2980 = vmatprep.subr.bf16.mxu0 0
        %2981 = vmatpush1.bf16.msra.mxu0 %v2716
        %2982 = vmatprep.subr.bf16.mxu0 0
        %2983 = vmatpush1.bf16.msra.mxu0 %v2717
        %2984 = vmatprep.subr.bf16.mxu0 0
        %2985 = vmatpush1.bf16.msra.mxu0 %v2718
        %2986 = vmatprep.subr.bf16.mxu0 0
        %2987 = vmatpush1.bf16.msra.mxu0 %v2719
        %2988 = vmatprep.subr.bf16.mxu0 0
        %2989 = vmatpush1.bf16.msra.mxu0 %v2720
        %2990 = vmatprep.subr.bf16.mxu0 0
        %2991 = vmatpush1.bf16.msra.mxu0 %v2721
        %2992 = vmatprep.subr.bf16.mxu0 0
        %2993 = vmatpush1.bf16.msra.mxu0 %v2722
        %2994 = vmatprep.subr.bf16.mxu0 0
        %2995 = vmatpush1.bf16.msra.mxu0 %v2723
        %2996 = vmatprep.mubr.bf16.mxu0 %v1653
        %2997 = vmatmul.mubr.bf16.gmra.mrb[0].mxu0 %v1652
        %v2998 = vpop.f32.mrb[0].mxu0
        %v2999 = vadd.f32 %v834, %v2998
        %v3000 = vpop.f32.mrb[0].mxu0
        %v3001 = vpop.f32.mrb[0].mxu0
        %v3002 = vadd.f32 %v834, %v3001
        %v3003 = vpop.f32.mrb[0].mxu0
        %3004 = vmatprep.mubr.bf16.mxu0 %v1669
        %3005 = vmatmul.mubr.bf16.gmra.mrb[0].mxu0 %v1668
        %v3006 = vpop.f32.mrb[0].mxu0
        %v3007 = vadd.f32 %v834, %v3006
        %v3008 = vpop.f32.mrb[0].mxu0
        %v3009 = vpop.f32.mrb[0].mxu0
        %v3010 = vadd.f32 %v834, %v3009
        %v3011 = vpop.f32.mrb[0].mxu0
        %3012 = vmatprep.mubr.bf16.mxu0 %v1685
        %3013 = vmatmul.mubr.bf16.gmra.mrb[0].mxu0 %v1684
        %v3014 = vpop.f32.mrb[0].mxu0
        %v3015 = vadd.f32 %v834, %v3014
        %v3016 = vpop.f32.mrb[0].mxu0
        %v3017 = vpop.f32.mrb[0].mxu0
        %v3018 = vadd.f32 %v834, %v3017
        %v3019 = vpop.f32.mrb[0].mxu0
        %3020 = vmatprep.mubr.bf16.mxu0 %v1701
        %3021 = vmatmul.mubr.bf16.gmra.mrb[0].mxu0 %v1700
        %v3022 = vpop.f32.mrb[0].mxu0
        %v3023 = vadd.f32 %v834, %v3022
        %v3024 = vpop.f32.mrb[0].mxu0
        %v3025 = vpop.f32.mrb[0].mxu0
        %v3026 = vadd.f32 %v834, %v3025
        %v3027 = vpop.f32.mrb[0].mxu0
        %3028 = vmatprep.mubr.bf16.mxu0 %v1717
        %3029 = vmatmul.mubr.bf16.gmra.mrb[0].mxu0 %v1716
        %v3030 = vpop.f32.mrb[0].mxu0
        %v3031 = vadd.f32 %v834, %v3030
        %v3032 = vpop.f32.mrb[0].mxu0
        %v3033 = vpop.f32.mrb[0].mxu0
        %v3034 = vadd.f32 %v834, %v3033
        %v3035 = vpop.f32.mrb[0].mxu0
        %3036 = vmatprep.mubr.bf16.mxu0 %v1733
        %3037 = vmatmul.mubr.bf16.gmra.mrb[0].mxu0 %v1732
        %v3038 = vpop.f32.mrb[0].mxu0
        %v3039 = vadd.f32 %v834, %v3038
        %v3040 = vpop.f32.mrb[0].mxu0
        %v3041 = vpop.f32.mrb[0].mxu0
        %v3042 = vadd.f32 %v834, %v3041
        %v3043 = vpop.f32.mrb[0].mxu0
        %3044 = vmatprep.mubr.bf16.mxu0 %v1749
        %3045 = vmatmul.mubr.bf16.gmra.mrb[0].mxu0 %v1748
        %v3046 = vpop.f32.mrb[0].mxu0
        %v3047 = vadd.f32 %v834, %v3046
        %v3048 = vpop.f32.mrb[0].mxu0
        %v3049 = vpop.f32.mrb[0].mxu0
        %v3050 = vadd.f32 %v834, %v3049
        %v3051 = vpop.f32.mrb[0].mxu0
        %3052 = vmatprep.mubr.bf16.mxu0 %v1765
        %3053 = vmatmul.mubr.bf16.gmra.mrb[0].mxu0 %v1764
        %v3054 = vpop.f32.mrb[0].mxu0
        %v3055 = vadd.f32 %v834, %v3054
        %v3056 = vpop.f32.mrb[0].mxu0
        %v3057 = vpop.f32.mrb[0].mxu0
        %v3058 = vadd.f32 %v834, %v3057
        %v3059 = vpop.f32.mrb[0].mxu0
        %3060 = vmatprep.mubr.bf16.mxu0 %v1781
        %3061 = vmatmul.mubr.bf16.gmra.mrb[0].mxu0 %v1780
        %v3062 = vpop.f32.mrb[0].mxu0
        %v3063 = vadd.f32 %v834, %v3062
        %v3064 = vpop.f32.mrb[0].mxu0
        %v3065 = vpop.f32.mrb[0].mxu0
        %v3066 = vadd.f32 %v834, %v3065
        %v3067 = vpop.f32.mrb[0].mxu0
        %3068 = vmatprep.mubr.bf16.mxu0 %v1797
        %3069 = vmatmul.mubr.bf16.gmra.mrb[0].mxu0 %v1796
        %v3070 = vpop.f32.mrb[0].mxu0
        %v3071 = vadd.f32 %v834, %v3070
        %v3072 = vpop.f32.mrb[0].mxu0
        %v3073 = vpop.f32.mrb[0].mxu0
        %v3074 = vadd.f32 %v834, %v3073
        %v3075 = vpop.f32.mrb[0].mxu0
        %3076 = vmatprep.mubr.bf16.mxu0 %v1813
        %3077 = vmatmul.mubr.bf16.gmra.mrb[0].mxu0 %v1812
        %v3078 = vpop.f32.mrb[0].mxu0
        %v3079 = vadd.f32 %v834, %v3078
        %v3080 = vpop.f32.mrb[0].mxu0
        %v3081 = vpop.f32.mrb[0].mxu0
        %v3082 = vadd.f32 %v834, %v3081
        %v3083 = vpop.f32.mrb[0].mxu0
        %3084 = vmatprep.mubr.bf16.mxu0 %v1829
        %3085 = vmatmul.mubr.bf16.gmra.mrb[0].mxu0 %v1828
        %v3086 = vpop.f32.mrb[0].mxu0
        %v3087 = vadd.f32 %v834, %v3086
        %v3088 = vpop.f32.mrb[0].mxu0
        %v3089 = vpop.f32.mrb[0].mxu0
        %v3090 = vadd.f32 %v834, %v3089
        %v3091 = vpop.f32.mrb[0].mxu0
        %3092 = vmatprep.mubr.bf16.mxu0 %v1845
        %3093 = vmatmul.mubr.bf16.gmra.mrb[0].mxu0 %v1844
        %v3094 = vpop.f32.mrb[0].mxu0
        %v3095 = vadd.f32 %v834, %v3094
        %v3096 = vpop.f32.mrb[0].mxu0
        %v3097 = vpop.f32.mrb[0].mxu0
        %v3098 = vadd.f32 %v834, %v3097
        %v3099 = vpop.f32.mrb[0].mxu0
        %3100 = vmatprep.mubr.bf16.mxu0 %v1861
        %3101 = vmatmul.mubr.bf16.gmra.mrb[0].mxu0 %v1860
        %v3102 = vpop.f32.mrb[0].mxu0
        %v3103 = vadd.f32 %v834, %v3102
        %v3104 = vpop.f32.mrb[0].mxu0
        %v3105 = vpop.f32.mrb[0].mxu0
        %v3106 = vadd.f32 %v834, %v3105
        %v3107 = vpop.f32.mrb[0].mxu0
        %3108 = vmatprep.mubr.bf16.mxu0 %v1877
        %3109 = vmatmul.mubr.bf16.gmra.mrb[0].mxu0 %v1876
        %v3110 = vpop.f32.mrb[0].mxu0
        %v3111 = vadd.f32 %v834, %v3110
        %v3112 = vpop.f32.mrb[0].mxu0
        %v3113 = vpop.f32.mrb[0].mxu0
        %v3114 = vadd.f32 %v834, %v3113
        %v3115 = vpop.f32.mrb[0].mxu0
        %3116 = vmatprep.mubr.bf16.mxu0 %v1893
        %3117 = vmatmul.mubr.bf16.gmra.mrb[0].mxu0 %v1892
        %v3118 = vpop.f32.mrb[0].mxu0
        %v3119 = vadd.f32 %v834, %v3118
        %v3120 = vpop.f32.mrb[0].mxu0
        %v3121 = vpop.f32.mrb[0].mxu0
        %v3122 = vadd.f32 %v834, %v3121
        %v3123 = vpop.f32.mrb[0].mxu0
        %3124 = vmatprep.mubr.bf16.mxu0 %v1909
        %3125 = vmatmul.mubr.bf16.gmra.mrb[0].mxu0 %v1908
        %v3126 = vpop.f32.mrb[0].mxu0
        %v3127 = vadd.f32 %v834, %v3126
        %v3128 = vpop.f32.mrb[0].mxu0
        %v3129 = vpop.f32.mrb[0].mxu0
        %v3130 = vadd.f32 %v834, %v3129
        %v3131 = vpop.f32.mrb[0].mxu0
        %3132 = vdwg.mxu0
        %3133 = vmatprep.subr.bf16.mxu0 0
        %3134 = vmatpush1.bf16.msra.mxu0 %v2724
        %3135 = vmatprep.subr.bf16.mxu0 0
        %3136 = vmatpush1.bf16.msra.mxu0 %v2725
        %3137 = vmatprep.subr.bf16.mxu0 0
        %3138 = vmatpush1.bf16.msra.mxu0 %v2726
        %3139 = vmatprep.subr.bf16.mxu0 0
        %3140 = vmatpush1.bf16.msra.mxu0 %v2727
        %3141 = vmatprep.subr.bf16.mxu0 0
        %3142 = vmatpush1.bf16.msra.mxu0 %v2728
        %3143 = vmatprep.subr.bf16.mxu0 0
        %3144 = vmatpush1.bf16.msra.mxu0 %v2729
        %3145 = vmatprep.subr.bf16.mxu0 0
        %3146 = vmatpush1.bf16.msra.mxu0 %v2730
        %3147 = vmatprep.subr.bf16.mxu0 0
        %3148 = vmatpush1.bf16.msra.mxu0 %v2731
        %3149 = vmatprep.subr.bf16.mxu0 0
        %3150 = vmatpush1.bf16.msra.mxu0 %v2732
        %3151 = vmatprep.subr.bf16.mxu0 0
        %3152 = vmatpush1.bf16.msra.mxu0 %v2733
        %3153 = vmatprep.subr.bf16.mxu0 0
        %3154 = vmatpush1.bf16.msra.mxu0 %v2734
        %3155 = vmatprep.subr.bf16.mxu0 0
        %3156 = vmatpush1.bf16.msra.mxu0 %v2735
        %3157 = vmatprep.subr.bf16.mxu0 0
        %3158 = vmatpush1.bf16.msra.mxu0 %v2736
        %3159 = vmatprep.subr.bf16.mxu0 0
        %3160 = vmatpush1.bf16.msra.mxu0 %v2737
        %3161 = vmatprep.subr.bf16.mxu0 0
        %3162 = vmatpush1.bf16.msra.mxu0 %v2738
        %3163 = vmatprep.subr.bf16.mxu0 0
        %3164 = vmatpush1.bf16.msra.mxu0 %v2739
        %3165 = vmatprep.mubr.bf16.mxu0 %v1655
        %3166 = vmatmul.mubr.bf16.gmra.mrb[0].mxu0 %v1654
        %v3167 = vpop.f32.mrb[0].mxu0
        %v3168 = vadd.f32 %v2999, %v3167
        %v3169 = vpop.f32.mrb[0].mxu0
        %v3170 = vpop.f32.mrb[0].mxu0
        %v3171 = vadd.f32 %v3002, %v3170
        %v3172 = vpop.f32.mrb[0].mxu0
        %3173 = vmatprep.mubr.bf16.mxu0 %v1671
        %3174 = vmatmul.mubr.bf16.gmra.mrb[0].mxu0 %v1670
        %v3175 = vpop.f32.mrb[0].mxu0
        %v3176 = vadd.f32 %v3007, %v3175
        %v3177 = vpop.f32.mrb[0].mxu0
        %v3178 = vpop.f32.mrb[0].mxu0
        %v3179 = vadd.f32 %v3010, %v3178
        %v3180 = vpop.f32.mrb[0].mxu0
        %3181 = vmatprep.mubr.bf16.mxu0 %v1687
        %3182 = vmatmul.mubr.bf16.gmra.mrb[0].mxu0 %v1686
        %v3183 = vpop.f32.mrb[0].mxu0
        %v3184 = vadd.f32 %v3015, %v3183
        %v3185 = vpop.f32.mrb[0].mxu0
        %v3186 = vpop.f32.mrb[0].mxu0
        %v3187 = vadd.f32 %v3018, %v3186
        %v3188 = vpop.f32.mrb[0].mxu0
        %3189 = vmatprep.mubr.bf16.mxu0 %v1703
        %3190 = vmatmul.mubr.bf16.gmra.mrb[0].mxu0 %v1702
        %v3191 = vpop.f32.mrb[0].mxu0
        %v3192 = vadd.f32 %v3023, %v3191
        %v3193 = vpop.f32.mrb[0].mxu0
        %v3194 = vpop.f32.mrb[0].mxu0
        %v3195 = vadd.f32 %v3026, %v3194
        %v3196 = vpop.f32.mrb[0].mxu0
        %3197 = vmatprep.mubr.bf16.mxu0 %v1719
        %3198 = vmatmul.mubr.bf16.gmra.mrb[0].mxu0 %v1718
        %v3199 = vpop.f32.mrb[0].mxu0
        %v3200 = vadd.f32 %v3031, %v3199
        %v3201 = vpop.f32.mrb[0].mxu0
        %v3202 = vpop.f32.mrb[0].mxu0
        %v3203 = vadd.f32 %v3034, %v3202
        %v3204 = vpop.f32.mrb[0].mxu0
        %3205 = vmatprep.mubr.bf16.mxu0 %v1735
        %3206 = vmatmul.mubr.bf16.gmra.mrb[0].mxu0 %v1734
        %v3207 = vpop.f32.mrb[0].mxu0
        %v3208 = vadd.f32 %v3039, %v3207
        %v3209 = vpop.f32.mrb[0].mxu0
        %v3210 = vpop.f32.mrb[0].mxu0
        %v3211 = vadd.f32 %v3042, %v3210
        %v3212 = vpop.f32.mrb[0].mxu0
        %3213 = vmatprep.mubr.bf16.mxu0 %v1751
        %3214 = vmatmul.mubr.bf16.gmra.mrb[0].mxu0 %v1750
        %v3215 = vpop.f32.mrb[0].mxu0
        %v3216 = vadd.f32 %v3047, %v3215
        %v3217 = vpop.f32.mrb[0].mxu0
        %v3218 = vpop.f32.mrb[0].mxu0
        %v3219 = vadd.f32 %v3050, %v3218
        %v3220 = vpop.f32.mrb[0].mxu0
        %3221 = vmatprep.mubr.bf16.mxu0 %v1767
        %3222 = vmatmul.mubr.bf16.gmra.mrb[0].mxu0 %v1766
        %v3223 = vpop.f32.mrb[0].mxu0
        %v3224 = vadd.f32 %v3055, %v3223
        %v3225 = vpop.f32.mrb[0].mxu0
        %v3226 = vpop.f32.mrb[0].mxu0
        %v3227 = vadd.f32 %v3058, %v3226
        %v3228 = vpop.f32.mrb[0].mxu0
        %3229 = vmatprep.mubr.bf16.mxu0 %v1783
        %3230 = vmatmul.mubr.bf16.gmra.mrb[0].mxu0 %v1782
        %v3231 = vpop.f32.mrb[0].mxu0
        %v3232 = vadd.f32 %v3063, %v3231
        %v3233 = vpop.f32.mrb[0].mxu0
        %v3234 = vpop.f32.mrb[0].mxu0
        %v3235 = vadd.f32 %v3066, %v3234
        %v3236 = vpop.f32.mrb[0].mxu0
        %3237 = vmatprep.mubr.bf16.mxu0 %v1799
        %3238 = vmatmul.mubr.bf16.gmra.mrb[0].mxu0 %v1798
        %v3239 = vpop.f32.mrb[0].mxu0
        %v3240 = vadd.f32 %v3071, %v3239
        %v3241 = vpop.f32.mrb[0].mxu0
        %v3242 = vpop.f32.mrb[0].mxu0
        %v3243 = vadd.f32 %v3074, %v3242
        %v3244 = vpop.f32.mrb[0].mxu0
        %3245 = vmatprep.mubr.bf16.mxu0 %v1815
        %3246 = vmatmul.mubr.bf16.gmra.mrb[0].mxu0 %v1814
        %v3247 = vpop.f32.mrb[0].mxu0
        %v3248 = vadd.f32 %v3079, %v3247
        %v3249 = vpop.f32.mrb[0].mxu0
        %v3250 = vpop.f32.mrb[0].mxu0
        %v3251 = vadd.f32 %v3082, %v3250
        %v3252 = vpop.f32.mrb[0].mxu0
        %3253 = vmatprep.mubr.bf16.mxu0 %v1831
        %3254 = vmatmul.mubr.bf16.gmra.mrb[0].mxu0 %v1830
        %v3255 = vpop.f32.mrb[0].mxu0
        %v3256 = vadd.f32 %v3087, %v3255
        %v3257 = vpop.f32.mrb[0].mxu0
        %v3258 = vpop.f32.mrb[0].mxu0
        %v3259 = vadd.f32 %v3090, %v3258
        %v3260 = vpop.f32.mrb[0].mxu0
        %3261 = vmatprep.mubr.bf16.mxu0 %v1847
        %3262 = vmatmul.mubr.bf16.gmra.mrb[0].mxu0 %v1846
        %v3263 = vpop.f32.mrb[0].mxu0
        %v3264 = vadd.f32 %v3095, %v3263
        %v3265 = vpop.f32.mrb[0].mxu0
        %v3266 = vpop.f32.mrb[0].mxu0
        %v3267 = vadd.f32 %v3098, %v3266
        %v3268 = vpop.f32.mrb[0].mxu0
        %3269 = vmatprep.mubr.bf16.mxu0 %v1863
        %3270 = vmatmul.mubr.bf16.gmra.mrb[0].mxu0 %v1862
        %v3271 = vpop.f32.mrb[0].mxu0
        %v3272 = vadd.f32 %v3103, %v3271
        %v3273 = vpop.f32.mrb[0].mxu0
        %v3274 = vpop.f32.mrb[0].mxu0
        %v3275 = vadd.f32 %v3106, %v3274
        %v3276 = vpop.f32.mrb[0].mxu0
        %3277 = vmatprep.mubr.bf16.mxu0 %v1879
        %3278 = vmatmul.mubr.bf16.gmra.mrb[0].mxu0 %v1878
        %v3279 = vpop.f32.mrb[0].mxu0
        %v3280 = vadd.f32 %v3111, %v3279
        %v3281 = vpop.f32.mrb[0].mxu0
        %v3282 = vpop.f32.mrb[0].mxu0
        %v3283 = vadd.f32 %v3114, %v3282
        %v3284 = vpop.f32.mrb[0].mxu0
        %3285 = vmatprep.mubr.bf16.mxu0 %v1895
        %3286 = vmatmul.mubr.bf16.gmra.mrb[0].mxu0 %v1894
        %v3287 = vpop.f32.mrb[0].mxu0
        %v3288 = vadd.f32 %v3119, %v3287
        %v3289 = vpop.f32.mrb[0].mxu0
        %v3290 = vpop.f32.mrb[0].mxu0
        %v3291 = vadd.f32 %v3122, %v3290
        %v3292 = vpop.f32.mrb[0].mxu0
        %3293 = vmatprep.mubr.bf16.mxu0 %v1911
        %3294 = vmatmul.mubr.bf16.gmra.mrb[0].mxu0 %v1910
        %v3295 = vpop.f32.mrb[0].mxu0
        %v3296 = vadd.f32 %v3127, %v3295
        %v3297 = vpop.f32.mrb[0].mxu0
        %v3298 = vpop.f32.mrb[0].mxu0
        %v3299 = vadd.f32 %v3130, %v3298
        %v3300 = vpop.f32.mrb[0].mxu0
        %3301 = vdwg.mxu0
        %3302 = vmatprep.subr.bf16.mxu0 0
        %3303 = vmatpush1.bf16.msra.mxu0 %v2740
        %3304 = vmatprep.subr.bf16.mxu0 0
        %3305 = vmatpush1.bf16.msra.mxu0 %v2741
        %3306 = vmatprep.subr.bf16.mxu0 0
        %3307 = vmatpush1.bf16.msra.mxu0 %v2742
        %3308 = vmatprep.subr.bf16.mxu0 0
        %3309 = vmatpush1.bf16.msra.mxu0 %v2743
        %3310 = vmatprep.subr.bf16.mxu0 0
        %3311 = vmatpush1.bf16.msra.mxu0 %v2744
        %3312 = vmatprep.subr.bf16.mxu0 0
        %3313 = vmatpush1.bf16.msra.mxu0 %v2745
        %3314 = vmatprep.subr.bf16.mxu0 0
        %3315 = vmatpush1.bf16.msra.mxu0 %v2746
        %3316 = vmatprep.subr.bf16.mxu0 0
        %3317 = vmatpush1.bf16.msra.mxu0 %v2747
        %3318 = vmatprep.subr.bf16.mxu0 0
        %3319 = vmatpush1.bf16.msra.mxu0 %v2748
        %3320 = vmatprep.subr.bf16.mxu0 0
        %3321 = vmatpush1.bf16.msra.mxu0 %v2749
        %3322 = vmatprep.subr.bf16.mxu0 0
        %3323 = vmatpush1.bf16.msra.mxu0 %v2750
        %3324 = vmatprep.subr.bf16.mxu0 0
        %3325 = vmatpush1.bf16.msra.mxu0 %v2751
        %3326 = vmatprep.subr.bf16.mxu0 0
        %3327 = vmatpush1.bf16.msra.mxu0 %v2752
        %3328 = vmatprep.subr.bf16.mxu0 0
        %3329 = vmatpush1.bf16.msra.mxu0 %v2753
        %3330 = vmatprep.subr.bf16.mxu0 0
        %3331 = vmatpush1.bf16.msra.mxu0 %v2754
        %3332 = vmatprep.subr.bf16.mxu0 0
        %3333 = vmatpush1.bf16.msra.mxu0 %v2755
        %3334 = vmatprep.mubr.bf16.mxu0 %v1657
        %3335 = vmatmul.mubr.bf16.gmra.mrb[0].mxu0 %v1656
        %v3336 = vpop.f32.mrb[0].mxu0
        %v3337 = vadd.f32 %v3168, %v3336
        %v3338 = vpop.f32.mrb[0].mxu0
        %v3339 = vpop.f32.mrb[0].mxu0
        %v3340 = vadd.f32 %v3171, %v3339
        %v3341 = vpop.f32.mrb[0].mxu0
        %3342 = vmatprep.mubr.bf16.mxu0 %v1673
        %3343 = vmatmul.mubr.bf16.gmra.mrb[0].mxu0 %v1672
        %v3344 = vpop.f32.mrb[0].mxu0
        %v3345 = vadd.f32 %v3176, %v3344
        %v3346 = vpop.f32.mrb[0].mxu0
        %v3347 = vpop.f32.mrb[0].mxu0
        %v3348 = vadd.f32 %v3179, %v3347
        %v3349 = vpop.f32.mrb[0].mxu0
        %3350 = vmatprep.mubr.bf16.mxu0 %v1689
        %3351 = vmatmul.mubr.bf16.gmra.mrb[0].mxu0 %v1688
        %v3352 = vpop.f32.mrb[0].mxu0
        %v3353 = vadd.f32 %v3184, %v3352
        %v3354 = vpop.f32.mrb[0].mxu0
        %v3355 = vpop.f32.mrb[0].mxu0
        %v3356 = vadd.f32 %v3187, %v3355
        %v3357 = vpop.f32.mrb[0].mxu0
        %3358 = vmatprep.mubr.bf16.mxu0 %v1705
        %3359 = vmatmul.mubr.bf16.gmra.mrb[0].mxu0 %v1704
        %v3360 = vpop.f32.mrb[0].mxu0
        %v3361 = vadd.f32 %v3192, %v3360
        %v3362 = vpop.f32.mrb[0].mxu0
        %v3363 = vpop.f32.mrb[0].mxu0
        %v3364 = vadd.f32 %v3195, %v3363
        %v3365 = vpop.f32.mrb[0].mxu0
        %3366 = vmatprep.mubr.bf16.mxu0 %v1721
        %3367 = vmatmul.mubr.bf16.gmra.mrb[0].mxu0 %v1720
        %v3368 = vpop.f32.mrb[0].mxu0
        %v3369 = vadd.f32 %v3200, %v3368
        %v3370 = vpop.f32.mrb[0].mxu0
        %v3371 = vpop.f32.mrb[0].mxu0
        %v3372 = vadd.f32 %v3203, %v3371
        %v3373 = vpop.f32.mrb[0].mxu0
        %3374 = vmatprep.mubr.bf16.mxu0 %v1737
        %3375 = vmatmul.mubr.bf16.gmra.mrb[0].mxu0 %v1736
        %v3376 = vpop.f32.mrb[0].mxu0
        %v3377 = vadd.f32 %v3208, %v3376
        %v3378 = vpop.f32.mrb[0].mxu0
        %v3379 = vpop.f32.mrb[0].mxu0
        %v3380 = vadd.f32 %v3211, %v3379
        %v3381 = vpop.f32.mrb[0].mxu0
        %3382 = vmatprep.mubr.bf16.mxu0 %v1753
        %3383 = vmatmul.mubr.bf16.gmra.mrb[0].mxu0 %v1752
        %v3384 = vpop.f32.mrb[0].mxu0
        %v3385 = vadd.f32 %v3216, %v3384
        %v3386 = vpop.f32.mrb[0].mxu0
        %v3387 = vpop.f32.mrb[0].mxu0
        %v3388 = vadd.f32 %v3219, %v3387
        %v3389 = vpop.f32.mrb[0].mxu0
        %3390 = vmatprep.mubr.bf16.mxu0 %v1769
        %3391 = vmatmul.mubr.bf16.gmra.mrb[0].mxu0 %v1768
        %v3392 = vpop.f32.mrb[0].mxu0
        %v3393 = vadd.f32 %v3224, %v3392
        %v3394 = vpop.f32.mrb[0].mxu0
        %v3395 = vpop.f32.mrb[0].mxu0
        %v3396 = vadd.f32 %v3227, %v3395
        %v3397 = vpop.f32.mrb[0].mxu0
        %3398 = vmatprep.mubr.bf16.mxu0 %v1785
        %3399 = vmatmul.mubr.bf16.gmra.mrb[0].mxu0 %v1784
        %v3400 = vpop.f32.mrb[0].mxu0
        %v3401 = vadd.f32 %v3232, %v3400
        %v3402 = vpop.f32.mrb[0].mxu0
        %v3403 = vpop.f32.mrb[0].mxu0
        %v3404 = vadd.f32 %v3235, %v3403
        %v3405 = vpop.f32.mrb[0].mxu0
        %3406 = vmatprep.mubr.bf16.mxu0 %v1801
        %3407 = vmatmul.mubr.bf16.gmra.mrb[0].mxu0 %v1800
        %v3408 = vpop.f32.mrb[0].mxu0
        %v3409 = vadd.f32 %v3240, %v3408
        %v3410 = vpop.f32.mrb[0].mxu0
        %v3411 = vpop.f32.mrb[0].mxu0
        %v3412 = vadd.f32 %v3243, %v3411
        %v3413 = vpop.f32.mrb[0].mxu0
        %3414 = vmatprep.mubr.bf16.mxu0 %v1817
        %3415 = vmatmul.mubr.bf16.gmra.mrb[0].mxu0 %v1816
        %v3416 = vpop.f32.mrb[0].mxu0
        %v3417 = vadd.f32 %v3248, %v3416
        %v3418 = vpop.f32.mrb[0].mxu0
        %v3419 = vpop.f32.mrb[0].mxu0
        %v3420 = vadd.f32 %v3251, %v3419
        %v3421 = vpop.f32.mrb[0].mxu0
        %3422 = vmatprep.mubr.bf16.mxu0 %v1833
        %3423 = vmatmul.mubr.bf16.gmra.mrb[0].mxu0 %v1832
        %v3424 = vpop.f32.mrb[0].mxu0
        %v3425 = vadd.f32 %v3256, %v3424
        %v3426 = vpop.f32.mrb[0].mxu0
        %v3427 = vpop.f32.mrb[0].mxu0
        %v3428 = vadd.f32 %v3259, %v3427
        %v3429 = vpop.f32.mrb[0].mxu0
        %3430 = vmatprep.mubr.bf16.mxu0 %v1849
        %3431 = vmatmul.mubr.bf16.gmra.mrb[0].mxu0 %v1848
        %v3432 = vpop.f32.mrb[0].mxu0
        %v3433 = vadd.f32 %v3264, %v3432
        %v3434 = vpop.f32.mrb[0].mxu0
        %v3435 = vpop.f32.mrb[0].mxu0
        %v3436 = vadd.f32 %v3267, %v3435
        %v3437 = vpop.f32.mrb[0].mxu0
        %3438 = vmatprep.mubr.bf16.mxu0 %v1865
        %3439 = vmatmul.mubr.bf16.gmra.mrb[0].mxu0 %v1864
        %v3440 = vpop.f32.mrb[0].mxu0
        %v3441 = vadd.f32 %v3272, %v3440
        %v3442 = vpop.f32.mrb[0].mxu0
        %v3443 = vpop.f32.mrb[0].mxu0
        %v3444 = vadd.f32 %v3275, %v3443
        %v3445 = vpop.f32.mrb[0].mxu0
        %3446 = vmatprep.mubr.bf16.mxu0 %v1881
        %3447 = vmatmul.mubr.bf16.gmra.mrb[0].mxu0 %v1880
        %v3448 = vpop.f32.mrb[0].mxu0
        %v3449 = vadd.f32 %v3280, %v3448
        %v3450 = vpop.f32.mrb[0].mxu0
        %v3451 = vpop.f32.mrb[0].mxu0
        %v3452 = vadd.f32 %v3283, %v3451
        %v3453 = vpop.f32.mrb[0].mxu0
        %3454 = vmatprep.mubr.bf16.mxu0 %v1897
        %3455 = vmatmul.mubr.bf16.gmra.mrb[0].mxu0 %v1896
        %v3456 = vpop.f32.mrb[0].mxu0
        %v3457 = vadd.f32 %v3288, %v3456
        %v3458 = vpop.f32.mrb[0].mxu0
        %v3459 = vpop.f32.mrb[0].mxu0
        %v3460 = vadd.f32 %v3291, %v3459
        %v3461 = vpop.f32.mrb[0].mxu0
        %3462 = vmatprep.mubr.bf16.mxu0 %v1913
        %3463 = vmatmul.mubr.bf16.gmra.mrb[0].mxu0 %v1912
        %v3464 = vpop.f32.mrb[0].mxu0
        %v3465 = vadd.f32 %v3296, %v3464
        %v3466 = vpop.f32.mrb[0].mxu0
        %v3467 = vpop.f32.mrb[0].mxu0
        %v3468 = vadd.f32 %v3299, %v3467
        %v3469 = vpop.f32.mrb[0].mxu0
        %3470 = vdwg.mxu0
        %3471 = vmatprep.subr.bf16.mxu0 0
        %3472 = vmatpush1.bf16.msra.mxu0 %v2756
        %3473 = vmatprep.subr.bf16.mxu0 0
        %3474 = vmatpush1.bf16.msra.mxu0 %v2757
        %3475 = vmatprep.subr.bf16.mxu0 0
        %3476 = vmatpush1.bf16.msra.mxu0 %v2758
        %3477 = vmatprep.subr.bf16.mxu0 0
        %3478 = vmatpush1.bf16.msra.mxu0 %v2759
        %3479 = vmatprep.subr.bf16.mxu0 0
        %3480 = vmatpush1.bf16.msra.mxu0 %v2760
        %3481 = vmatprep.subr.bf16.mxu0 0
        %3482 = vmatpush1.bf16.msra.mxu0 %v2761
        %3483 = vmatprep.subr.bf16.mxu0 0
        %3484 = vmatpush1.bf16.msra.mxu0 %v2762
        %3485 = vmatprep.subr.bf16.mxu0 0
        %3486 = vmatpush1.bf16.msra.mxu0 %v2763
        %3487 = vmatprep.subr.bf16.mxu0 0
        %3488 = vmatpush1.bf16.msra.mxu0 %v2764
        %3489 = vmatprep.subr.bf16.mxu0 0
        %3490 = vmatpush1.bf16.msra.mxu0 %v2765
        %3491 = vmatprep.subr.bf16.mxu0 0
        %3492 = vmatpush1.bf16.msra.mxu0 %v2766
        %3493 = vmatprep.subr.bf16.mxu0 0
        %3494 = vmatpush1.bf16.msra.mxu0 %v2767
        %3495 = vmatprep.subr.bf16.mxu0 0
        %3496 = vmatpush1.bf16.msra.mxu0 %v2768
        %3497 = vmatprep.subr.bf16.mxu0 0
        %3498 = vmatpush1.bf16.msra.mxu0 %v2769
        %3499 = vmatprep.subr.bf16.mxu0 0
        %3500 = vmatpush1.bf16.msra.mxu0 %v2770
        %3501 = vmatprep.subr.bf16.mxu0 0
        %3502 = vmatpush1.bf16.msra.mxu0 %v2771
        %3503 = vmatprep.mubr.bf16.mxu0 %v1659
        %3504 = vmatmul.mubr.bf16.gmra.mrb[0].mxu0 %v1658
        %v3505 = vpop.f32.mrb[0].mxu0
        %v3506 = vadd.f32 %v3337, %v3505
        %v3507 = vpop.f32.mrb[0].mxu0
        %v3508 = vpop.f32.mrb[0].mxu0
        %v3509 = vadd.f32 %v3340, %v3508
        %v3510 = vpop.f32.mrb[0].mxu0
        %3511 = vmatprep.mubr.bf16.mxu0 %v1675
        %3512 = vmatmul.mubr.bf16.gmra.mrb[0].mxu0 %v1674
        %v3513 = vpop.f32.mrb[0].mxu0
        %v3514 = vadd.f32 %v3345, %v3513
        %v3515 = vpop.f32.mrb[0].mxu0
        %v3516 = vpop.f32.mrb[0].mxu0
        %v3517 = vadd.f32 %v3348, %v3516
        %v3518 = vpop.f32.mrb[0].mxu0
        %3519 = vmatprep.mubr.bf16.mxu0 %v1691
        %3520 = vmatmul.mubr.bf16.gmra.mrb[0].mxu0 %v1690
        %v3521 = vpop.f32.mrb[0].mxu0
        %v3522 = vadd.f32 %v3353, %v3521
        %v3523 = vpop.f32.mrb[0].mxu0
        %v3524 = vpop.f32.mrb[0].mxu0
        %v3525 = vadd.f32 %v3356, %v3524
        %v3526 = vpop.f32.mrb[0].mxu0
        %3527 = vmatprep.mubr.bf16.mxu0 %v1707
        %3528 = vmatmul.mubr.bf16.gmra.mrb[0].mxu0 %v1706
        %v3529 = vpop.f32.mrb[0].mxu0
        %v3530 = vadd.f32 %v3361, %v3529
        %v3531 = vpop.f32.mrb[0].mxu0
        %v3532 = vpop.f32.mrb[0].mxu0
        %v3533 = vadd.f32 %v3364, %v3532
        %v3534 = vpop.f32.mrb[0].mxu0
        %3535 = vmatprep.mubr.bf16.mxu0 %v1723
        %3536 = vmatmul.mubr.bf16.gmra.mrb[0].mxu0 %v1722
        %v3537 = vpop.f32.mrb[0].mxu0
        %v3538 = vadd.f32 %v3369, %v3537
        %v3539 = vpop.f32.mrb[0].mxu0
        %v3540 = vpop.f32.mrb[0].mxu0
        %v3541 = vadd.f32 %v3372, %v3540
        %v3542 = vpop.f32.mrb[0].mxu0
        %3543 = vmatprep.mubr.bf16.mxu0 %v1739
        %3544 = vmatmul.mubr.bf16.gmra.mrb[0].mxu0 %v1738
        %v3545 = vpop.f32.mrb[0].mxu0
        %v3546 = vadd.f32 %v3377, %v3545
        %v3547 = vpop.f32.mrb[0].mxu0
        %v3548 = vpop.f32.mrb[0].mxu0
        %v3549 = vadd.f32 %v3380, %v3548
        %v3550 = vpop.f32.mrb[0].mxu0
        %3551 = vmatprep.mubr.bf16.mxu0 %v1755
        %3552 = vmatmul.mubr.bf16.gmra.mrb[0].mxu0 %v1754
        %v3553 = vpop.f32.mrb[0].mxu0
        %v3554 = vadd.f32 %v3385, %v3553
        %v3555 = vpop.f32.mrb[0].mxu0
        %v3556 = vpop.f32.mrb[0].mxu0
        %v3557 = vadd.f32 %v3388, %v3556
        %v3558 = vpop.f32.mrb[0].mxu0
        %3559 = vmatprep.mubr.bf16.mxu0 %v1771
        %3560 = vmatmul.mubr.bf16.gmra.mrb[0].mxu0 %v1770
        %v3561 = vpop.f32.mrb[0].mxu0
        %v3562 = vadd.f32 %v3393, %v3561
        %v3563 = vpop.f32.mrb[0].mxu0
        %v3564 = vpop.f32.mrb[0].mxu0
        %v3565 = vadd.f32 %v3396, %v3564
        %v3566 = vpop.f32.mrb[0].mxu0
        %3567 = vmatprep.mubr.bf16.mxu0 %v1787
        %3568 = vmatmul.mubr.bf16.gmra.mrb[0].mxu0 %v1786
        %v3569 = vpop.f32.mrb[0].mxu0
        %v3570 = vadd.f32 %v3401, %v3569
        %v3571 = vpop.f32.mrb[0].mxu0
        %v3572 = vpop.f32.mrb[0].mxu0
        %v3573 = vadd.f32 %v3404, %v3572
        %v3574 = vpop.f32.mrb[0].mxu0
        %3575 = vmatprep.mubr.bf16.mxu0 %v1803
        %3576 = vmatmul.mubr.bf16.gmra.mrb[0].mxu0 %v1802
        %v3577 = vpop.f32.mrb[0].mxu0
        %v3578 = vadd.f32 %v3409, %v3577
        %v3579 = vpop.f32.mrb[0].mxu0
        %v3580 = vpop.f32.mrb[0].mxu0
        %v3581 = vadd.f32 %v3412, %v3580
        %v3582 = vpop.f32.mrb[0].mxu0
        %3583 = vmatprep.mubr.bf16.mxu0 %v1819
        %3584 = vmatmul.mubr.bf16.gmra.mrb[0].mxu0 %v1818
        %v3585 = vpop.f32.mrb[0].mxu0
        %v3586 = vadd.f32 %v3417, %v3585
        %v3587 = vpop.f32.mrb[0].mxu0
        %v3588 = vpop.f32.mrb[0].mxu0
        %v3589 = vadd.f32 %v3420, %v3588
        %v3590 = vpop.f32.mrb[0].mxu0
        %3591 = vmatprep.mubr.bf16.mxu0 %v1835
        %3592 = vmatmul.mubr.bf16.gmra.mrb[0].mxu0 %v1834
        %v3593 = vpop.f32.mrb[0].mxu0
        %v3594 = vadd.f32 %v3425, %v3593
        %v3595 = vpop.f32.mrb[0].mxu0
        %v3596 = vpop.f32.mrb[0].mxu0
        %v3597 = vadd.f32 %v3428, %v3596
        %v3598 = vpop.f32.mrb[0].mxu0
        %3599 = vmatprep.mubr.bf16.mxu0 %v1851
        %3600 = vmatmul.mubr.bf16.gmra.mrb[0].mxu0 %v1850
        %v3601 = vpop.f32.mrb[0].mxu0
        %v3602 = vadd.f32 %v3433, %v3601
        %v3603 = vpop.f32.mrb[0].mxu0
        %v3604 = vpop.f32.mrb[0].mxu0
        %v3605 = vadd.f32 %v3436, %v3604
        %v3606 = vpop.f32.mrb[0].mxu0
        %3607 = vmatprep.mubr.bf16.mxu0 %v1867
        %3608 = vmatmul.mubr.bf16.gmra.mrb[0].mxu0 %v1866
        %v3609 = vpop.f32.mrb[0].mxu0
        %v3610 = vadd.f32 %v3441, %v3609
        %v3611 = vpop.f32.mrb[0].mxu0
        %v3612 = vpop.f32.mrb[0].mxu0
        %v3613 = vadd.f32 %v3444, %v3612
        %v3614 = vpop.f32.mrb[0].mxu0
        %3615 = vmatprep.mubr.bf16.mxu0 %v1883
        %3616 = vmatmul.mubr.bf16.gmra.mrb[0].mxu0 %v1882
        %v3617 = vpop.f32.mrb[0].mxu0
        %v3618 = vadd.f32 %v3449, %v3617
        %v3619 = vpop.f32.mrb[0].mxu0
        %v3620 = vpop.f32.mrb[0].mxu0
        %v3621 = vadd.f32 %v3452, %v3620
        %v3622 = vpop.f32.mrb[0].mxu0
        %3623 = vmatprep.mubr.bf16.mxu0 %v1899
        %3624 = vmatmul.mubr.bf16.gmra.mrb[0].mxu0 %v1898
        %v3625 = vpop.f32.mrb[0].mxu0
        %v3626 = vadd.f32 %v3457, %v3625
        %v3627 = vpop.f32.mrb[0].mxu0
        %v3628 = vpop.f32.mrb[0].mxu0
        %v3629 = vadd.f32 %v3460, %v3628
        %v3630 = vpop.f32.mrb[0].mxu0
        %3631 = vmatprep.mubr.bf16.mxu0 %v1915
        %3632 = vmatmul.mubr.bf16.gmra.mrb[0].mxu0 %v1914
        %v3633 = vpop.f32.mrb[0].mxu0
        %v3634 = vadd.f32 %v3465, %v3633
        %v3635 = vpop.f32.mrb[0].mxu0
        %v3636 = vpop.f32.mrb[0].mxu0
        %v3637 = vadd.f32 %v3468, %v3636
        %v3638 = vpop.f32.mrb[0].mxu0
        %3639 = vdwg.mxu0
        %3640 = vmatprep.subr.bf16.mxu0 0
        %3641 = vmatpush1.bf16.msra.mxu0 %v2772
        %3642 = vmatprep.subr.bf16.mxu0 0
        %3643 = vmatpush1.bf16.msra.mxu0 %v2773
        %3644 = vmatprep.subr.bf16.mxu0 0
        %3645 = vmatpush1.bf16.msra.mxu0 %v2774
        %3646 = vmatprep.subr.bf16.mxu0 0
        %3647 = vmatpush1.bf16.msra.mxu0 %v2775
        %3648 = vmatprep.subr.bf16.mxu0 0
        %3649 = vmatpush1.bf16.msra.mxu0 %v2776
        %3650 = vmatprep.subr.bf16.mxu0 0
        %3651 = vmatpush1.bf16.msra.mxu0 %v2777
        %3652 = vmatprep.subr.bf16.mxu0 0
        %3653 = vmatpush1.bf16.msra.mxu0 %v2778
        %3654 = vmatprep.subr.bf16.mxu0 0
        %3655 = vmatpush1.bf16.msra.mxu0 %v2779
        %3656 = vmatprep.subr.bf16.mxu0 0
        %3657 = vmatpush1.bf16.msra.mxu0 %v2780
        %3658 = vmatprep.subr.bf16.mxu0 0
        %3659 = vmatpush1.bf16.msra.mxu0 %v2781
        %3660 = vmatprep.subr.bf16.mxu0 0
        %3661 = vmatpush1.bf16.msra.mxu0 %v2782
        %3662 = vmatprep.subr.bf16.mxu0 0
        %3663 = vmatpush1.bf16.msra.mxu0 %v2783
        %3664 = vmatprep.subr.bf16.mxu0 0
        %3665 = vmatpush1.bf16.msra.mxu0 %v2784
        %3666 = vmatprep.subr.bf16.mxu0 0
        %3667 = vmatpush1.bf16.msra.mxu0 %v2785
        %3668 = vmatprep.subr.bf16.mxu0 0
        %3669 = vmatpush1.bf16.msra.mxu0 %v2786
        %3670 = vmatprep.subr.bf16.mxu0 0
        %3671 = vmatpush1.bf16.msra.mxu0 %v2787
        %3672 = vmatprep.mubr.bf16.mxu0 %v1661
        %3673 = vmatmul.mubr.bf16.gmra.mrb[0].mxu0 %v1660
        %v3674 = vpop.f32.mrb[0].mxu0
        %v3675 = vadd.f32 %v3506, %v3674
        %v3676 = vpop.f32.mrb[0].mxu0
        %v3677 = vpop.f32.mrb[0].mxu0
        %v3678 = vadd.f32 %v3509, %v3677
        %v3679 = vpop.f32.mrb[0].mxu0
        %3680 = vmatprep.mubr.bf16.mxu0 %v1677
        %3681 = vmatmul.mubr.bf16.gmra.mrb[0].mxu0 %v1676
        %v3682 = vpop.f32.mrb[0].mxu0
        %v3683 = vadd.f32 %v3514, %v3682
        %v3684 = vpop.f32.mrb[0].mxu0
        %v3685 = vpop.f32.mrb[0].mxu0
        %v3686 = vadd.f32 %v3517, %v3685
        %v3687 = vpop.f32.mrb[0].mxu0
        %3688 = vmatprep.mubr.bf16.mxu0 %v1693
        %3689 = vmatmul.mubr.bf16.gmra.mrb[0].mxu0 %v1692
        %v3690 = vpop.f32.mrb[0].mxu0
        %v3691 = vadd.f32 %v3522, %v3690
        %v3692 = vpop.f32.mrb[0].mxu0
        %v3693 = vpop.f32.mrb[0].mxu0
        %v3694 = vadd.f32 %v3525, %v3693
        %v3695 = vpop.f32.mrb[0].mxu0
        %3696 = vmatprep.mubr.bf16.mxu0 %v1709
        %3697 = vmatmul.mubr.bf16.gmra.mrb[0].mxu0 %v1708
        %v3698 = vpop.f32.mrb[0].mxu0
        %v3699 = vadd.f32 %v3530, %v3698
        %v3700 = vpop.f32.mrb[0].mxu0
        %v3701 = vpop.f32.mrb[0].mxu0
        %v3702 = vadd.f32 %v3533, %v3701
        %v3703 = vpop.f32.mrb[0].mxu0
        %3704 = vmatprep.mubr.bf16.mxu0 %v1725
        %3705 = vmatmul.mubr.bf16.gmra.mrb[0].mxu0 %v1724
        %v3706 = vpop.f32.mrb[0].mxu0
        %v3707 = vadd.f32 %v3538, %v3706
        %v3708 = vpop.f32.mrb[0].mxu0
        %v3709 = vpop.f32.mrb[0].mxu0
        %v3710 = vadd.f32 %v3541, %v3709
        %v3711 = vpop.f32.mrb[0].mxu0
        %3712 = vmatprep.mubr.bf16.mxu0 %v1741
        %3713 = vmatmul.mubr.bf16.gmra.mrb[0].mxu0 %v1740
        %v3714 = vpop.f32.mrb[0].mxu0
        %v3715 = vadd.f32 %v3546, %v3714
        %v3716 = vpop.f32.mrb[0].mxu0
        %v3717 = vpop.f32.mrb[0].mxu0
        %v3718 = vadd.f32 %v3549, %v3717
        %v3719 = vpop.f32.mrb[0].mxu0
        %3720 = vmatprep.mubr.bf16.mxu0 %v1757
        %3721 = vmatmul.mubr.bf16.gmra.mrb[0].mxu0 %v1756
        %v3722 = vpop.f32.mrb[0].mxu0
        %v3723 = vadd.f32 %v3554, %v3722
        %v3724 = vpop.f32.mrb[0].mxu0
        %v3725 = vpop.f32.mrb[0].mxu0
        %v3726 = vadd.f32 %v3557, %v3725
        %v3727 = vpop.f32.mrb[0].mxu0
        %3728 = vmatprep.mubr.bf16.mxu0 %v1773
        %3729 = vmatmul.mubr.bf16.gmra.mrb[0].mxu0 %v1772
        %v3730 = vpop.f32.mrb[0].mxu0
        %v3731 = vadd.f32 %v3562, %v3730
        %v3732 = vpop.f32.mrb[0].mxu0
        %v3733 = vpop.f32.mrb[0].mxu0
        %v3734 = vadd.f32 %v3565, %v3733
        %v3735 = vpop.f32.mrb[0].mxu0
        %3736 = vmatprep.mubr.bf16.mxu0 %v1789
        %3737 = vmatmul.mubr.bf16.gmra.mrb[0].mxu0 %v1788
        %v3738 = vpop.f32.mrb[0].mxu0
        %v3739 = vadd.f32 %v3570, %v3738
        %v3740 = vpop.f32.mrb[0].mxu0
        %v3741 = vpop.f32.mrb[0].mxu0
        %v3742 = vadd.f32 %v3573, %v3741
        %v3743 = vpop.f32.mrb[0].mxu0
        %3744 = vmatprep.mubr.bf16.mxu0 %v1805
        %3745 = vmatmul.mubr.bf16.gmra.mrb[0].mxu0 %v1804
        %v3746 = vpop.f32.mrb[0].mxu0
        %v3747 = vadd.f32 %v3578, %v3746
        %v3748 = vpop.f32.mrb[0].mxu0
        %v3749 = vpop.f32.mrb[0].mxu0
        %v3750 = vadd.f32 %v3581, %v3749
        %v3751 = vpop.f32.mrb[0].mxu0
        %3752 = vmatprep.mubr.bf16.mxu0 %v1821
        %3753 = vmatmul.mubr.bf16.gmra.mrb[0].mxu0 %v1820
        %v3754 = vpop.f32.mrb[0].mxu0
        %v3755 = vadd.f32 %v3586, %v3754
        %v3756 = vpop.f32.mrb[0].mxu0
        %v3757 = vpop.f32.mrb[0].mxu0
        %v3758 = vadd.f32 %v3589, %v3757
        %v3759 = vpop.f32.mrb[0].mxu0
        %3760 = vmatprep.mubr.bf16.mxu0 %v1837
        %3761 = vmatmul.mubr.bf16.gmra.mrb[0].mxu0 %v1836
        %v3762 = vpop.f32.mrb[0].mxu0
        %v3763 = vadd.f32 %v3594, %v3762
        %v3764 = vpop.f32.mrb[0].mxu0
        %v3765 = vpop.f32.mrb[0].mxu0
        %v3766 = vadd.f32 %v3597, %v3765
        %v3767 = vpop.f32.mrb[0].mxu0
        %3768 = vmatprep.mubr.bf16.mxu0 %v1853
        %3769 = vmatmul.mubr.bf16.gmra.mrb[0].mxu0 %v1852
        %v3770 = vpop.f32.mrb[0].mxu0
        %v3771 = vadd.f32 %v3602, %v3770
        %v3772 = vpop.f32.mrb[0].mxu0
        %v3773 = vpop.f32.mrb[0].mxu0
        %v3774 = vadd.f32 %v3605, %v3773
        %v3775 = vpop.f32.mrb[0].mxu0
        %3776 = vmatprep.mubr.bf16.mxu0 %v1869
        %3777 = vmatmul.mubr.bf16.gmra.mrb[0].mxu0 %v1868
        %v3778 = vpop.f32.mrb[0].mxu0
        %v3779 = vadd.f32 %v3610, %v3778
        %v3780 = vpop.f32.mrb[0].mxu0
        %v3781 = vpop.f32.mrb[0].mxu0
        %v3782 = vadd.f32 %v3613, %v3781
        %v3783 = vpop.f32.mrb[0].mxu0
        %3784 = vmatprep.mubr.bf16.mxu0 %v1885
        %3785 = vmatmul.mubr.bf16.gmra.mrb[0].mxu0 %v1884
        %v3786 = vpop.f32.mrb[0].mxu0
        %v3787 = vadd.f32 %v3618, %v3786
        %v3788 = vpop.f32.mrb[0].mxu0
        %v3789 = vpop.f32.mrb[0].mxu0
        %v3790 = vadd.f32 %v3621, %v3789
        %v3791 = vpop.f32.mrb[0].mxu0
        %3792 = vmatprep.mubr.bf16.mxu0 %v1901
        %3793 = vmatmul.mubr.bf16.gmra.mrb[0].mxu0 %v1900
        %v3794 = vpop.f32.mrb[0].mxu0
        %v3795 = vadd.f32 %v3626, %v3794
        %v3796 = vpop.f32.mrb[0].mxu0
        %v3797 = vpop.f32.mrb[0].mxu0
        %v3798 = vadd.f32 %v3629, %v3797
        %v3799 = vpop.f32.mrb[0].mxu0
        %3800 = vmatprep.mubr.bf16.mxu0 %v1917
        %3801 = vmatmul.mubr.bf16.gmra.mrb[0].mxu0 %v1916
        %v3802 = vpop.f32.mrb[0].mxu0
        %v3803 = vadd.f32 %v3634, %v3802
        %v3804 = vpop.f32.mrb[0].mxu0
        %v3805 = vpop.f32.mrb[0].mxu0
        %v3806 = vadd.f32 %v3637, %v3805
        %v3807 = vpop.f32.mrb[0].mxu0
        %3808 = vdwg.mxu0
        %3809 = vmatprep.subr.bf16.mxu0 0
        %3810 = vmatpush1.bf16.msra.mxu0 %v2788
        %3811 = vmatprep.subr.bf16.mxu0 0
        %3812 = vmatpush1.bf16.msra.mxu0 %v2789
        %3813 = vmatprep.subr.bf16.mxu0 0
        %3814 = vmatpush1.bf16.msra.mxu0 %v2790
        %3815 = vmatprep.subr.bf16.mxu0 0
        %3816 = vmatpush1.bf16.msra.mxu0 %v2791
        %3817 = vmatprep.subr.bf16.mxu0 0
        %3818 = vmatpush1.bf16.msra.mxu0 %v2792
        %3819 = vmatprep.subr.bf16.mxu0 0
        %3820 = vmatpush1.bf16.msra.mxu0 %v2793
        %3821 = vmatprep.subr.bf16.mxu0 0
        %3822 = vmatpush1.bf16.msra.mxu0 %v2794
        %3823 = vmatprep.subr.bf16.mxu0 0
        %3824 = vmatpush1.bf16.msra.mxu0 %v2795
        %3825 = vmatprep.subr.bf16.mxu0 0
        %3826 = vmatpush1.bf16.msra.mxu0 %v2796
        %3827 = vmatprep.subr.bf16.mxu0 0
        %3828 = vmatpush1.bf16.msra.mxu0 %v2797
        %3829 = vmatprep.subr.bf16.mxu0 0
        %3830 = vmatpush1.bf16.msra.mxu0 %v2798
        %3831 = vmatprep.subr.bf16.mxu0 0
        %3832 = vmatpush1.bf16.msra.mxu0 %v2799
        %3833 = vmatprep.subr.bf16.mxu0 0
        %3834 = vmatpush1.bf16.msra.mxu0 %v2800
        %3835 = vmatprep.subr.bf16.mxu0 0
        %3836 = vmatpush1.bf16.msra.mxu0 %v2801
        %3837 = vmatprep.subr.bf16.mxu0 0
        %3838 = vmatpush1.bf16.msra.mxu0 %v2802
        %3839 = vmatprep.subr.bf16.mxu0 0
        %3840 = vmatpush1.bf16.msra.mxu0 %v2803
        %3841 = vmatprep.mubr.bf16.mxu0 %v1663
        %3842 = vmatmul.mubr.bf16.gmra.mrb[0].mxu0 %v1662
        %v3843 = vpop.f32.mrb[0].mxu0
        %v3844 = vadd.f32 %v3675, %v3843
        %v3845 = vpop.f32.mrb[0].mxu0
        %v3846 = vpop.f32.mrb[0].mxu0
        %v3847 = vadd.f32 %v3678, %v3846
        %v3848 = vpop.f32.mrb[0].mxu0
        %3849 = vmatprep.mubr.bf16.mxu0 %v1679
        %3850 = vmatmul.mubr.bf16.gmra.mrb[0].mxu0 %v1678
        %v3851 = vpop.f32.mrb[0].mxu0
        %v3852 = vadd.f32 %v3683, %v3851
        %v3853 = vpop.f32.mrb[0].mxu0
        %v3854 = vpop.f32.mrb[0].mxu0
        %v3855 = vadd.f32 %v3686, %v3854
        %v3856 = vpop.f32.mrb[0].mxu0
        %3857 = vmatprep.mubr.bf16.mxu0 %v1695
        %3858 = vmatmul.mubr.bf16.gmra.mrb[0].mxu0 %v1694
        %v3859 = vpop.f32.mrb[0].mxu0
        %v3860 = vadd.f32 %v3691, %v3859
        %v3861 = vpop.f32.mrb[0].mxu0
        %v3862 = vpop.f32.mrb[0].mxu0
        %v3863 = vadd.f32 %v3694, %v3862
        %v3864 = vpop.f32.mrb[0].mxu0
        %3865 = vmatprep.mubr.bf16.mxu0 %v1711
        %3866 = vmatmul.mubr.bf16.gmra.mrb[0].mxu0 %v1710
        %v3867 = vpop.f32.mrb[0].mxu0
        %v3868 = vadd.f32 %v3699, %v3867
        %v3869 = vpop.f32.mrb[0].mxu0
        %v3870 = vpop.f32.mrb[0].mxu0
        %v3871 = vadd.f32 %v3702, %v3870
        %v3872 = vpop.f32.mrb[0].mxu0
        %3873 = vmatprep.mubr.bf16.mxu0 %v1727
        %3874 = vmatmul.mubr.bf16.gmra.mrb[0].mxu0 %v1726
        %v3875 = vpop.f32.mrb[0].mxu0
        %v3876 = vadd.f32 %v3707, %v3875
        %v3877 = vpop.f32.mrb[0].mxu0
        %v3878 = vpop.f32.mrb[0].mxu0
        %v3879 = vadd.f32 %v3710, %v3878
        %v3880 = vpop.f32.mrb[0].mxu0
        %3881 = vmatprep.mubr.bf16.mxu0 %v1743
        %3882 = vmatmul.mubr.bf16.gmra.mrb[0].mxu0 %v1742
        %v3883 = vpop.f32.mrb[0].mxu0
        %v3884 = vadd.f32 %v3715, %v3883
        %v3885 = vpop.f32.mrb[0].mxu0
        %v3886 = vpop.f32.mrb[0].mxu0
        %v3887 = vadd.f32 %v3718, %v3886
        %v3888 = vpop.f32.mrb[0].mxu0
        %3889 = vmatprep.mubr.bf16.mxu0 %v1759
        %3890 = vmatmul.mubr.bf16.gmra.mrb[0].mxu0 %v1758
        %v3891 = vpop.f32.mrb[0].mxu0
        %v3892 = vadd.f32 %v3723, %v3891
        %v3893 = vpop.f32.mrb[0].mxu0
        %v3894 = vpop.f32.mrb[0].mxu0
        %v3895 = vadd.f32 %v3726, %v3894
        %v3896 = vpop.f32.mrb[0].mxu0
        %3897 = vmatprep.mubr.bf16.mxu0 %v1775
        %3898 = vmatmul.mubr.bf16.gmra.mrb[0].mxu0 %v1774
        %v3899 = vpop.f32.mrb[0].mxu0
        %v3900 = vadd.f32 %v3731, %v3899
        %v3901 = vpop.f32.mrb[0].mxu0
        %v3902 = vpop.f32.mrb[0].mxu0
        %v3903 = vadd.f32 %v3734, %v3902
        %v3904 = vpop.f32.mrb[0].mxu0
        %3905 = vmatprep.mubr.bf16.mxu0 %v1791
        %3906 = vmatmul.mubr.bf16.gmra.mrb[0].mxu0 %v1790
        %v3907 = vpop.f32.mrb[0].mxu0
        %v3908 = vadd.f32 %v3739, %v3907
        %v3909 = vpop.f32.mrb[0].mxu0
        %v3910 = vpop.f32.mrb[0].mxu0
        %v3911 = vadd.f32 %v3742, %v3910
        %v3912 = vpop.f32.mrb[0].mxu0
        %3913 = vmatprep.mubr.bf16.mxu0 %v1807
        %3914 = vmatmul.mubr.bf16.gmra.mrb[0].mxu0 %v1806
        %v3915 = vpop.f32.mrb[0].mxu0
        %v3916 = vadd.f32 %v3747, %v3915
        %v3917 = vpop.f32.mrb[0].mxu0
        %v3918 = vpop.f32.mrb[0].mxu0
        %v3919 = vadd.f32 %v3750, %v3918
        %v3920 = vpop.f32.mrb[0].mxu0
        %3921 = vmatprep.mubr.bf16.mxu0 %v1823
        %3922 = vmatmul.mubr.bf16.gmra.mrb[0].mxu0 %v1822
        %v3923 = vpop.f32.mrb[0].mxu0
        %v3924 = vadd.f32 %v3755, %v3923
        %v3925 = vpop.f32.mrb[0].mxu0
        %v3926 = vpop.f32.mrb[0].mxu0
        %v3927 = vadd.f32 %v3758, %v3926
        %v3928 = vpop.f32.mrb[0].mxu0
        %3929 = vmatprep.mubr.bf16.mxu0 %v1839
        %3930 = vmatmul.mubr.bf16.gmra.mrb[0].mxu0 %v1838
        %v3931 = vpop.f32.mrb[0].mxu0
        %v3932 = vadd.f32 %v3763, %v3931
        %v3933 = vpop.f32.mrb[0].mxu0
        %v3934 = vpop.f32.mrb[0].mxu0
        %v3935 = vadd.f32 %v3766, %v3934
        %v3936 = vpop.f32.mrb[0].mxu0
        %3937 = vmatprep.mubr.bf16.mxu0 %v1855
        %3938 = vmatmul.mubr.bf16.gmra.mrb[0].mxu0 %v1854
        %v3939 = vpop.f32.mrb[0].mxu0
        %v3940 = vadd.f32 %v3771, %v3939
        %v3941 = vpop.f32.mrb[0].mxu0
        %v3942 = vpop.f32.mrb[0].mxu0
        %v3943 = vadd.f32 %v3774, %v3942
        %v3944 = vpop.f32.mrb[0].mxu0
        %3945 = vmatprep.mubr.bf16.mxu0 %v1871
        %3946 = vmatmul.mubr.bf16.gmra.mrb[0].mxu0 %v1870
        %v3947 = vpop.f32.mrb[0].mxu0
        %v3948 = vadd.f32 %v3779, %v3947
        %v3949 = vpop.f32.mrb[0].mxu0
        %v3950 = vpop.f32.mrb[0].mxu0
        %v3951 = vadd.f32 %v3782, %v3950
        %v3952 = vpop.f32.mrb[0].mxu0
        %3953 = vmatprep.mubr.bf16.mxu0 %v1887
        %3954 = vmatmul.mubr.bf16.gmra.mrb[0].mxu0 %v1886
        %v3955 = vpop.f32.mrb[0].mxu0
        %v3956 = vadd.f32 %v3787, %v3955
        %v3957 = vpop.f32.mrb[0].mxu0
        %v3958 = vpop.f32.mrb[0].mxu0
        %v3959 = vadd.f32 %v3790, %v3958
        %v3960 = vpop.f32.mrb[0].mxu0
        %3961 = vmatprep.mubr.bf16.mxu0 %v1903
        %3962 = vmatmul.mubr.bf16.gmra.mrb[0].mxu0 %v1902
        %v3963 = vpop.f32.mrb[0].mxu0
        %v3964 = vadd.f32 %v3795, %v3963
        %v3965 = vpop.f32.mrb[0].mxu0
        %v3966 = vpop.f32.mrb[0].mxu0
        %v3967 = vadd.f32 %v3798, %v3966
        %v3968 = vpop.f32.mrb[0].mxu0
        %3969 = vmatprep.mubr.bf16.mxu0 %v1919
        %3970 = vmatmul.mubr.bf16.gmra.mrb[0].mxu0 %v1918
        %v3971 = vpop.f32.mrb[0].mxu0
        %v3972 = vadd.f32 %v3803, %v3971
        %v3973 = vpop.f32.mrb[0].mxu0
        %v3974 = vpop.f32.mrb[0].mxu0
        %v3975 = vadd.f32 %v3806, %v3974
        %v3976 = vpop.f32.mrb[0].mxu0
        %3977 = vdwg.mxu0
        %3978 = vmatprep.subr.bf16.mxu0 0
        %3979 = vmatpush1.bf16.msra.mxu0 %v2804
        %3980 = vmatprep.subr.bf16.mxu0 0
        %3981 = vmatpush1.bf16.msra.mxu0 %v2805
        %3982 = vmatprep.subr.bf16.mxu0 0
        %3983 = vmatpush1.bf16.msra.mxu0 %v2806
        %3984 = vmatprep.subr.bf16.mxu0 0
        %3985 = vmatpush1.bf16.msra.mxu0 %v2807
        %3986 = vmatprep.subr.bf16.mxu0 0
        %3987 = vmatpush1.bf16.msra.mxu0 %v2808
        %3988 = vmatprep.subr.bf16.mxu0 0
        %3989 = vmatpush1.bf16.msra.mxu0 %v2809
        %3990 = vmatprep.subr.bf16.mxu0 0
        %3991 = vmatpush1.bf16.msra.mxu0 %v2810
        %3992 = vmatprep.subr.bf16.mxu0 0
        %3993 = vmatpush1.bf16.msra.mxu0 %v2811
        %3994 = vmatprep.subr.bf16.mxu0 0
        %3995 = vmatpush1.bf16.msra.mxu0 %v2812
        %3996 = vmatprep.subr.bf16.mxu0 0
        %3997 = vmatpush1.bf16.msra.mxu0 %v2813
        %3998 = vmatprep.subr.bf16.mxu0 0
        %3999 = vmatpush1.bf16.msra.mxu0 %v2814
        %4000 = vmatprep.subr.bf16.mxu0 0
        %4001 = vmatpush1.bf16.msra.mxu0 %v2815
        %4002 = vmatprep.subr.bf16.mxu0 0
        %4003 = vmatpush1.bf16.msra.mxu0 %v2816
        %4004 = vmatprep.subr.bf16.mxu0 0
        %4005 = vmatpush1.bf16.msra.mxu0 %v2817
        %4006 = vmatprep.subr.bf16.mxu0 0
        %4007 = vmatpush1.bf16.msra.mxu0 %v2818
        %4008 = vmatprep.subr.bf16.mxu0 0
        %4009 = vmatpush1.bf16.msra.mxu0 %v2819
        %4010 = vmatprep.mubr.bf16.mxu0 %v1665
        %4011 = vmatmul.mubr.bf16.gmra.mrb[0].mxu0 %v1664
        %v4012 = vpop.f32.mrb[0].mxu0
        %v4013 = vadd.f32 %v3844, %v4012
        %v4014 = vpop.f32.mrb[0].mxu0
        %v4015 = vpop.f32.mrb[0].mxu0
        %v4016 = vadd.f32 %v3847, %v4015
        %v4017 = vpop.f32.mrb[0].mxu0
        %4018 = vmatprep.mubr.bf16.mxu0 %v1681
        %4019 = vmatmul.mubr.bf16.gmra.mrb[0].mxu0 %v1680
        %v4020 = vpop.f32.mrb[0].mxu0
        %v4021 = vadd.f32 %v3852, %v4020
        %v4022 = vpop.f32.mrb[0].mxu0
        %v4023 = vpop.f32.mrb[0].mxu0
        %v4024 = vadd.f32 %v3855, %v4023
        %v4025 = vpop.f32.mrb[0].mxu0
        %4026 = vmatprep.mubr.bf16.mxu0 %v1697
        %4027 = vmatmul.mubr.bf16.gmra.mrb[0].mxu0 %v1696
        %v4028 = vpop.f32.mrb[0].mxu0
        %v4029 = vadd.f32 %v3860, %v4028
        %v4030 = vpop.f32.mrb[0].mxu0
        %v4031 = vpop.f32.mrb[0].mxu0
        %v4032 = vadd.f32 %v3863, %v4031
        %v4033 = vpop.f32.mrb[0].mxu0
        %4034 = vmatprep.mubr.bf16.mxu0 %v1713
        %4035 = vmatmul.mubr.bf16.gmra.mrb[0].mxu0 %v1712
        %v4036 = vpop.f32.mrb[0].mxu0
        %v4037 = vadd.f32 %v3868, %v4036
        %v4038 = vpop.f32.mrb[0].mxu0
        %v4039 = vpop.f32.mrb[0].mxu0
        %v4040 = vadd.f32 %v3871, %v4039
        %v4041 = vpop.f32.mrb[0].mxu0
        %4042 = vmatprep.mubr.bf16.mxu0 %v1729
        %4043 = vmatmul.mubr.bf16.gmra.mrb[0].mxu0 %v1728
        %v4044 = vpop.f32.mrb[0].mxu0
        %v4045 = vadd.f32 %v3876, %v4044
        %v4046 = vpop.f32.mrb[0].mxu0
        %v4047 = vpop.f32.mrb[0].mxu0
        %v4048 = vadd.f32 %v3879, %v4047
        %v4049 = vpop.f32.mrb[0].mxu0
        %4050 = vmatprep.mubr.bf16.mxu0 %v1745
        %4051 = vmatmul.mubr.bf16.gmra.mrb[0].mxu0 %v1744
        %v4052 = vpop.f32.mrb[0].mxu0
        %v4053 = vadd.f32 %v3884, %v4052
        %v4054 = vpop.f32.mrb[0].mxu0
        %v4055 = vpop.f32.mrb[0].mxu0
        %v4056 = vadd.f32 %v3887, %v4055
        %v4057 = vpop.f32.mrb[0].mxu0
        %4058 = vmatprep.mubr.bf16.mxu0 %v1761
        %4059 = vmatmul.mubr.bf16.gmra.mrb[0].mxu0 %v1760
        %v4060 = vpop.f32.mrb[0].mxu0
        %v4061 = vadd.f32 %v3892, %v4060
        %v4062 = vpop.f32.mrb[0].mxu0
        %v4063 = vpop.f32.mrb[0].mxu0
        %v4064 = vadd.f32 %v3895, %v4063
        %v4065 = vpop.f32.mrb[0].mxu0
        %4066 = vmatprep.mubr.bf16.mxu0 %v1777
        %4067 = vmatmul.mubr.bf16.gmra.mrb[0].mxu0 %v1776
        %v4068 = vpop.f32.mrb[0].mxu0
        %v4069 = vadd.f32 %v3900, %v4068
        %v4070 = vpop.f32.mrb[0].mxu0
        %v4071 = vpop.f32.mrb[0].mxu0
        %v4072 = vadd.f32 %v3903, %v4071
        %v4073 = vpop.f32.mrb[0].mxu0
        %4074 = vmatprep.mubr.bf16.mxu0 %v1793
        %4075 = vmatmul.mubr.bf16.gmra.mrb[0].mxu0 %v1792
        %v4076 = vpop.f32.mrb[0].mxu0
        %v4077 = vadd.f32 %v3908, %v4076
        %v4078 = vpop.f32.mrb[0].mxu0
        %v4079 = vpop.f32.mrb[0].mxu0
        %v4080 = vadd.f32 %v3911, %v4079
        %v4081 = vpop.f32.mrb[0].mxu0
        %4082 = vmatprep.mubr.bf16.mxu0 %v1809
        %4083 = vmatmul.mubr.bf16.gmra.mrb[0].mxu0 %v1808
        %v4084 = vpop.f32.mrb[0].mxu0
        %v4085 = vadd.f32 %v3916, %v4084
        %v4086 = vpop.f32.mrb[0].mxu0
        %v4087 = vpop.f32.mrb[0].mxu0
        %v4088 = vadd.f32 %v3919, %v4087
        %v4089 = vpop.f32.mrb[0].mxu0
        %4090 = vmatprep.mubr.bf16.mxu0 %v1825
        %4091 = vmatmul.mubr.bf16.gmra.mrb[0].mxu0 %v1824
        %v4092 = vpop.f32.mrb[0].mxu0
        %v4093 = vadd.f32 %v3924, %v4092
        %v4094 = vpop.f32.mrb[0].mxu0
        %v4095 = vpop.f32.mrb[0].mxu0
        %v4096 = vadd.f32 %v3927, %v4095
        %v4097 = vpop.f32.mrb[0].mxu0
        %4098 = vmatprep.mubr.bf16.mxu0 %v1841
        %4099 = vmatmul.mubr.bf16.gmra.mrb[0].mxu0 %v1840
        %v4100 = vpop.f32.mrb[0].mxu0
        %v4101 = vadd.f32 %v3932, %v4100
        %v4102 = vpop.f32.mrb[0].mxu0
        %v4103 = vpop.f32.mrb[0].mxu0
        %v4104 = vadd.f32 %v3935, %v4103
        %v4105 = vpop.f32.mrb[0].mxu0
        %4106 = vmatprep.mubr.bf16.mxu0 %v1857
        %4107 = vmatmul.mubr.bf16.gmra.mrb[0].mxu0 %v1856
        %v4108 = vpop.f32.mrb[0].mxu0
        %v4109 = vadd.f32 %v3940, %v4108
        %v4110 = vpop.f32.mrb[0].mxu0
        %v4111 = vpop.f32.mrb[0].mxu0
        %v4112 = vadd.f32 %v3943, %v4111
        %v4113 = vpop.f32.mrb[0].mxu0
        %4114 = vmatprep.mubr.bf16.mxu0 %v1873
        %4115 = vmatmul.mubr.bf16.gmra.mrb[0].mxu0 %v1872
        %v4116 = vpop.f32.mrb[0].mxu0
        %v4117 = vadd.f32 %v3948, %v4116
        %v4118 = vpop.f32.mrb[0].mxu0
        %v4119 = vpop.f32.mrb[0].mxu0
        %v4120 = vadd.f32 %v3951, %v4119
        %v4121 = vpop.f32.mrb[0].mxu0
        %4122 = vmatprep.mubr.bf16.mxu0 %v1889
        %4123 = vmatmul.mubr.bf16.gmra.mrb[0].mxu0 %v1888
        %v4124 = vpop.f32.mrb[0].mxu0
        %v4125 = vadd.f32 %v3956, %v4124
        %v4126 = vpop.f32.mrb[0].mxu0
        %v4127 = vpop.f32.mrb[0].mxu0
        %v4128 = vadd.f32 %v3959, %v4127
        %v4129 = vpop.f32.mrb[0].mxu0
        %4130 = vmatprep.mubr.bf16.mxu0 %v1905
        %4131 = vmatmul.mubr.bf16.gmra.mrb[0].mxu0 %v1904
        %v4132 = vpop.f32.mrb[0].mxu0
        %v4133 = vadd.f32 %v3964, %v4132
        %v4134 = vpop.f32.mrb[0].mxu0
        %v4135 = vpop.f32.mrb[0].mxu0
        %v4136 = vadd.f32 %v3967, %v4135
        %v4137 = vpop.f32.mrb[0].mxu0
        %4138 = vmatprep.mubr.bf16.mxu0 %v1921
        %4139 = vmatmul.mubr.bf16.gmra.mrb[0].mxu0 %v1920
        %v4140 = vpop.f32.mrb[0].mxu0
        %v4141 = vadd.f32 %v3972, %v4140
        %v4142 = vpop.f32.mrb[0].mxu0
        %v4143 = vpop.f32.mrb[0].mxu0
        %v4144 = vadd.f32 %v3975, %v4143
        %v4145 = vpop.f32.mrb[0].mxu0
        %4146 = vdwg.mxu0
        %4147 = vmatprep.subr.bf16.mxu0 0
        %4148 = vmatpush1.bf16.msra.mxu0 %v2820
        %4149 = vmatprep.subr.bf16.mxu0 0
        %4150 = vmatpush1.bf16.msra.mxu0 %v2821
        %4151 = vmatprep.subr.bf16.mxu0 0
        %4152 = vmatpush1.bf16.msra.mxu0 %v2822
        %4153 = vmatprep.subr.bf16.mxu0 0
        %4154 = vmatpush1.bf16.msra.mxu0 %v2823
        %4155 = vmatprep.subr.bf16.mxu0 0
        %4156 = vmatpush1.bf16.msra.mxu0 %v2824
        %4157 = vmatprep.subr.bf16.mxu0 0
        %4158 = vmatpush1.bf16.msra.mxu0 %v2825
        %4159 = vmatprep.subr.bf16.mxu0 0
        %4160 = vmatpush1.bf16.msra.mxu0 %v2826
        %4161 = vmatprep.subr.bf16.mxu0 0
        %4162 = vmatpush1.bf16.msra.mxu0 %v2827
        %4163 = vmatprep.subr.bf16.mxu0 0
        %4164 = vmatpush1.bf16.msra.mxu0 %v2828
        %4165 = vmatprep.subr.bf16.mxu0 0
        %4166 = vmatpush1.bf16.msra.mxu0 %v2829
        %4167 = vmatprep.subr.bf16.mxu0 0
        %4168 = vmatpush1.bf16.msra.mxu0 %v2830
        %4169 = vmatprep.subr.bf16.mxu0 0
        %4170 = vmatpush1.bf16.msra.mxu0 %v2831
        %4171 = vmatprep.subr.bf16.mxu0 0
        %4172 = vmatpush1.bf16.msra.mxu0 %v2832
        %4173 = vmatprep.subr.bf16.mxu0 0
        %4174 = vmatpush1.bf16.msra.mxu0 %v2833
        %4175 = vmatprep.subr.bf16.mxu0 0
        %4176 = vmatpush1.bf16.msra.mxu0 %v2834
        %4177 = vmatprep.subr.bf16.mxu0 0
        %4178 = vmatpush1.bf16.msra.mxu0 %v2835
        %4179 = vmatprep.mubr.bf16.mxu0 %v1667
        %4180 = vmatmul.mubr.bf16.gmra.mrb[0].mxu0 %v1666
        %v4181 = vpop.f32.mrb[0].mxu0
        %v4182 = vadd.f32 %v4013, %v4181
        %v4183 = vpop.f32.mrb[0].mxu0
        %v4184 = vpop.f32.mrb[0].mxu0
        %v4185 = vadd.f32 %v4016, %v4184
        %v4186 = vpop.f32.mrb[0].mxu0
        %4187 = vmatprep.mubr.bf16.mxu0 %v1683
        %4188 = vmatmul.mubr.bf16.gmra.mrb[0].mxu0 %v1682
        %v4189 = vpop.f32.mrb[0].mxu0
        %v4190 = vadd.f32 %v4021, %v4189
        %v4191 = vpop.f32.mrb[0].mxu0
        %v4192 = vpop.f32.mrb[0].mxu0
        %v4193 = vadd.f32 %v4024, %v4192
        %v4194 = vpop.f32.mrb[0].mxu0
        %4195 = vmatprep.mubr.bf16.mxu0 %v1699
        %4196 = vmatmul.mubr.bf16.gmra.mrb[0].mxu0 %v1698
        %v4197 = vpop.f32.mrb[0].mxu0
        %v4198 = vadd.f32 %v4029, %v4197
        %v4199 = vpop.f32.mrb[0].mxu0
        %v4200 = vpop.f32.mrb[0].mxu0
        %v4201 = vadd.f32 %v4032, %v4200
        %v4202 = vpop.f32.mrb[0].mxu0
        %4203 = vmatprep.mubr.bf16.mxu0 %v1715
        %4204 = vmatmul.mubr.bf16.gmra.mrb[0].mxu0 %v1714
        %v4205 = vpop.f32.mrb[0].mxu0
        %v4206 = vadd.f32 %v4037, %v4205
        %v4207 = vpop.f32.mrb[0].mxu0
        %v4208 = vpop.f32.mrb[0].mxu0
        %v4209 = vadd.f32 %v4040, %v4208
        %v4210 = vpop.f32.mrb[0].mxu0
        %4211 = vmatprep.mubr.bf16.mxu0 %v1731
        %4212 = vmatmul.mubr.bf16.gmra.mrb[0].mxu0 %v1730
        %v4213 = vpop.f32.mrb[0].mxu0
        %v4214 = vadd.f32 %v4045, %v4213
        %v4215 = vpop.f32.mrb[0].mxu0
        %v4216 = vpop.f32.mrb[0].mxu0
        %v4217 = vadd.f32 %v4048, %v4216
        %v4218 = vpop.f32.mrb[0].mxu0
        %4219 = vmatprep.mubr.bf16.mxu0 %v1747
        %4220 = vmatmul.mubr.bf16.gmra.mrb[0].mxu0 %v1746
        %v4221 = vpop.f32.mrb[0].mxu0
        %v4222 = vadd.f32 %v4053, %v4221
        %v4223 = vpop.f32.mrb[0].mxu0
        %v4224 = vpop.f32.mrb[0].mxu0
        %v4225 = vadd.f32 %v4056, %v4224
        %v4226 = vpop.f32.mrb[0].mxu0
        %4227 = vmatprep.mubr.bf16.mxu0 %v1763
        %4228 = vmatmul.mubr.bf16.gmra.mrb[0].mxu0 %v1762
        %v4229 = vpop.f32.mrb[0].mxu0
        %v4230 = vadd.f32 %v4061, %v4229
        %v4231 = vpop.f32.mrb[0].mxu0
        %v4232 = vpop.f32.mrb[0].mxu0
        %v4233 = vadd.f32 %v4064, %v4232
        %v4234 = vpop.f32.mrb[0].mxu0
        %4235 = vmatprep.mubr.bf16.mxu0 %v1779
        %4236 = vmatmul.mubr.bf16.gmra.mrb[0].mxu0 %v1778
        %v4237 = vpop.f32.mrb[0].mxu0
        %v4238 = vadd.f32 %v4069, %v4237
        %v4239 = vpop.f32.mrb[0].mxu0
        %v4240 = vpop.f32.mrb[0].mxu0
        %v4241 = vadd.f32 %v4072, %v4240
        %v4242 = vpop.f32.mrb[0].mxu0
        %4243 = vmatprep.mubr.bf16.mxu0 %v1795
        %4244 = vmatmul.mubr.bf16.gmra.mrb[0].mxu0 %v1794
        %v4245 = vpop.f32.mrb[0].mxu0
        %v4246 = vadd.f32 %v4077, %v4245
        %v4247 = vpop.f32.mrb[0].mxu0
        %v4248 = vpop.f32.mrb[0].mxu0
        %v4249 = vadd.f32 %v4080, %v4248
        %v4250 = vpop.f32.mrb[0].mxu0
        %4251 = vmatprep.mubr.bf16.mxu0 %v1811
        %4252 = vmatmul.mubr.bf16.gmra.mrb[0].mxu0 %v1810
        %v4253 = vpop.f32.mrb[0].mxu0
        %v4254 = vadd.f32 %v4085, %v4253
        %v4255 = vpop.f32.mrb[0].mxu0
        %v4256 = vpop.f32.mrb[0].mxu0
        %v4257 = vadd.f32 %v4088, %v4256
        %v4258 = vpop.f32.mrb[0].mxu0
        %4259 = vmatprep.mubr.bf16.mxu0 %v1827
        %4260 = vmatmul.mubr.bf16.gmra.mrb[0].mxu0 %v1826
        %v4261 = vpop.f32.mrb[0].mxu0
        %v4262 = vadd.f32 %v4093, %v4261
        %v4263 = vpop.f32.mrb[0].mxu0
        %v4264 = vpop.f32.mrb[0].mxu0
        %v4265 = vadd.f32 %v4096, %v4264
        %v4266 = vpop.f32.mrb[0].mxu0
        %4267 = vmatprep.mubr.bf16.mxu0 %v1843
        %4268 = vmatmul.mubr.bf16.gmra.mrb[0].mxu0 %v1842
        %v4269 = vpop.f32.mrb[0].mxu0
        %v4270 = vadd.f32 %v4101, %v4269
        %v4271 = vpop.f32.mrb[0].mxu0
        %v4272 = vpop.f32.mrb[0].mxu0
        %v4273 = vadd.f32 %v4104, %v4272
        %v4274 = vpop.f32.mrb[0].mxu0
        %4275 = vmatprep.mubr.bf16.mxu0 %v1859
        %4276 = vmatmul.mubr.bf16.gmra.mrb[0].mxu0 %v1858
        %v4277 = vpop.f32.mrb[0].mxu0
        %v4278 = vadd.f32 %v4109, %v4277
        %v4279 = vpop.f32.mrb[0].mxu0
        %v4280 = vpop.f32.mrb[0].mxu0
        %v4281 = vadd.f32 %v4112, %v4280
        %v4282 = vpop.f32.mrb[0].mxu0
        %4283 = vmatprep.mubr.bf16.mxu0 %v1875
        %4284 = vmatmul.mubr.bf16.gmra.mrb[0].mxu0 %v1874
        %v4285 = vpop.f32.mrb[0].mxu0
        %v4286 = vadd.f32 %v4117, %v4285
        %v4287 = vpop.f32.mrb[0].mxu0
        %v4288 = vpop.f32.mrb[0].mxu0
        %v4289 = vadd.f32 %v4120, %v4288
        %v4290 = vpop.f32.mrb[0].mxu0
        %4291 = vmatprep.mubr.bf16.mxu0 %v1891
        %4292 = vmatmul.mubr.bf16.gmra.mrb[0].mxu0 %v1890
        %v4293 = vpop.f32.mrb[0].mxu0
        %v4294 = vadd.f32 %v4125, %v4293
        %v4295 = vpop.f32.mrb[0].mxu0
        %v4296 = vpop.f32.mrb[0].mxu0
        %v4297 = vadd.f32 %v4128, %v4296
        %v4298 = vpop.f32.mrb[0].mxu0
        %4299 = vmatprep.mubr.bf16.mxu0 %v1907
        %4300 = vmatmul.mubr.bf16.gmra.mrb[0].mxu0 %v1906
        %v4301 = vpop.f32.mrb[0].mxu0
        %v4302 = vadd.f32 %v4133, %v4301
        %v4303 = vpop.f32.mrb[0].mxu0
        %v4304 = vpop.f32.mrb[0].mxu0
        %v4305 = vadd.f32 %v4136, %v4304
        %v4306 = vpop.f32.mrb[0].mxu0
        %4307 = vmatprep.mubr.bf16.mxu0 %v1923
        %4308 = vmatmul.mubr.bf16.gmra.mrb[0].mxu0 %v1922
        %v4309 = vpop.f32.mrb[0].mxu0
        %v4310 = vadd.f32 %v4141, %v4309
        %v4311 = vpop.f32.mrb[0].mxu0
        %v4312 = vpop.f32.mrb[0].mxu0
        %v4313 = vadd.f32 %v4144, %v4312
        %v4314 = vpop.f32.mrb[0].mxu0
        %4315 = vdwg.mxu0
        %v4316 = vmax.f32 %v4182, 0.0
        %v4317 = vmax.f32 %v4185, 0.0
        %v4318 = vmax.f32 %v4190, 0.0
        %v4319 = vmax.f32 %v4193, 0.0
        %v4320 = vmax.f32 %v4198, 0.0
        %v4321 = vmax.f32 %v4201, 0.0
        %v4322 = vmax.f32 %v4206, 0.0
        %v4323 = vmax.f32 %v4209, 0.0
        %v4324 = vmax.f32 %v4214, 0.0
        %v4325 = vmax.f32 %v4217, 0.0
        %v4326 = vmax.f32 %v4222, 0.0
        %v4327 = vmax.f32 %v4225, 0.0
        %v4328 = vmax.f32 %v4230, 0.0
        %v4329 = vmax.f32 %v4233, 0.0
        %v4330 = vmax.f32 %v4238, 0.0
        %v4331 = vmax.f32 %v4241, 0.0
        %v4332 = vmax.f32 %v4246, 0.0
        %v4333 = vmax.f32 %v4249, 0.0
        %v4334 = vmax.f32 %v4254, 0.0
        %v4335 = vmax.f32 %v4257, 0.0
        %v4336 = vmax.f32 %v4262, 0.0
        %v4337 = vmax.f32 %v4265, 0.0
        %v4338 = vmax.f32 %v4270, 0.0
        %v4339 = vmax.f32 %v4273, 0.0
        %v4340 = vmax.f32 %v4278, 0.0
        %v4341 = vmax.f32 %v4281, 0.0
        %v4342 = vmax.f32 %v4286, 0.0
        %v4343 = vmax.f32 %v4289, 0.0
        %v4344 = vmax.f32 %v4294, 0.0
        %v4345 = vmax.f32 %v4297, 0.0
        %v4346 = vmax.f32 %v4302, 0.0
        %v4347 = vmax.f32 %v4305, 0.0
        %v4348 = vmax.f32 %v4310, 0.0
        %v4349 = vmax.f32 %v4313, 0.0
        %v4350 = vpack.c.bf16 %v4317, %v4316
        %v4351 = vpack.c.bf16 %v4319, %v4318
        %v4352 = vpack.c.bf16 %v4321, %v4320
        %v4353 = vpack.c.bf16 %v4323, %v4322
        %v4354 = vpack.c.bf16 %v4325, %v4324
        %v4355 = vpack.c.bf16 %v4327, %v4326
        %v4356 = vpack.c.bf16 %v4329, %v4328
        %v4357 = vpack.c.bf16 %v4331, %v4330
        %v4358 = vpack.c.bf16 %v4333, %v4332
        %v4359 = vpack.c.bf16 %v4335, %v4334
        %v4360 = vpack.c.bf16 %v4337, %v4336
        %v4361 = vpack.c.bf16 %v4339, %v4338
        %v4362 = vpack.c.bf16 %v4341, %v4340
        %v4363 = vpack.c.bf16 %v4343, %v4342
        %v4364 = vpack.c.bf16 %v4345, %v4344
        %v4365 = vpack.c.bf16 %v4347, %v4346
        %v4366 = vpack.c.bf16 %v4349, %v4348
        %v4367 = vld [vmem:[#allocation8] sm:$0xf]
        %v4368 = vld [vmem:[#allocation8 + $0x4] sm:$0xf]
        %v4369 = vld [vmem:[#allocation8 + $0x8] sm:$0xf]
        %v4370 = vld [vmem:[#allocation8 + $0xc] sm:$0xf]
        %v4371 = vld [vmem:[#allocation8 + $0x10] sm:$0xf]
        %v4372 = vld [vmem:[#allocation8 + $0x14] sm:$0xf]
        %v4373 = vld [vmem:[#allocation8 + $0x18] sm:$0xf]
        %v4374 = vld [vmem:[#allocation8 + $0x1c] sm:$0xf]
        %v4375 = vld [vmem:[#allocation8 + $0x20] sm:$0xf]
        %v4376 = vld [vmem:[#allocation8 + $0x24] sm:$0xf]
        %v4377 = vld [vmem:[#allocation8 + $0x28] sm:$0xf]
        %v4378 = vld [vmem:[#allocation8 + $0x2c] sm:$0xf]
        %v4379 = vld [vmem:[#allocation8 + $0x30] sm:$0xf]
        %v4380 = vld [vmem:[#allocation8 + $0x34] sm:$0xf]
        %v4381 = vld [vmem:[#allocation8 + $0x38] sm:$0xf]
        %v4382 = vld [vmem:[#allocation8 + $0x3c] sm:$0xf]
        %v4383 = vld [vmem:[#allocation10] sm:$0x1]
        %v4385 = vlaneseq
        %v4386 = vshrl.u32 %v4385, 7
        %v4387 = vsub.s32 0, %v4386
        %v4388 = vrot.slane %v4383, %v4387
        %v4406 = vunpack.c.l.b16 %v4367
        %v4407 = vunpack.c.l.b16 %v4368
        %v4408 = vunpack.c.l.b16 %v4369
        %v4409 = vunpack.c.l.b16 %v4370
        %v4410 = vunpack.c.l.b16 %v4371
        %v4411 = vunpack.c.l.b16 %v4372
        %v4412 = vunpack.c.l.b16 %v4373
        %v4413 = vunpack.c.l.b16 %v4374
        %v4414 = vunpack.c.l.b16 %v4375
        %v4415 = vunpack.c.l.b16 %v4376
        %v4416 = vunpack.c.l.b16 %v4377
        %v4417 = vunpack.c.l.b16 %v4378
        %v4418 = vunpack.c.l.b16 %v4379
        %v4419 = vunpack.c.l.b16 %v4380
        %v4420 = vunpack.c.l.b16 %v4381
        %v4421 = vunpack.c.l.b16 %v4382
        %v4422 = vpack.c.b16 %v4407, %v4406
        %v4423 = vpack.c.b16 %v4409, %v4408
        %v4424 = vpack.c.b16 %v4411, %v4410
        %v4425 = vpack.c.b16 %v4413, %v4412
        %v4426 = vpack.c.b16 %v4415, %v4414
        %v4427 = vpack.c.b16 %v4417, %v4416
        %v4428 = vpack.c.b16 %v4419, %v4418
        %v4429 = vpack.c.b16 %v4421, %v4420
        %4438 = vmatprep.subr.bf16.mxu0 0
        %4439 = vmatpush1.bf16.msra.mxu0 %v4422
        %4440 = vmatprep.subr.bf16.mxu0 0
        %4441 = vmatpush1.bf16.msra.mxu0 %v4423
        %4442 = vmatprep.subr.bf16.mxu0 0
        %4443 = vmatpush1.bf16.msra.mxu0 %v4424
        %4444 = vmatprep.subr.bf16.mxu0 0
        %4445 = vmatpush1.bf16.msra.mxu0 %v4425
        %4446 = vmatprep.subr.bf16.mxu0 0
        %4447 = vmatpush1.bf16.msra.mxu0 %v4426
        %4448 = vmatprep.subr.bf16.mxu0 0
        %4449 = vmatpush1.bf16.msra.mxu0 %v4427
        %4450 = vmatprep.subr.bf16.mxu0 0
        %4451 = vmatpush1.bf16.msra.mxu0 %v4428
        %4452 = vmatprep.subr.bf16.mxu0 0
        %4453 = vmatpush1.bf16.msra.mxu0 %v4429
        %4454 = vmatprep.subr.bf16.mxu0 0
        %4455 = vmatpush1.bf16.msra.mxu0 0
        %4456 = vmatprep.subr.bf16.mxu0 0
        %4457 = vmatpush1.bf16.msra.mxu0 0
        %4458 = vmatprep.subr.bf16.mxu0 0
        %4459 = vmatpush1.bf16.msra.mxu0 0
        %4460 = vmatprep.subr.bf16.mxu0 0
        %4461 = vmatpush1.bf16.msra.mxu0 0
        %4462 = vmatprep.subr.bf16.mxu0 0
        %4463 = vmatpush1.bf16.msra.mxu0 0
        %4464 = vmatprep.subr.bf16.mxu0 0
        %4465 = vmatpush1.bf16.msra.mxu0 0
        %4466 = vmatprep.subr.bf16.mxu0 0
        %4467 = vmatpush1.bf16.msra.mxu0 0
        %4468 = vmatprep.subr.bf16.mxu0 0
        %4469 = vmatpush1.bf16.msra.mxu0 0
        %4470 = vmatprep.mubr.bf16.mxu0 0
        %4471 = vmatmul.mubr.bf16.gmra.mrb[0].mxu0 %v4350
        %v4472 = vpop.f32.mrb[0].mxu0
        %v4473 = vadd.f32 %v4388, %v4472
        %v4474 = vpop.f32.mrb[0].mxu0
        %v4475 = vpop.f32.mrb[0].mxu0
        %v4476 = vadd.f32 %v4388, %v4475
        %v4477 = vpop.f32.mrb[0].mxu0
        %4478 = vmatprep.mubr.bf16.mxu0 0
        %4479 = vmatmul.mubr.bf16.gmra.mrb[0].mxu0 %v4351
        %v4480 = vpop.f32.mrb[0].mxu0
        %v4481 = vadd.f32 %v4388, %v4480
        %v4482 = vpop.f32.mrb[0].mxu0
        %v4483 = vpop.f32.mrb[0].mxu0
        %v4484 = vadd.f32 %v4388, %v4483
        %v4485 = vpop.f32.mrb[0].mxu0
        %4486 = vmatprep.mubr.bf16.mxu0 0
        %4487 = vmatmul.mubr.bf16.gmra.mrb[0].mxu0 %v4352
        %v4488 = vpop.f32.mrb[0].mxu0
        %v4489 = vadd.f32 %v4388, %v4488
        %v4490 = vpop.f32.mrb[0].mxu0
        %v4491 = vpop.f32.mrb[0].mxu0
        %v4492 = vadd.f32 %v4388, %v4491
        %v4493 = vpop.f32.mrb[0].mxu0
        %4494 = vmatprep.mubr.bf16.mxu0 0
        %4495 = vmatmul.mubr.bf16.gmra.mrb[0].mxu0 %v4353
        %v4496 = vpop.f32.mrb[0].mxu0
        %v4497 = vadd.f32 %v4388, %v4496
        %v4498 = vpop.f32.mrb[0].mxu0
        %v4499 = vpop.f32.mrb[0].mxu0
        %v4500 = vadd.f32 %v4388, %v4499
        %v4501 = vpop.f32.mrb[0].mxu0
        %4502 = vmatprep.mubr.bf16.mxu0 0
        %4503 = vmatmul.mubr.bf16.gmra.mrb[0].mxu0 %v4354
        %v4504 = vpop.f32.mrb[0].mxu0
        %v4505 = vadd.f32 %v4388, %v4504
        %v4506 = vpop.f32.mrb[0].mxu0
        %v4507 = vpop.f32.mrb[0].mxu0
        %v4508 = vadd.f32 %v4388, %v4507
        %v4509 = vpop.f32.mrb[0].mxu0
        %4510 = vmatprep.mubr.bf16.mxu0 0
        %4511 = vmatmul.mubr.bf16.gmra.mrb[0].mxu0 %v4355
        %v4512 = vpop.f32.mrb[0].mxu0
        %v4513 = vadd.f32 %v4388, %v4512
        %v4514 = vpop.f32.mrb[0].mxu0
        %v4515 = vpop.f32.mrb[0].mxu0
        %v4516 = vadd.f32 %v4388, %v4515
        %v4517 = vpop.f32.mrb[0].mxu0
        %4518 = vmatprep.mubr.bf16.mxu0 0
        %4519 = vmatmul.mubr.bf16.gmra.mrb[0].mxu0 %v4356
        %v4520 = vpop.f32.mrb[0].mxu0
        %v4521 = vadd.f32 %v4388, %v4520
        %v4522 = vpop.f32.mrb[0].mxu0
        %v4523 = vpop.f32.mrb[0].mxu0
        %v4524 = vadd.f32 %v4388, %v4523
        %v4525 = vpop.f32.mrb[0].mxu0
        %4526 = vmatprep.mubr.bf16.mxu0 0
        %4527 = vmatmul.mubr.bf16.gmra.mrb[0].mxu0 %v4357
        %v4528 = vpop.f32.mrb[0].mxu0
        %v4529 = vadd.f32 %v4388, %v4528
        %v4530 = vpop.f32.mrb[0].mxu0
        %v4531 = vpop.f32.mrb[0].mxu0
        %v4532 = vadd.f32 %v4388, %v4531
        %v4533 = vpop.f32.mrb[0].mxu0
        %4534 = vmatprep.mubr.bf16.mxu0 0
        %4535 = vmatmul.mubr.bf16.gmra.mrb[0].mxu0 %v4358
        %v4536 = vpop.f32.mrb[0].mxu0
        %v4537 = vadd.f32 %v4388, %v4536
        %v4538 = vpop.f32.mrb[0].mxu0
        %v4539 = vpop.f32.mrb[0].mxu0
        %v4540 = vadd.f32 %v4388, %v4539
        %v4541 = vpop.f32.mrb[0].mxu0
        %4542 = vmatprep.mubr.bf16.mxu0 0
        %4543 = vmatmul.mubr.bf16.gmra.mrb[0].mxu0 %v4359
        %v4544 = vpop.f32.mrb[0].mxu0
        %v4545 = vadd.f32 %v4388, %v4544
        %v4546 = vpop.f32.mrb[0].mxu0
        %v4547 = vpop.f32.mrb[0].mxu0
        %v4548 = vadd.f32 %v4388, %v4547
        %v4549 = vpop.f32.mrb[0].mxu0
        %4550 = vmatprep.mubr.bf16.mxu0 0
        %4551 = vmatmul.mubr.bf16.gmra.mrb[0].mxu0 %v4360
        %v4552 = vpop.f32.mrb[0].mxu0
        %v4553 = vadd.f32 %v4388, %v4552
        %v4554 = vpop.f32.mrb[0].mxu0
        %v4555 = vpop.f32.mrb[0].mxu0
        %v4556 = vadd.f32 %v4388, %v4555
        %v4557 = vpop.f32.mrb[0].mxu0
        %4558 = vmatprep.mubr.bf16.mxu0 0
        %4559 = vmatmul.mubr.bf16.gmra.mrb[0].mxu0 %v4361
        %v4560 = vpop.f32.mrb[0].mxu0
        %v4561 = vadd.f32 %v4388, %v4560
        %v4562 = vpop.f32.mrb[0].mxu0
        %v4563 = vpop.f32.mrb[0].mxu0
        %v4564 = vadd.f32 %v4388, %v4563
        %v4565 = vpop.f32.mrb[0].mxu0
        %4566 = vmatprep.mubr.bf16.mxu0 0
        %4567 = vmatmul.mubr.bf16.gmra.mrb[0].mxu0 %v4362
        %v4568 = vpop.f32.mrb[0].mxu0
        %v4569 = vadd.f32 %v4388, %v4568
        %v4570 = vpop.f32.mrb[0].mxu0
        %v4571 = vpop.f32.mrb[0].mxu0
        %v4572 = vadd.f32 %v4388, %v4571
        %v4573 = vpop.f32.mrb[0].mxu0
        %4574 = vmatprep.mubr.bf16.mxu0 0
        %4575 = vmatmul.mubr.bf16.gmra.mrb[0].mxu0 %v4363
        %v4576 = vpop.f32.mrb[0].mxu0
        %v4577 = vadd.f32 %v4388, %v4576
        %v4578 = vpop.f32.mrb[0].mxu0
        %v4579 = vpop.f32.mrb[0].mxu0
        %v4580 = vadd.f32 %v4388, %v4579
        %v4581 = vpop.f32.mrb[0].mxu0
        %4582 = vmatprep.mubr.bf16.mxu0 0
        %4583 = vmatmul.mubr.bf16.gmra.mrb[0].mxu0 %v4364
        %v4584 = vpop.f32.mrb[0].mxu0
        %v4585 = vadd.f32 %v4388, %v4584
        %v4586 = vpop.f32.mrb[0].mxu0
        %v4587 = vpop.f32.mrb[0].mxu0
        %v4588 = vadd.f32 %v4388, %v4587
        %v4589 = vpop.f32.mrb[0].mxu0
        %4590 = vmatprep.mubr.bf16.mxu0 0
        %4591 = vmatmul.mubr.bf16.gmra.mrb[0].mxu0 %v4365
        %v4592 = vpop.f32.mrb[0].mxu0
        %v4593 = vadd.f32 %v4388, %v4592
        %v4594 = vpop.f32.mrb[0].mxu0
        %v4595 = vpop.f32.mrb[0].mxu0
        %v4596 = vadd.f32 %v4388, %v4595
        %v4597 = vpop.f32.mrb[0].mxu0
        %4598 = vmatprep.mubr.bf16.mxu0 0
        %4599 = vmatmul.mubr.bf16.gmra.mrb[0].mxu0 %v4366
        %v4600 = vpop.f32.mrb[0].mxu0
        %v4601 = vadd.f32 %v4388, %v4600
        %v4602 = vpop.f32.mrb[0].mxu0
        %v4603 = vpop.f32.mrb[0].mxu0
        %v4604 = vadd.f32 %v4388, %v4603
        %v4605 = vpop.f32.mrb[0].mxu0
        %4606 = vdwg.mxu0
        %4607 = vst [vmem:[%s297] sm:$0xff] %v4473
        %4608 = vst [vmem:[%s297 + $0x8] sm:$0xff] %v4476
        %4609 = vst [vmem:[%s297 + $0x10] sm:$0xff] %v4481
        %4610 = vst [vmem:[%s297 + $0x18] sm:$0xff] %v4484
        %4611 = vst [vmem:[%s297 + $0x20] sm:$0xff] %v4489
        %4612 = vst [vmem:[%s297 + $0x28] sm:$0xff] %v4492
        %4613 = vst [vmem:[%s297 + $0x30] sm:$0xff] %v4497
        %4614 = vst [vmem:[%s297 + $0x38] sm:$0xff] %v4500
        %4615 = vst [vmem:[%s297 + $0x40] sm:$0xff] %v4505
        %4616 = vst [vmem:[%s297 + $0x48] sm:$0xff] %v4508
        %4617 = vst [vmem:[%s297 + $0x50] sm:$0xff] %v4513
        %4618 = vst [vmem:[%s297 + $0x58] sm:$0xff] %v4516
        %4619 = vst [vmem:[%s297 + $0x60] sm:$0xff] %v4521
        %4620 = vst [vmem:[%s297 + $0x68] sm:$0xff] %v4524
        %4621 = vst [vmem:[%s297 + $0x70] sm:$0xff] %v4529
        %4622 = vst [vmem:[%s297 + $0x78] sm:$0xff] %v4532
        %4623 = vst [vmem:[%s297 + $0x80] sm:$0xff] %v4537
        %4624 = vst [vmem:[%s297 + $0x88] sm:$0xff] %v4540
        %4625 = vst [vmem:[%s297 + $0x90] sm:$0xff] %v4545
        %4626 = vst [vmem:[%s297 + $0x98] sm:$0xff] %v4548
        %4627 = vst [vmem:[%s297 + $0xa0] sm:$0xff] %v4553
        %4628 = vst [vmem:[%s297 + $0xa8] sm:$0xff] %v4556
        %4629 = vst [vmem:[%s297 + $0xb0] sm:$0xff] %v4561
        %4630 = vst [vmem:[%s297 + $0xb8] sm:$0xff] %v4564
        %4631 = vst [vmem:[%s297 + $0xc0] sm:$0xff] %v4569
        %4632 = vst [vmem:[%s297 + $0xc8] sm:$0xff] %v4572
        %4633 = vst [vmem:[%s297 + $0xd0] sm:$0xff] %v4577
        %4634 = vst [vmem:[%s297 + $0xd8] sm:$0xff] %v4580
        %4635 = vst [vmem:[%s297 + $0xe0] sm:$0xff] %v4585
        %4636 = vst [vmem:[%s297 + $0xe8] sm:$0xff] %v4588
        %4637 = vst [vmem:[%s297 + $0xf0] sm:$0xff] %v4593
        %4638 = vst [vmem:[%s297 + $0xf8] sm:$0xff] %v4596
        %4639 = vst [vmem:[%s297 + $0x100] sm:$0xff] %v4601
        %4640 = vst [vmem:[%s297 + $0x108] sm:$0xff] %v4604
        %s4641 = sand.u32 %s142, 1
        %s4642 = scalar_lea.sflag [#allocation4], %s4641
        %s4643 = sand.u32 %s142, 1
        %s4644 = smul.addr %s4643, 272
        %s4645 = scalar_lea.vmem [#allocation11], %s4644
        // Predicated region
        $region61: #{tpu_custom_call.1} parent=39 // pred_check
          %p4646 = pneg %p152
        $region62: #{tpu_custom_call.1} parent=39 // pred_check_branch
          %4648 = sbr.rel (%p4646) target = $region64
        $region63: #{tpu_custom_call.1} parent=39 // pred_region
          %s4649 = smul.u32 34, %s24
          %s4651 = ssub.s32 4352, 4352
          %4652 = vsyncadd %s4642, %s4651
          %s4653 = smul.addr %s4649, 128
          %s4654 = scalar_lea.hbm %s5, %s4653
          %s4655 = sshll.u32 %s4645, 4
          %s4656 = int_to_ptr.vmem [resolvable:$true] %s4655
          %4661 = dma.vmem_to_hbm [thread:$0]  %s4656, 4352, %s4654, %s4642, 128, 128, 8
        $region64: #{tpu_custom_call.1} parent=39 // pred_fallthru
          _
      $region40: #{tpu_custom_call.1} parent=5 // pred_fallthru
        _
      %p4662 = scmp.le.s32.totalorder 2, %s19
      // Predicated region
      $region65: #{tpu_custom_call.1} parent=5 // pred_check
        %p4663 = pneg %p4662
      $region66: #{tpu_custom_call.1} parent=5 // pred_check_branch
        %4665 = sbr.rel (%p4663) target = $region68
      $region67: #{tpu_custom_call.1} parent=5 // pred_region
        %s4666 = ssub.s32 %s19, 2
        // Predicated region
        $region69: #{tpu_custom_call.1} parent=67 // pred_check
          %p4667 = pneg %p158
        $region70: #{tpu_custom_call.1} parent=67 // pred_check_branch
          %4669 = sbr.rel (%p4667) target = $region72
        $region71: #{tpu_custom_call.1} parent=67 // pred_region
          %s4670 = sand.u32 %s143, 1
          %s4671 = scalar_lea.sflag [#allocation4], %s4670
          %s4672 = sand.u32 %s143, 1
          %s4673 = smul.addr %s4672, 272
          %s4674 = scalar_lea.vmem [#allocation11], %s4673
          %4675 = dma.done %s4671, 4352
        $region72: #{tpu_custom_call.1} parent=67 // pred_fallthru
          _
      $region68: #{tpu_custom_call.1} parent=5 // pred_fallthru
        _
    $region6: #{tpu_custom_call.1} parent=1 // loop_footer
      %s23 = sadd.s32 1, %s19
    $region7: #{tpu_custom_call.1} parent=1 // loop_footer_branch
      %18 = sbr.rel target = $region3
    $region8: #{tpu_custom_call.1} parent=1 // loop_exit
      _
    %4676 = vsyncpa [#allocation3], 1
    %s4677 = scalar_lea.sflag [#allocation3], 1
    %4678 = vsyncpa %s4677, 1
    %4679 = vsyncpa [#allocation6], 1
    %4680 = vsyncpa [#allocation9], 1
    %4681 = vsyncpa [#allocation4], 1
    %s4682 = scalar_lea.sflag [#allocation4], 1
    %4683 = vsyncpa %s4682, 1

</llo_original>
